<compile_context>
chip_gen: v7x
topology: tpu7x:2x2x1
jax: 0.10.0
libtpu: 0.0.40
codegen_flags: <defaults>
</compile_context>

<pallas_src>
import functools

import jax
import jax.numpy as jnp
import numpy as np
from jax.experimental import pallas as pl
from jax.experimental.pallas import tpu as pltpu


def _round_up(x, m):
    return ((x + m - 1) // m) * m


# ---------------------------------------------------------------------------
# Fused Pallas kernel (one batch element per grid step)
# ---------------------------------------------------------------------------
def _basic_block_kernel(Wo, D, xq_ref, lm_ref, rm_ref, w1g_ref, w2k_ref, wds_ref,
                        s1_ref, b1_ref, s2_ref, b2_ref,
                        o_ref, xqp_ref, hp_ref, acc_ref):
    M = xq_ref.shape[1]          # Ho * Wo output pixels
    Cpad = o_ref.shape[2]        # lane-padded output channels

    xq = xq_ref[0]               # (M, 4*Cp) bf16, raw x in space-to-depth layout
    lmask = lm_ref[...]          # (M, 1) bf16, 0 where wo == 0
    rmask = rm_ref[...]          # (M, 1) bf16, 0 where wo == Wo-1

    # ---- conv1: ReLU -> 3x3 stride-2 conv, as 4 grouped matmuls -------------
    xqp_ref[...] = jnp.zeros_like(xqp_ref)
    xqp_ref[pl.ds(D, M), :] = jnp.maximum(xq, 0)

    acc_ref[...] = jnp.zeros_like(acc_ref)
    for sh in range(2):          # row shift (sh - 1) in {-1, 0}
        for sw in range(2):      # col shift (sw - 1) in {-1, 0}
            start = D + (sh - 1) * Wo + (sw - 1)
            a = xqp_ref[pl.ds(start, M), :]
            if sw == 0:          # shifted left across a row boundary -> kill wrap
                a = a * lmask
            acc_ref[...] += jnp.dot(a, w1g_ref[sh * 2 + sw],
                                    preferred_element_type=jnp.float32)

    # BN1 (inference-mode, folded) + ReLU; back to bf16 for the second conv
    h = jnp.maximum(acc_ref[...] * s1_ref[...] + b1_ref[...], 0.0)
    h = h.astype(jnp.bfloat16)

    # ---- conv2: ReLU -> 3x3 stride-1 conv, as 9 shifted matmuls --------------
    hp_ref[...] = jnp.zeros_like(hp_ref)
    hp_ref[pl.ds(D, M), :] = h

    acc_ref[...] = jnp.zeros_like(acc_ref)
    for kh in range(3):
        for kw in range(3):
            start = D + (kh - 1) * Wo + (kw - 1)
            a = hp_ref[pl.ds(start, M), :]
            if kw == 0:
                a = a * lmask
            elif kw == 2:
                a = a * rmask
            acc_ref[...] += jnp.dot(a, w2k_ref[kh * 3 + kw],
                                    preferred_element_type=jnp.float32)

    # ---- downsample (avg-pool folded into 1x1 weights) + BN2 + add + ReLU ----
    ds = jnp.dot(xq, wds_ref[...], preferred_element_type=jnp.float32)
    out = jnp.maximum(acc_ref[...] * s2_ref[...] + b2_ref[...] + ds, 0.0)
    o_ref[...] = out.reshape(1, M, Cpad)


# ---------------------------------------------------------------------------
# Wrapper
# ---------------------------------------------------------------------------
@functools.partial(jax.jit, static_argnames=("C",))
def basic_block_forward(x_nchw, kp, *, C):
    """x_nchw: (N, C_prev, H, W) f32 -> (N, C, H//2, W//2) f32."""
    x = x_nchw.astype(jnp.float32)
    N, Cp, H, W = x.shape
    if H % 2 or W % 2:
        raise ValueError("BasicBlock stride-2 path expects even H and W")
    Ho, Wo = H // 2, W // 2
    M = Ho * Wo
    C4p = 4 * Cp
    Cpad = kp["w2k"].shape[-1]
    D = _round_up(Wo + 1, 8)     # zero-halo rows in front of the flattened image

    # space-to-depth: one 1x rearrangement of x (replaces the 9x im2col in HBM)
    xq = (x.reshape(N, Cp, Ho, 2, Wo, 2)
           .transpose(0, 2, 4, 3, 5, 1)          # (N, ho, wo, dh, dw, c)
           .reshape(N, M, C4p)
           .astype(jnp.bfloat16))

    wo_idx = jnp.arange(M, dtype=jnp.int32) % Wo
    lmask = (wo_idx != 0).astype(jnp.bfloat16).reshape(M, 1)
    rmask = (wo_idx != Wo - 1).astype(jnp.bfloat16).reshape(M, 1)

    flops = 2 * N * M * Cpad * (5 * C4p + 9 * Cpad)
    bytes_accessed = (xq.size * 2 + N * M * Cpad * 4 + kp["w1g"].size * 2
                      + kp["w2k"].size * 2 + kp["wds4"].size * 2)

    out = pl.pallas_call(
        functools.partial(_basic_block_kernel, Wo, D),
        out_shape=jax.ShapeDtypeStruct((N, M, Cpad), jnp.float32),
        grid=(N,),
        in_specs=[
            pl.BlockSpec((1, M, C4p), lambda b: (b, 0, 0)),     # xq (per image)
            pl.BlockSpec((M, 1), lambda b: (0, 0)),             # left-wrap mask
            pl.BlockSpec((M, 1), lambda b: (0, 0)),             # right-wrap mask
            pl.BlockSpec((4, C4p, Cpad), lambda b: (0, 0, 0)),  # conv1 grouped weights
            pl.BlockSpec((9, Cpad, Cpad), lambda b: (0, 0, 0)),  # conv2 tap weights
            pl.BlockSpec((C4p, Cpad), lambda b: (0, 0)),        # avgpool+1x1 weights
            pl.BlockSpec((1, Cpad), lambda b: (0, 0)),          # bn1 scale
            pl.BlockSpec((1, Cpad), lambda b: (0, 0)),          # bn1 shift
            pl.BlockSpec((1, Cpad), lambda b: (0, 0)),          # bn2 scale
            pl.BlockSpec((1, Cpad), lambda b: (0, 0)),          # bn2 shift
        ],
        out_specs=pl.BlockSpec((1, M, Cpad), lambda b: (b, 0, 0)),
        scratch_shapes=[
            pltpu.VMEM((D + M, C4p), jnp.bfloat16),        # ReLU(x), top/left halo
            pltpu.VMEM((D + M + D, Cpad), jnp.bfloat16),   # ReLU(BN1(h)), halo both sides
            pltpu.VMEM((M, Cpad), jnp.float32),            # f32 accumulator
        ],
        compiler_params=pltpu.CompilerParams(
            dimension_semantics=("parallel",),
            vmem_limit_bytes=32 * 1024 * 1024),
        cost_estimate=pl.CostEstimate(flops=int(flops), transcendentals=0,
                                      bytes_accessed=int(bytes_accessed)),
    )(xq, lmask, rmask, kp["w1g"], kp["w2k"], kp["wds4"],
      kp["s1"], kp["b1"], kp["s2"], kp["b2"])

    out = out[:, :, :C].reshape(N, Ho, Wo, C)      # drop channel padding
    return jnp.transpose(out, (0, 3, 1, 2))        # NHWC -> NCHW


# ---------------------------------------------------------------------------
# Parameters: PyTorch layout + one-time kernel re-layout (hoisted out of forward)
# ---------------------------------------------------------------------------
def init_params(key, C_prev, C):
    ks = jax.random.split(key, 5)

    def bn(kk, ch):
        k1, k2, k3, k4 = jax.random.split(kk, 4)
        gamma = 1.0 + 0.1 * jax.random.normal(k1, (ch,), jnp.float32)
        beta = 0.1 * jax.random.normal(k2, (ch,), jnp.float32)
        mean = 0.1 * jax.random.normal(k3, (ch,), jnp.float32)
        var = jnp.abs(jax.random.normal(k4, (ch,), jnp.float32)) + 1.0
        eps = 1e-5
        scale = gamma / jnp.sqrt(var + eps)
        shift = beta - mean * scale
        # BatchNorm applied in inference mode: running stats folded to scale/shift.
        return scale.reshape(1, ch), shift.reshape(1, ch)

    return {
        "w1": 0.1 * jax.random.normal(ks[0], (C, C_prev, 3, 3), jnp.float32),
        "bn1": bn(ks[1], C),
        "w2": 0.1 * jax.random.normal(ks[2], (C, C, 3, 3), jnp.float32),
        "bn2": bn(ks[3], C),
        # TODO(synk): downsample Conv2d assumed bias=False (as in NAS-Bench-201 reference).
        "w_ds": 0.1 * jax.random.normal(ks[4], (C, C_prev, 1, 1), jnp.float32),
    }


def prepare_kernel_params(params):
    """One-time re-layout of PyTorch-style params into the fused-kernel layout."""
    w1 = params["w1"]                     # (C, Cp, 3, 3)  OIHW
    w2 = params["w2"]                     # (C, C, 3, 3)
    wds = params["w_ds"]                  # (C, Cp, 1, 1)
    C, Cp = int(w1.shape[0]), int(w1.shape[1])
    Cpad = max(128, _round_up(C, 128))    # lane-dense output channels

    # conv1: group the 9 taps of the stride-2 conv by their (row, col) shift in the
    # half-resolution grid; each group is one (4*Cp, Cpad) matrix over the 4 phases.
    w1_hwio = jnp.transpose(w1, (2, 3, 1, 0))       # (3, 3, Cp, C)
    w1g = jnp.zeros((4, 4 * Cp, Cpad), jnp.float32)
    for kh in range(3):
        a, dh = ((-1, 1) if kh == 0 else (0, kh - 1))
        for kw in range(3):
            b, dw = ((-1, 1) if kw == 0 else (0, kw - 1))
            g = (1 + a) * 2 + (1 + b)
            p = 2 * dh + dw
            w1g = w1g.at[g, p * Cp:(p + 1) * Cp, :C].set(w1_hwio[kh, kw])

    # conv2: one (Cpad, Cpad) matrix per tap.
    w2_hwio = jnp.transpose(w2, (2, 3, 1, 0))       # (3, 3, C, C)
    w2k = jnp.zeros((9, Cpad, Cpad), jnp.float32)
    for kh in range(3):
        for kw in range(3):
            w2k = w2k.at[kh * 3 + kw, :C, :C].set(w2_hwio[kh, kw])

    # downsample: AvgPool2d(2,2) + 1x1 conv == xq @ (0.25 * wds replicated per phase)
    wds_mat = wds.reshape(C, Cp).T                  # (Cp, C)
    wds4 = jnp.zeros((4 * Cp, Cpad), jnp.float32)
    for p in range(4):
        wds4 = wds4.at[p * Cp:(p + 1) * Cp, :C].set(0.25 * wds_mat)

    def pad_bn(v):
        return jnp.zeros((1, Cpad), jnp.float32).at[0, :C].set(v.reshape(-1))

    (s1, b1), (s2, b2) = params["bn1"], params["bn2"]
    kp = {
        "w1g": w1g.astype(jnp.bfloat16),
        "w2k": w2k.astype(jnp.bfloat16),
        "wds4": wds4.astype(jnp.bfloat16),
        "s1": pad_bn(s1), "b1": pad_bn(b1),
        "s2": pad_bn(s2), "b2": pad_bn(b2),
    }
    return kp, C


# ---------------------------------------------------------------------------
# Pure-JAX f32 reference (for correctness check)
# ---------------------------------------------------------------------------
def reference_forward(x, params):
    def rcb(xx, w, scale, shift, stride):
        xx = jnp.maximum(xx, 0.0)
        y = jax.lax.conv_general_dilated(
            xx, w, (stride, stride), ((1, 1), (1, 1)),
            dimension_numbers=("NCHW", "OIHW", "NCHW"))
        return y * scale.reshape(1, -1, 1, 1) + shift.reshape(1, -1, 1, 1)

    h = rcb(x, params["w1"], params["bn1"][0], params["bn1"][1], 2)
    h = rcb(h, params["w2"], params["bn2"][0], params["bn2"][1], 1)
    N, Cp, H, W = x.shape
    pooled = x.reshape(N, Cp, H // 2, 2, W // 2, 2).mean(axis=(3, 5))
    d = jax.lax.conv_general_dilated(
        pooled, params["w_ds"], (1, 1), ((0, 0), (0, 0)),
        dimension_numbers=("NCHW", "OIHW", "NCHW"))
    return jnp.maximum(h + d, 0.0)


if __name__ == "__main__":
    key = jax.random.PRNGKey(0)
    kx, kpk = jax.random.split(key)
    C_prev, C = 4, 8
    x = jax.random.normal(kx, (2, C_prev, 16, 16), jnp.float32)

    params = init_params(kpk, C_prev, C)
    kparams, C_out = prepare_kernel_params(params)

    out = jax.block_until_ready(basic_block_forward(x, kparams, C=C_out))
    ref = jax.block_until_ready(reference_forward(x, params))

    # bf16 matmul operands vs. an all-f32 reference -> slightly loosened tolerance.
    np.testing.assert_allclose(np.asarray(out), np.asarray(ref), rtol=2e-2, atol=2e-2)
    print("KERNEL_OK")
</pallas_src>

<mosaic_0001>
module attributes {stable_mosaic.version = 11 : i64} {
  func.func @_basic_block_kernel(%arg0: i32, %arg1: memref<1x64x16xbf16, #tpu.memory_space<vmem>>, %arg2: memref<64x1xbf16, #tpu.memory_space<vmem>>, %arg3: memref<64x1xbf16, #tpu.memory_space<vmem>>, %arg4: memref<4x16x128xbf16, #tpu.memory_space<vmem>>, %arg5: memref<9x128x128xbf16, #tpu.memory_space<vmem>>, %arg6: memref<16x128xbf16, #tpu.memory_space<vmem>>, %arg7: memref<1x128xf32, #tpu.memory_space<vmem>>, %arg8: memref<1x128xf32, #tpu.memory_space<vmem>>, %arg9: memref<1x128xf32, #tpu.memory_space<vmem>>, %arg10: memref<1x128xf32, #tpu.memory_space<vmem>>, %arg11: memref<1x64x128xf32, #tpu.memory_space<vmem>>, %arg12: memref<80x16xbf16, #tpu.memory_space<vmem>>, %arg13: memref<96x128xbf16, #tpu.memory_space<vmem>>, %arg14: memref<64x128xf32, #tpu.memory_space<vmem>>) attributes {dimension_semantics = [#tpu.dimension_semantics<parallel>], iteration_bounds = array<i64: 2>, scalar_prefetch = 0 : i64, scratch_operands = 3 : i64, tpu.core_type = #tpu.core_type<tc>, window_params = [{transform_indices = @transform_0, window_bounds = array<i64: 1, 64, 16>}, {pipeline_mode = #tpu.pipeline_mode<synchronous>, transform_indices = @transform_1, window_bounds = array<i64: 64, 1>}, {pipeline_mode = #tpu.pipeline_mode<synchronous>, transform_indices = @transform_2, window_bounds = array<i64: 64, 1>}, {pipeline_mode = #tpu.pipeline_mode<synchronous>, transform_indices = @transform_3, window_bounds = array<i64: 4, 16, 128>}, {pipeline_mode = #tpu.pipeline_mode<synchronous>, transform_indices = @transform_4, window_bounds = array<i64: 9, 128, 128>}, {pipeline_mode = #tpu.pipeline_mode<synchronous>, transform_indices = @transform_5, window_bounds = array<i64: 16, 128>}, {pipeline_mode = #tpu.pipeline_mode<synchronous>, transform_indices = @transform_6, window_bounds = array<i64: 1, 128>}, {pipeline_mode = #tpu.pipeline_mode<synchronous>, transform_indices = @transform_7, window_bounds = array<i64: 1, 128>}, {pipeline_mode = #tpu.pipeline_mode<synchronous>, transform_indices = @transform_8, window_bounds = array<i64: 1, 128>}, {pipeline_mode = #tpu.pipeline_mode<synchronous>, transform_indices = @transform_9, window_bounds = array<i64: 1, 128>}, {transform_indices = @transform_10, window_bounds = array<i64: 1, 64, 128>}]} {
    %c0 = arith.constant 0 : index
    %c0_0 = arith.constant 0 : index
    %c0_1 = arith.constant 0 : index
    %0 = vector.load %arg1[%c0, %c0_0, %c0_1] : memref<1x64x16xbf16, #tpu.memory_space<vmem>>, vector<1x64x16xbf16>
    %1 = vector.shape_cast %0 : vector<1x64x16xbf16> to vector<64x16xbf16>
    %c0_2 = arith.constant 0 : index
    %c0_3 = arith.constant 0 : index
    %2 = vector.load %arg2[%c0_2, %c0_3] : memref<64x1xbf16, #tpu.memory_space<vmem>>, vector<64x1xbf16>
    %c0_4 = arith.constant 0 : index
    %c0_5 = arith.constant 0 : index
    %3 = vector.load %arg3[%c0_4, %c0_5] : memref<64x1xbf16, #tpu.memory_space<vmem>>, vector<64x1xbf16>
    %cst = arith.constant 0.000000e+00 : bf16
    %4 = vector.broadcast %cst : bf16 to vector<80x16xbf16>
    %c0_6 = arith.constant 0 : index
    %c0_7 = arith.constant 0 : index
    %5 = vector.load %arg12[%c0_6, %c0_7] : memref<80x16xbf16, #tpu.memory_space<vmem>>, vector<80x16xbf16>
    tpu.vector_store %arg12[%c0_6, %c0_7], %4 {strides = array<i32>} : memref<80x16xbf16, #tpu.memory_space<vmem>>, vector<80x16xbf16>,
    %cst_8 = arith.constant 0.000000e+00 : bf16
    %6 = vector.broadcast %cst_8 : bf16 to vector<64x16xbf16>
    %7 = arith.maximumf %1, %6 : vector<64x16xbf16>
    %c16 = arith.constant 16 : index
    %c0_9 = arith.constant 0 : index
    %8 = vector.load %arg12[%c16, %c0_9] : memref<80x16xbf16, #tpu.memory_space<vmem>>, vector<64x16xbf16>
    tpu.vector_store %arg12[%c16, %c0_9], %7 {strides = array<i32>} : memref<80x16xbf16, #tpu.memory_space<vmem>>, vector<64x16xbf16>,
    %cst_10 = arith.constant 0.000000e+00 : f32
    %9 = vector.broadcast %cst_10 : f32 to vector<64x128xf32>
    %c0_11 = arith.constant 0 : index
    %c0_12 = arith.constant 0 : index
    %10 = vector.load %arg14[%c0_11, %c0_12] : memref<64x128xf32, #tpu.memory_space<vmem>>, vector<64x128xf32>
    tpu.vector_store %arg14[%c0_11, %c0_12], %9 {strides = array<i32>} : memref<64x128xf32, #tpu.memory_space<vmem>>, vector<64x128xf32>,
    %c7 = arith.constant 7 : index
    %c0_13 = arith.constant 0 : index
    %11 = vector.load %arg12[%c7, %c0_13] : memref<80x16xbf16, #tpu.memory_space<vmem>>, vector<64x16xbf16>
    %12 = vector.broadcast %2 : vector<64x1xbf16> to vector<64x16xbf16>
    %13 = arith.mulf %11, %12 : vector<64x16xbf16>
    %c0_14 = arith.constant 0 : index
    %c0_15 = arith.constant 0 : index
    %14 = vector.load %arg14[%c0_14, %c0_15] : memref<64x128xf32, #tpu.memory_space<vmem>>, vector<64x128xf32>
    %c0_16 = arith.constant 0 : index
    %c0_17 = arith.constant 0 : index
    %c0_18 = arith.constant 0 : index
    %15 = vector.load %arg4[%c0_16, %c0_17, %c0_18] : memref<4x16x128xbf16, #tpu.memory_space<vmem>>, vector<1x16x128xbf16>
    %16 = vector.shape_cast %15 : vector<1x16x128xbf16> to vector<16x128xbf16>
    %cst_19 = arith.constant dense<0.000000e+00> : vector<64x128xf32>
    %17 = tpu.matmul %13, %16, %cst_19 {dimension_numbers = #tpu.dot_dimension_numbers<[1], [0], [0], [1], [0, 0, 1, 1], [], []>} : vector<64x16xbf16>, vector<16x128xbf16>, vector<64x128xf32> -> vector<64x128xf32>
    %18 = arith.addf %14, %17 : vector<64x128xf32>
    %c0_20 = arith.constant 0 : index
    %c0_21 = arith.constant 0 : index
    %19 = vector.load %arg14[%c0_20, %c0_21] : memref<64x128xf32, #tpu.memory_space<vmem>>, vector<64x128xf32>
    tpu.vector_store %arg14[%c0_20, %c0_21], %18 {strides = array<i32>} : memref<64x128xf32, #tpu.memory_space<vmem>>, vector<64x128xf32>,
    %c8 = arith.constant 8 : index
    %c0_22 = arith.constant 0 : index
    %20 = vector.load %arg12[%c8, %c0_22] : memref<80x16xbf16, #tpu.memory_space<vmem>>, vector<64x16xbf16>
    %c0_23 = arith.constant 0 : index
    %c0_24 = arith.constant 0 : index
    %21 = vector.load %arg14[%c0_23, %c0_24] : memref<64x128xf32, #tpu.memory_space<vmem>>, vector<64x128xf32>
    %c1 = arith.constant 1 : index
    %c0_25 = arith.constant 0 : index
    %c0_26 = arith.constant 0 : index
    %22 = vector.load %arg4[%c1, %c0_25, %c0_26] : memref<4x16x128xbf16, #tpu.memory_space<vmem>>, vector<1x16x128xbf16>
    %23 = vector.shape_cast %22 : vector<1x16x128xbf16> to vector<16x128xbf16>
    %cst_27 = arith.constant dense<0.000000e+00> : vector<64x128xf32>
    %24 = tpu.matmul %20, %23, %cst_27 {dimension_numbers = #tpu.dot_dimension_numbers<[1], [0], [0], [1], [0, 0, 1, 1], [], []>} : vector<64x16xbf16>, vector<16x128xbf16>, vector<64x128xf32> -> vector<64x128xf32>
    %25 = arith.addf %21, %24 : vector<64x128xf32>
    %c0_28 = arith.constant 0 : index
    %c0_29 = arith.constant 0 : index
    %26 = vector.load %arg14[%c0_28, %c0_29] : memref<64x128xf32, #tpu.memory_space<vmem>>, vector<64x128xf32>
    tpu.vector_store %arg14[%c0_28, %c0_29], %25 {strides = array<i32>} : memref<64x128xf32, #tpu.memory_space<vmem>>, vector<64x128xf32>,
    %c15 = arith.constant 15 : index
    %c0_30 = arith.constant 0 : index
    %27 = vector.load %arg12[%c15, %c0_30] : memref<80x16xbf16, #tpu.memory_space<vmem>>, vector<64x16xbf16>
    %28 = vector.broadcast %2 : vector<64x1xbf16> to vector<64x16xbf16>
    %29 = arith.mulf %27, %28 : vector<64x16xbf16>
    %c0_31 = arith.constant 0 : index
    %c0_32 = arith.constant 0 : index
    %30 = vector.load %arg14[%c0_31, %c0_32] : memref<64x128xf32, #tpu.memory_space<vmem>>, vector<64x128xf32>
    %c2 = arith.constant 2 : index
    %c0_33 = arith.constant 0 : index
    %c0_34 = arith.constant 0 : index
    %31 = vector.load %arg4[%c2, %c0_33, %c0_34] : memref<4x16x128xbf16, #tpu.memory_space<vmem>>, vector<1x16x128xbf16>
    %32 = vector.shape_cast %31 : vector<1x16x128xbf16> to vector<16x128xbf16>
    %cst_35 = arith.constant dense<0.000000e+00> : vector<64x128xf32>
    %33 = tpu.matmul %29, %32, %cst_35 {dimension_numbers = #tpu.dot_dimension_numbers<[1], [0], [0], [1], [0, 0, 1, 1], [], []>} : vector<64x16xbf16>, vector<16x128xbf16>, vector<64x128xf32> -> vector<64x128xf32>
    %34 = arith.addf %30, %33 : vector<64x128xf32>
    %c0_36 = arith.constant 0 : index
    %c0_37 = arith.constant 0 : index
    %35 = vector.load %arg14[%c0_36, %c0_37] : memref<64x128xf32, #tpu.memory_space<vmem>>, vector<64x128xf32>
    tpu.vector_store %arg14[%c0_36, %c0_37], %34 {strides = array<i32>} : memref<64x128xf32, #tpu.memory_space<vmem>>, vector<64x128xf32>,
    %c16_38 = arith.constant 16 : index
    %c0_39 = arith.constant 0 : index
    %36 = vector.load %arg12[%c16_38, %c0_39] : memref<80x16xbf16, #tpu.memory_space<vmem>>, vector<64x16xbf16>
    %c0_40 = arith.constant 0 : index
    %c0_41 = arith.constant 0 : index
    %37 = vector.load %arg14[%c0_40, %c0_41] : memref<64x128xf32, #tpu.memory_space<vmem>>, vector<64x128xf32>
    %c3 = arith.constant 3 : index
    %c0_42 = arith.constant 0 : index
    %c0_43 = arith.constant 0 : index
    %38 = vector.load %arg4[%c3, %c0_42, %c0_43] : memref<4x16x128xbf16, #tpu.memory_space<vmem>>, vector<1x16x128xbf16>
    %39 = vector.shape_cast %38 : vector<1x16x128xbf16> to vector<16x128xbf16>
    %cst_44 = arith.constant dense<0.000000e+00> : vector<64x128xf32>
    %40 = tpu.matmul %36, %39, %cst_44 {dimension_numbers = #tpu.dot_dimension_numbers<[1], [0], [0], [1], [0, 0, 1, 1], [], []>} : vector<64x16xbf16>, vector<16x128xbf16>, vector<64x128xf32> -> vector<64x128xf32>
    %41 = arith.addf %37, %40 : vector<64x128xf32>
    %c0_45 = arith.constant 0 : index
    %c0_46 = arith.constant 0 : index
    %42 = vector.load %arg14[%c0_45, %c0_46] : memref<64x128xf32, #tpu.memory_space<vmem>>, vector<64x128xf32>
    tpu.vector_store %arg14[%c0_45, %c0_46], %41 {strides = array<i32>} : memref<64x128xf32, #tpu.memory_space<vmem>>, vector<64x128xf32>,
    %c0_47 = arith.constant 0 : index
    %c0_48 = arith.constant 0 : index
    %43 = vector.load %arg14[%c0_47, %c0_48] : memref<64x128xf32, #tpu.memory_space<vmem>>, vector<64x128xf32>
    %c0_49 = arith.constant 0 : index
    %c0_50 = arith.constant 0 : index
    %44 = vector.load %arg7[%c0_49, %c0_50] : memref<1x128xf32, #tpu.memory_space<vmem>>, vector<1x128xf32>
    %45 = vector.broadcast %44 : vector<1x128xf32> to vector<64x128xf32>
    %46 = arith.mulf %43, %45 : vector<64x128xf32>
    %c0_51 = arith.constant 0 : index
    %c0_52 = arith.constant 0 : index
    %47 = vector.load %arg8[%c0_51, %c0_52] : memref<1x128xf32, #tpu.memory_space<vmem>>, vector<1x128xf32>
    %48 = vector.broadcast %47 : vector<1x128xf32> to vector<64x128xf32>
    %49 = arith.addf %46, %48 : vector<64x128xf32>
    %cst_53 = arith.constant 0.000000e+00 : f32
    %50 = vector.broadcast %cst_53 : f32 to vector<64x128xf32>
    %51 = arith.maximumf %49, %50 : vector<64x128xf32>
    %52 = arith.truncf %51 : vector<64x128xf32> to vector<64x128xbf16>
    %cst_54 = arith.constant 0.000000e+00 : bf16
    %53 = vector.broadcast %cst_54 : bf16 to vector<96x128xbf16>
    %c0_55 = arith.constant 0 : index
    %c0_56 = arith.constant 0 : index
    %54 = vector.load %arg13[%c0_55, %c0_56] : memref<96x128xbf16, #tpu.memory_space<vmem>>, vector<96x128xbf16>
    tpu.vector_store %arg13[%c0_55, %c0_56], %53 {strides = array<i32>} : memref<96x128xbf16, #tpu.memory_space<vmem>>, vector<96x128xbf16>,
    %c16_57 = arith.constant 16 : index
    %c0_58 = arith.constant 0 : index
    %55 = vector.load %arg13[%c16_57, %c0_58] : memref<96x128xbf16, #tpu.memory_space<vmem>>, vector<64x128xbf16>
    tpu.vector_store %arg13[%c16_57, %c0_58], %52 {strides = array<i32>} : memref<96x128xbf16, #tpu.memory_space<vmem>>, vector<64x128xbf16>,
    %cst_59 = arith.constant 0.000000e+00 : f32
    %56 = vector.broadcast %cst_59 : f32 to vector<64x128xf32>
    %c0_60 = arith.constant 0 : index
    %c0_61 = arith.constant 0 : index
    %57 = vector.load %arg14[%c0_60, %c0_61] : memref<64x128xf32, #tpu.memory_space<vmem>>, vector<64x128xf32>
    tpu.vector_store %arg14[%c0_60, %c0_61], %56 {strides = array<i32>} : memref<64x128xf32, #tpu.memory_space<vmem>>, vector<64x128xf32>,
    %c7_62 = arith.constant 7 : index
    %c0_63 = arith.constant 0 : index
    %58 = vector.load %arg13[%c7_62, %c0_63] : memref<96x128xbf16, #tpu.memory_space<vmem>>, vector<64x128xbf16>
    %59 = vector.broadcast %2 : vector<64x1xbf16> to vector<64x128xbf16>
    %60 = arith.mulf %58, %59 : vector<64x128xbf16>
    %c0_64 = arith.constant 0 : index
    %c0_65 = arith.constant 0 : index
    %61 = vector.load %arg14[%c0_64, %c0_65] : memref<64x128xf32, #tpu.memory_space<vmem>>, vector<64x128xf32>
    %c0_66 = arith.constant 0 : index
    %c0_67 = arith.constant 0 : index
    %c0_68 = arith.constant 0 : index
    %62 = vector.load %arg5[%c0_66, %c0_67, %c0_68] : memref<9x128x128xbf16, #tpu.memory_space<vmem>>, vector<1x128x128xbf16>
    %63 = vector.shape_cast %62 : vector<1x128x128xbf16> to vector<128x128xbf16>
    %cst_69 = arith.constant dense<0.000000e+00> : vector<64x128xf32>
    %64 = tpu.matmul %60, %63, %cst_69 {dimension_numbers = #tpu.dot_dimension_numbers<[1], [0], [0], [1], [0, 0, 1, 1], [], []>} : vector<64x128xbf16>, vector<128x128xbf16>, vector<64x128xf32> -> vector<64x128xf32>
    %65 = arith.addf %61, %64 : vector<64x128xf32>
    %c0_70 = arith.constant 0 : index
    %c0_71 = arith.constant 0 : index
    %66 = vector.load %arg14[%c0_70, %c0_71] : memref<64x128xf32, #tpu.memory_space<vmem>>, vector<64x128xf32>
    tpu.vector_store %arg14[%c0_70, %c0_71], %65 {strides = array<i32>} : memref<64x128xf32, #tpu.memory_space<vmem>>, vector<64x128xf32>,
    %c8_72 = arith.constant 8 : index
    %c0_73 = arith.constant 0 : index
    %67 = vector.load %arg13[%c8_72, %c0_73] : memref<96x128xbf16, #tpu.memory_space<vmem>>, vector<64x128xbf16>
    %c0_74 = arith.constant 0 : index
    %c0_75 = arith.constant 0 : index
    %68 = vector.load %arg14[%c0_74, %c0_75] : memref<64x128xf32, #tpu.memory_space<vmem>>, vector<64x128xf32>
    %c1_76 = arith.constant 1 : index
    %c0_77 = arith.constant 0 : index
    %c0_78 = arith.constant 0 : index
    %69 = vector.load %arg5[%c1_76, %c0_77, %c0_78] : memref<9x128x128xbf16, #tpu.memory_space<vmem>>, vector<1x128x128xbf16>
    %70 = vector.shape_cast %69 : vector<1x128x128xbf16> to vector<128x128xbf16>
    %cst_79 = arith.constant dense<0.000000e+00> : vector<64x128xf32>
    %71 = tpu.matmul %67, %70, %cst_79 {dimension_numbers = #tpu.dot_dimension_numbers<[1], [0], [0], [1], [0, 0, 1, 1], [], []>} : vector<64x128xbf16>, vector<128x128xbf16>, vector<64x128xf32> -> vector<64x128xf32>
    %72 = arith.addf %68, %71 : vector<64x128xf32>
    %c0_80 = arith.constant 0 : index
    %c0_81 = arith.constant 0 : index
    %73 = vector.load %arg14[%c0_80, %c0_81] : memref<64x128xf32, #tpu.memory_space<vmem>>, vector<64x128xf32>
    tpu.vector_store %arg14[%c0_80, %c0_81], %72 {strides = array<i32>} : memref<64x128xf32, #tpu.memory_space<vmem>>, vector<64x128xf32>,
    %c9 = arith.constant 9 : index
    %c0_82 = arith.constant 0 : index
    %74 = vector.load %arg13[%c9, %c0_82] : memref<96x128xbf16, #tpu.memory_space<vmem>>, vector<64x128xbf16>
    %75 = vector.broadcast %3 : vector<64x1xbf16> to vector<64x128xbf16>
    %76 = arith.mulf %74, %75 : vector<64x128xbf16>
    %c0_83 = arith.constant 0 : index
    %c0_84 = arith.constant 0 : index
    %77 = vector.load %arg14[%c0_83, %c0_84] : memref<64x128xf32, #tpu.memory_space<vmem>>, vector<64x128xf32>
    %c2_85 = arith.constant 2 : index
    %c0_86 = arith.constant 0 : index
    %c0_87 = arith.constant 0 : index
    %78 = vector.load %arg5[%c2_85, %c0_86, %c0_87] : memref<9x128x128xbf16, #tpu.memory_space<vmem>>, vector<1x128x128xbf16>
    %79 = vector.shape_cast %78 : vector<1x128x128xbf16> to vector<128x128xbf16>
    %cst_88 = arith.constant dense<0.000000e+00> : vector<64x128xf32>
    %80 = tpu.matmul %76, %79, %cst_88 {dimension_numbers = #tpu.dot_dimension_numbers<[1], [0], [0], [1], [0, 0, 1, 1], [], []>} : vector<64x128xbf16>, vector<128x128xbf16>, vector<64x128xf32> -> vector<64x128xf32>
    %81 = arith.addf %77, %80 : vector<64x128xf32>
    %c0_89 = arith.constant 0 : index
    %c0_90 = arith.constant 0 : index
    %82 = vector.load %arg14[%c0_89, %c0_90] : memref<64x128xf32, #tpu.memory_space<vmem>>, vector<64x128xf32>
    tpu.vector_store %arg14[%c0_89, %c0_90], %81 {strides = array<i32>} : memref<64x128xf32, #tpu.memory_space<vmem>>, vector<64x128xf32>,
    %c15_91 = arith.constant 15 : index
    %c0_92 = arith.constant 0 : index
    %83 = vector.load %arg13[%c15_91, %c0_92] : memref<96x128xbf16, #tpu.memory_space<vmem>>, vector<64x128xbf16>
    %84 = vector.broadcast %2 : vector<64x1xbf16> to vector<64x128xbf16>
    %85 = arith.mulf %83, %84 : vector<64x128xbf16>
    %c0_93 = arith.constant 0 : index
    %c0_94 = arith.constant 0 : index
    %86 = vector.load %arg14[%c0_93, %c0_94] : memref<64x128xf32, #tpu.memory_space<vmem>>, vector<64x128xf32>
    %c3_95 = arith.constant 3 : index
    %c0_96 = arith.constant 0 : index
    %c0_97 = arith.constant 0 : index
    %87 = vector.load %arg5[%c3_95, %c0_96, %c0_97] : memref<9x128x128xbf16, #tpu.memory_space<vmem>>, vector<1x128x128xbf16>
    %88 = vector.shape_cast %87 : vector<1x128x128xbf16> to vector<128x128xbf16>
    %cst_98 = arith.constant dense<0.000000e+00> : vector<64x128xf32>
    %89 = tpu.matmul %85, %88, %cst_98 {dimension_numbers = #tpu.dot_dimension_numbers<[1], [0], [0], [1], [0, 0, 1, 1], [], []>} : vector<64x128xbf16>, vector<128x128xbf16>, vector<64x128xf32> -> vector<64x128xf32>
    %90 = arith.addf %86, %89 : vector<64x128xf32>
    %c0_99 = arith.constant 0 : index
    %c0_100 = arith.constant 0 : index
    %91 = vector.load %arg14[%c0_99, %c0_100] : memref<64x128xf32, #tpu.memory_space<vmem>>, vector<64x128xf32>
    tpu.vector_store %arg14[%c0_99, %c0_100], %90 {strides = array<i32>} : memref<64x128xf32, #tpu.memory_space<vmem>>, vector<64x128xf32>,
    %c16_101 = arith.constant 16 : index
    %c0_102 = arith.constant 0 : index
    %92 = vector.load %arg13[%c16_101, %c0_102] : memref<96x128xbf16, #tpu.memory_space<vmem>>, vector<64x128xbf16>
    %c0_103 = arith.constant 0 : index
    %c0_104 = arith.constant 0 : index
    %93 = vector.load %arg14[%c0_103, %c0_104] : memref<64x128xf32, #tpu.memory_space<vmem>>, vector<64x128xf32>
    %c4 = arith.constant 4 : index
    %c0_105 = arith.constant 0 : index
    %c0_106 = arith.constant 0 : index
    %94 = vector.load %arg5[%c4, %c0_105, %c0_106] : memref<9x128x128xbf16, #tpu.memory_space<vmem>>, vector<1x128x128xbf16>
    %95 = vector.shape_cast %94 : vector<1x128x128xbf16> to vector<128x128xbf16>
    %cst_107 = arith.constant dense<0.000000e+00> : vector<64x128xf32>
    %96 = tpu.matmul %92, %95, %cst_107 {dimension_numbers = #tpu.dot_dimension_numbers<[1], [0], [0], [1], [0, 0, 1, 1], [], []>} : vector<64x128xbf16>, vector<128x128xbf16>, vector<64x128xf32> -> vector<64x128xf32>
    %97 = arith.addf %93, %96 : vector<64x128xf32>
    %c0_108 = arith.constant 0 : index
    %c0_109 = arith.constant 0 : index
    %98 = vector.load %arg14[%c0_108, %c0_109] : memref<64x128xf32, #tpu.memory_space<vmem>>, vector<64x128xf32>
    tpu.vector_store %arg14[%c0_108, %c0_109], %97 {strides = array<i32>} : memref<64x128xf32, #tpu.memory_space<vmem>>, vector<64x128xf32>,
    %c17 = arith.constant 17 : index
    %c0_110 = arith.constant 0 : index
    %99 = vector.load %arg13[%c17, %c0_110] : memref<96x128xbf16, #tpu.memory_space<vmem>>, vector<64x128xbf16>
    %100 = vector.broadcast %3 : vector<64x1xbf16> to vector<64x128xbf16>
    %101 = arith.mulf %99, %100 : vector<64x128xbf16>
    %c0_111 = arith.constant 0 : index
    %c0_112 = arith.constant 0 : index
    %102 = vector.load %arg14[%c0_111, %c0_112] : memref<64x128xf32, #tpu.memory_space<vmem>>, vector<64x128xf32>
    %c5 = arith.constant 5 : index
    %c0_113 = arith.constant 0 : index
    %c0_114 = arith.constant 0 : index
    %103 = vector.load %arg5[%c5, %c0_113, %c0_114] : memref<9x128x128xbf16, #tpu.memory_space<vmem>>, vector<1x128x128xbf16>
    %104 = vector.shape_cast %103 : vector<1x128x128xbf16> to vector<128x128xbf16>
    %cst_115 = arith.constant dense<0.000000e+00> : vector<64x128xf32>
    %105 = tpu.matmul %101, %104, %cst_115 {dimension_numbers = #tpu.dot_dimension_numbers<[1], [0], [0], [1], [0, 0, 1, 1], [], []>} : vector<64x128xbf16>, vector<128x128xbf16>, vector<64x128xf32> -> vector<64x128xf32>
    %106 = arith.addf %102, %105 : vector<64x128xf32>
    %c0_116 = arith.constant 0 : index
    %c0_117 = arith.constant 0 : index
    %107 = vector.load %arg14[%c0_116, %c0_117] : memref<64x128xf32, #tpu.memory_space<vmem>>, vector<64x128xf32>
    tpu.vector_store %arg14[%c0_116, %c0_117], %106 {strides = array<i32>} : memref<64x128xf32, #tpu.memory_space<vmem>>, vector<64x128xf32>,
    %c23 = arith.constant 23 : index
    %c0_118 = arith.constant 0 : index
    %108 = vector.load %arg13[%c23, %c0_118] : memref<96x128xbf16, #tpu.memory_space<vmem>>, vector<64x128xbf16>
    %109 = vector.broadcast %2 : vector<64x1xbf16> to vector<64x128xbf16>
    %110 = arith.mulf %108, %109 : vector<64x128xbf16>
    %c0_119 = arith.constant 0 : index
    %c0_120 = arith.constant 0 : index
    %111 = vector.load %arg14[%c0_119, %c0_120] : memref<64x128xf32, #tpu.memory_space<vmem>>, vector<64x128xf32>
    %c6 = arith.constant 6 : index
    %c0_121 = arith.constant 0 : index
    %c0_122 = arith.constant 0 : index
    %112 = vector.load %arg5[%c6, %c0_121, %c0_122] : memref<9x128x128xbf16, #tpu.memory_space<vmem>>, vector<1x128x128xbf16>
    %113 = vector.shape_cast %112 : vector<1x128x128xbf16> to vector<128x128xbf16>
    %cst_123 = arith.constant dense<0.000000e+00> : vector<64x128xf32>
    %114 = tpu.matmul %110, %113, %cst_123 {dimension_numbers = #tpu.dot_dimension_numbers<[1], [0], [0], [1], [0, 0, 1, 1], [], []>} : vector<64x128xbf16>, vector<128x128xbf16>, vector<64x128xf32> -> vector<64x128xf32>
    %115 = arith.addf %111, %114 : vector<64x128xf32>
    %c0_124 = arith.constant 0 : index
    %c0_125 = arith.constant 0 : index
    %116 = vector.load %arg14[%c0_124, %c0_125] : memref<64x128xf32, #tpu.memory_space<vmem>>, vector<64x128xf32>
    tpu.vector_store %arg14[%c0_124, %c0_125], %115 {strides = array<i32>} : memref<64x128xf32, #tpu.memory_space<vmem>>, vector<64x128xf32>,
    %c24 = arith.constant 24 : index
    %c0_126 = arith.constant 0 : index
    %117 = vector.load %arg13[%c24, %c0_126] : memref<96x128xbf16, #tpu.memory_space<vmem>>, vector<64x128xbf16>
    %c0_127 = arith.constant 0 : index
    %c0_128 = arith.constant 0 : index
    %118 = vector.load %arg14[%c0_127, %c0_128] : memref<64x128xf32, #tpu.memory_space<vmem>>, vector<64x128xf32>
    %c7_129 = arith.constant 7 : index
    %c0_130 = arith.constant 0 : index
    %c0_131 = arith.constant 0 : index
    %119 = vector.load %arg5[%c7_129, %c0_130, %c0_131] : memref<9x128x128xbf16, #tpu.memory_space<vmem>>, vector<1x128x128xbf16>
    %120 = vector.shape_cast %119 : vector<1x128x128xbf16> to vector<128x128xbf16>
    %cst_132 = arith.constant dense<0.000000e+00> : vector<64x128xf32>
    %121 = tpu.matmul %117, %120, %cst_132 {dimension_numbers = #tpu.dot_dimension_numbers<[1], [0], [0], [1], [0, 0, 1, 1], [], []>} : vector<64x128xbf16>, vector<128x128xbf16>, vector<64x128xf32> -> vector<64x128xf32>
    %122 = arith.addf %118, %121 : vector<64x128xf32>
    %c0_133 = arith.constant 0 : index
    %c0_134 = arith.constant 0 : index
    %123 = vector.load %arg14[%c0_133, %c0_134] : memref<64x128xf32, #tpu.memory_space<vmem>>, vector<64x128xf32>
    tpu.vector_store %arg14[%c0_133, %c0_134], %122 {strides = array<i32>} : memref<64x128xf32, #tpu.memory_space<vmem>>, vector<64x128xf32>,
    %c25 = arith.constant 25 : index
    %c0_135 = arith.constant 0 : index
    %124 = vector.load %arg13[%c25, %c0_135] : memref<96x128xbf16, #tpu.memory_space<vmem>>, vector<64x128xbf16>
    %125 = vector.broadcast %3 : vector<64x1xbf16> to vector<64x128xbf16>
    %126 = arith.mulf %124, %125 : vector<64x128xbf16>
    %c0_136 = arith.constant 0 : index
    %c0_137 = arith.constant 0 : index
    %127 = vector.load %arg14[%c0_136, %c0_137] : memref<64x128xf32, #tpu.memory_space<vmem>>, vector<64x128xf32>
    %c8_138 = arith.constant 8 : index
    %c0_139 = arith.constant 0 : index
    %c0_140 = arith.constant 0 : index
    %128 = vector.load %arg5[%c8_138, %c0_139, %c0_140] : memref<9x128x128xbf16, #tpu.memory_space<vmem>>, vector<1x128x128xbf16>
    %129 = vector.shape_cast %128 : vector<1x128x128xbf16> to vector<128x128xbf16>
    %cst_141 = arith.constant dense<0.000000e+00> : vector<64x128xf32>
    %130 = tpu.matmul %126, %129, %cst_141 {dimension_numbers = #tpu.dot_dimension_numbers<[1], [0], [0], [1], [0, 0, 1, 1], [], []>} : vector<64x128xbf16>, vector<128x128xbf16>, vector<64x128xf32> -> vector<64x128xf32>
    %131 = arith.addf %127, %130 : vector<64x128xf32>
    %c0_142 = arith.constant 0 : index
    %c0_143 = arith.constant 0 : index
    %132 = vector.load %arg14[%c0_142, %c0_143] : memref<64x128xf32, #tpu.memory_space<vmem>>, vector<64x128xf32>
    tpu.vector_store %arg14[%c0_142, %c0_143], %131 {strides = array<i32>} : memref<64x128xf32, #tpu.memory_space<vmem>>, vector<64x128xf32>,
    %c0_144 = arith.constant 0 : index
    %c0_145 = arith.constant 0 : index
    %133 = vector.load %arg6[%c0_144, %c0_145] : memref<16x128xbf16, #tpu.memory_space<vmem>>, vector<16x128xbf16>
    %cst_146 = arith.constant dense<0.000000e+00> : vector<64x128xf32>
    %134 = tpu.matmul %1, %133, %cst_146 {dimension_numbers = #tpu.dot_dimension_numbers<[1], [0], [0], [1], [0, 0, 1, 1], [], []>} : vector<64x16xbf16>, vector<16x128xbf16>, vector<64x128xf32> -> vector<64x128xf32>
    %c0_147 = arith.constant 0 : index
    %c0_148 = arith.constant 0 : index
    %135 = vector.load %arg14[%c0_147, %c0_148] : memref<64x128xf32, #tpu.memory_space<vmem>>, vector<64x128xf32>
    %c0_149 = arith.constant 0 : index
    %c0_150 = arith.constant 0 : index
    %136 = vector.load %arg9[%c0_149, %c0_150] : memref<1x128xf32, #tpu.memory_space<vmem>>, vector<1x128xf32>
    %137 = vector.broadcast %136 : vector<1x128xf32> to vector<64x128xf32>
    %138 = arith.mulf %135, %137 : vector<64x128xf32>
    %c0_151 = arith.constant 0 : index
    %c0_152 = arith.constant 0 : index
    %139 = vector.load %arg10[%c0_151, %c0_152] : memref<1x128xf32, #tpu.memory_space<vmem>>, vector<1x128xf32>
    %140 = vector.broadcast %139 : vector<1x128xf32> to vector<64x128xf32>
    %141 = arith.addf %138, %140 : vector<64x128xf32>
    %142 = arith.addf %141, %134 : vector<64x128xf32>
    %cst_153 = arith.constant 0.000000e+00 : f32
    %143 = vector.broadcast %cst_153 : f32 to vector<64x128xf32>
    %144 = arith.maximumf %142, %143 : vector<64x128xf32>
    %145 = vector.shape_cast %144 : vector<64x128xf32> to vector<1x64x128xf32>
    %c0_154 = arith.constant 0 : index
    %c0_155 = arith.constant 0 : index
    %c0_156 = arith.constant 0 : index
    %146 = vector.load %arg11[%c0_154, %c0_155, %c0_156] : memref<1x64x128xf32, #tpu.memory_space<vmem>>, vector<1x64x128xf32>
    tpu.vector_store %arg11[%c0_154, %c0_155, %c0_156], %145 {strides = array<i32>} : memref<1x64x128xf32, #tpu.memory_space<vmem>>, vector<1x64x128xf32>,
    return
  }
  func.func @transform_0(%arg0: i32) -> (i32, i32, i32) {
    %c0_i32 = arith.constant 0 : i32
    %c0_i32_0 = arith.constant 0 : i32
    %c0_i32_1 = arith.constant 0 : i32
    return %arg0, %c0_i32, %c0_i32_0 : i32, i32, i32
  }
  func.func @transform_1(%arg0: i32) -> (i32, i32) {
    %c0_i32 = arith.constant 0 : i32
    %c0_i32_0 = arith.constant 0 : i32
    %c0_i32_1 = arith.constant 0 : i32
    return %c0_i32, %c0_i32_0 : i32, i32
  }
  func.func @transform_2(%arg0: i32) -> (i32, i32) {
    %c0_i32 = arith.constant 0 : i32
    %c0_i32_0 = arith.constant 0 : i32
    %c0_i32_1 = arith.constant 0 : i32
    return %c0_i32, %c0_i32_0 : i32, i32
  }
  func.func @transform_3(%arg0: i32) -> (i32, i32, i32) {
    %c0_i32 = arith.constant 0 : i32
    %c0_i32_0 = arith.constant 0 : i32
    %c0_i32_1 = arith.constant 0 : i32
    %c0_i32_2 = arith.constant 0 : i32
    return %c0_i32, %c0_i32_0, %c0_i32_1 : i32, i32, i32
  }
  func.func @transform_4(%arg0: i32) -> (i32, i32, i32) {
    %c0_i32 = arith.constant 0 : i32
    %c0_i32_0 = arith.constant 0 : i32
    %c0_i32_1 = arith.constant 0 : i32
    %c0_i32_2 = arith.constant 0 : i32
    return %c0_i32, %c0_i32_0, %c0_i32_1 : i32, i32, i32
  }
  func.func @transform_5(%arg0: i32) -> (i32, i32) {
    %c0_i32 = arith.constant 0 : i32
    %c0_i32_0 = arith.constant 0 : i32
    %c0_i32_1 = arith.constant 0 : i32
    return %c0_i32, %c0_i32_0 : i32, i32
  }
  func.func @transform_6(%arg0: i32) -> (i32, i32) {
    %c0_i32 = arith.constant 0 : i32
    %c0_i32_0 = arith.constant 0 : i32
    %c0_i32_1 = arith.constant 0 : i32
    return %c0_i32, %c0_i32_0 : i32, i32
  }
  func.func @transform_7(%arg0: i32) -> (i32, i32) {
    %c0_i32 = arith.constant 0 : i32
    %c0_i32_0 = arith.constant 0 : i32
    %c0_i32_1 = arith.constant 0 : i32
    return %c0_i32, %c0_i32_0 : i32, i32
  }
  func.func @transform_8(%arg0: i32) -> (i32, i32) {
    %c0_i32 = arith.constant 0 : i32
    %c0_i32_0 = arith.constant 0 : i32
    %c0_i32_1 = arith.constant 0 : i32
    return %c0_i32, %c0_i32_0 : i32, i32
  }
  func.func @transform_9(%arg0: i32) -> (i32, i32) {
    %c0_i32 = arith.constant 0 : i32
    %c0_i32_0 = arith.constant 0 : i32
    %c0_i32_1 = arith.constant 0 : i32
    return %c0_i32, %c0_i32_0 : i32, i32
  }
  func.func @transform_10(%arg0: i32) -> (i32, i32, i32) {
    %c0_i32 = arith.constant 0 : i32
    %c0_i32_0 = arith.constant 0 : i32
    %c0_i32_1 = arith.constant 0 : i32
    return %arg0, %c0_i32, %c0_i32_0 : i32, i32, i32
  }
}

</mosaic_0001>

<llo_original>
// kernel: basic_block_forward.1
$region0: #{basic_block_forward.1}
  #allocation0 [shape = 'u32[]', space=smem, size = 0x4, offset = 0x4, fixed_abs, tag = 'smem constant byte address 0x4 - core index']
  #allocation1 [shape = 'u32[144,128]{1,0:T(1,128)}', space=vmem, size = 0x12000, scoped, tag = 'internal scratch']
  #allocation2 [shape = 'bf16[80,16]{1,0:T(16,128)(2,1)}', space=vmem, size = 0x5000, scoped, tag = 'scratch operand']
  #allocation3 [shape = 'bf16[96,128]{1,0:T(16,128)(2,1)}', space=vmem, size = 0x6000, scoped, tag = 'scratch operand']
  #allocation4 [shape = 'f32[64,128]{1,0:T(8,128)}', space=vmem, size = 0x8000, scoped, tag = 'scratch operand']
  %s0 = inlined_call_operand.vmem [shape: bf16[2,64,16], index: 0, kind: input, shape index: {}]
  %s1 = inlined_call_operand.vmem [shape: bf16[64,1], index: 1, kind: input, shape index: {}]
  %s2 = inlined_call_operand.vmem [shape: bf16[64,1], index: 2, kind: input, shape index: {}]
  %s3 = inlined_call_operand.vmem [shape: bf16[4,16,128], index: 3, kind: input, shape index: {}]
  %s4 = inlined_call_operand.vmem [shape: bf16[9,128,128], index: 4, kind: input, shape index: {}]
  %s5 = inlined_call_operand.vmem [shape: bf16[16,128], index: 5, kind: input, shape index: {}]
  %s6 = inlined_call_operand.vmem [shape: f32[1,128], index: 6, kind: input, shape index: {}]
  %s7 = inlined_call_operand.vmem [shape: f32[1,128], index: 7, kind: input, shape index: {}]
  %s8 = inlined_call_operand.vmem [shape: f32[1,128], index: 8, kind: input, shape index: {}]
  %s9 = inlined_call_operand.vmem [shape: f32[1,128], index: 9, kind: input, shape index: {}]
  %s10 = inlined_call_operand.vmem [shape: f32[2,64,128], index: 10, kind: output, shape index: {}]
  %s11 = sld [smem:[#allocation0]]
  $region73: #{basic_block_forward.1} parent=0
    _
  %s13 = ssub.s32 1, %s11
  %s14 = scalar_select 0, %s13, %s11
  loop: start=0, step=1, limit=4
  $region2: #{basic_block_forward.1} parent=0 // loop_pre_header
    _
  $region3: #{basic_block_forward.1} parent=0 // loop_header
    %s16 = sphi 0, %s20
    %p17 = scmp.ge.s32.totalorder %s16, 4
    %s26 = sphi 0, %s28
    %s29 = sphi 0, %s26
    %s30 = sphi 0, %s29
    %s46 = sphi 0, %s30
    %s50 = sphi 0, %s50
    %s52 = sphi 0, %s50
    %s53 = sphi 0, %s52
    %s67 = sphi 0, %s53
    %s71 = sphi 0, %s71
    %s73 = sphi 0, %s71
    %s74 = sphi 0, %s73
    %s88 = sphi 0, %s74
    %s92 = sphi 0, %s92
    %s94 = sphi 0, %s92
    %s95 = sphi 0, %s94
    %s109 = sphi 0, %s95
    %s113 = sphi 0, %s113
    %s115 = sphi 0, %s113
    %s116 = sphi 0, %s115
    %s130 = sphi 0, %s116
    %s134 = sphi 0, %s134
    %s136 = sphi 0, %s134
    %s137 = sphi 0, %s136
    %s151 = sphi 0, %s137
    %s155 = sphi 0, %s155
    %s157 = sphi 0, %s155
    %s158 = sphi 0, %s157
    %s172 = sphi 0, %s158
    %s176 = sphi 0, %s176
    %s178 = sphi 0, %s176
    %s179 = sphi 0, %s178
    %s193 = sphi 0, %s179
    %s197 = sphi 0, %s197
    %s199 = sphi 0, %s197
    %s200 = sphi 0, %s199
    %s214 = sphi 0, %s200
    %s218 = sphi 0, %s218
    %s220 = sphi 0, %s218
    %s221 = sphi 0, %s220
    %s235 = sphi 0, %s221
    %s241 = sphi 0, %s243
    %s244 = sphi 0, %s241
    %s245 = sphi 0, %s244
    %s261 = sphi 0, %s245
  $region4: #{basic_block_forward.1} parent=0 // loop_header_branch
    %19 = sbr.rel (%p17) target = $region8
  $region5: #{basic_block_forward.1} parent=0 // loop_body
    %s21 = ssub.s32 %s16, 1
    %s22 = ssub.s32 %s16, 2
    %s23 = sadd.s32 %s16, 1
    %s24 = ssub.s32 %s16, %s23
    %p25 = scmp.eq.s32.totalorder %s24, 0
    %s27 = sadd.s32 %s26, 1
    %s28 = scalar_select %p25, %s26, %s27
    %p31 = pneg %p25
    %p32 = scmp.eq.s32.totalorder %s16, 1
    %p33 = por %p31, %p32
    %p34 = scmp.ne.s32.totalorder %s26, %s29
    %p35 = scmp.eq.s32.totalorder %s16, 0
    %p36 = por %p34, %p35
    %p37 = scmp.ne.s32.totalorder %s26, %s29
    %p38 = scmp.eq.s32.totalorder %s21, 1
    %p39 = por %p37, %p38
    %p40 = scmp.ne.s32.totalorder %s29, %s30
    %p41 = scmp.eq.s32.totalorder %s21, 0
    %p42 = por %p40, %p41
    %p43 = scmp.ne.s32.totalorder %s29, %s30
    %p44 = scmp.eq.s32.totalorder %s22, 1
    %p45 = por %p43, %p44
    %p47 = scmp.ne.s32.totalorder %s30, %s46
    %p48 = scmp.eq.s32.totalorder %s22, 0
    %p49 = por %p47, %p48
    %s51 = sadd.s32 %s50, 1
    %p54 = scmp.eq.s32.totalorder %s16, 1
    %p55 = scmp.ne.s32.totalorder %s50, %s52
    %p56 = scmp.eq.s32.totalorder %s16, 0
    %p57 = por %p55, %p56
    %p58 = scmp.ne.s32.totalorder %s50, %s52
    %p59 = scmp.eq.s32.totalorder %s21, 1
    %p60 = por %p58, %p59
    %p61 = scmp.ne.s32.totalorder %s52, %s53
    %p62 = scmp.eq.s32.totalorder %s21, 0
    %p63 = por %p61, %p62
    %p64 = scmp.ne.s32.totalorder %s52, %s53
    %p65 = scmp.eq.s32.totalorder %s22, 1
    %p66 = por %p64, %p65
    %p68 = scmp.ne.s32.totalorder %s53, %s67
    %p69 = scmp.eq.s32.totalorder %s22, 0
    %p70 = por %p68, %p69
    %s72 = sadd.s32 %s71, 1
    %p75 = scmp.eq.s32.totalorder %s16, 1
    %p76 = scmp.ne.s32.totalorder %s71, %s73
    %p77 = scmp.eq.s32.totalorder %s16, 0
    %p78 = por %p76, %p77
    %p79 = scmp.ne.s32.totalorder %s71, %s73
    %p80 = scmp.eq.s32.totalorder %s21, 1
    %p81 = por %p79, %p80
    %p82 = scmp.ne.s32.totalorder %s73, %s74
    %p83 = scmp.eq.s32.totalorder %s21, 0
    %p84 = por %p82, %p83
    %p85 = scmp.ne.s32.totalorder %s73, %s74
    %p86 = scmp.eq.s32.totalorder %s22, 1
    %p87 = por %p85, %p86
    %p89 = scmp.ne.s32.totalorder %s74, %s88
    %p90 = scmp.eq.s32.totalorder %s22, 0
    %p91 = por %p89, %p90
    %s93 = sadd.s32 %s92, 1
    %p96 = scmp.eq.s32.totalorder %s16, 1
    %p97 = scmp.ne.s32.totalorder %s92, %s94
    %p98 = scmp.eq.s32.totalorder %s16, 0
    %p99 = por %p97, %p98
    %p100 = scmp.ne.s32.totalorder %s92, %s94
    %p101 = scmp.eq.s32.totalorder %s21, 1
    %p102 = por %p100, %p101
    %p103 = scmp.ne.s32.totalorder %s94, %s95
    %p104 = scmp.eq.s32.totalorder %s21, 0
    %p105 = por %p103, %p104
    %p106 = scmp.ne.s32.totalorder %s94, %s95
    %p107 = scmp.eq.s32.totalorder %s22, 1
    %p108 = por %p106, %p107
    %p110 = scmp.ne.s32.totalorder %s95, %s109
    %p111 = scmp.eq.s32.totalorder %s22, 0
    %p112 = por %p110, %p111
    %s114 = sadd.s32 %s113, 1
    %p117 = scmp.eq.s32.totalorder %s16, 1
    %p118 = scmp.ne.s32.totalorder %s113, %s115
    %p119 = scmp.eq.s32.totalorder %s16, 0
    %p120 = por %p118, %p119
    %p121 = scmp.ne.s32.totalorder %s113, %s115
    %p122 = scmp.eq.s32.totalorder %s21, 1
    %p123 = por %p121, %p122
    %p124 = scmp.ne.s32.totalorder %s115, %s116
    %p125 = scmp.eq.s32.totalorder %s21, 0
    %p126 = por %p124, %p125
    %p127 = scmp.ne.s32.totalorder %s115, %s116
    %p128 = scmp.eq.s32.totalorder %s22, 1
    %p129 = por %p127, %p128
    %p131 = scmp.ne.s32.totalorder %s116, %s130
    %p132 = scmp.eq.s32.totalorder %s22, 0
    %p133 = por %p131, %p132
    %s135 = sadd.s32 %s134, 1
    %p138 = scmp.eq.s32.totalorder %s16, 1
    %p139 = scmp.ne.s32.totalorder %s134, %s136
    %p140 = scmp.eq.s32.totalorder %s16, 0
    %p141 = por %p139, %p140
    %p142 = scmp.ne.s32.totalorder %s134, %s136
    %p143 = scmp.eq.s32.totalorder %s21, 1
    %p144 = por %p142, %p143
    %p145 = scmp.ne.s32.totalorder %s136, %s137
    %p146 = scmp.eq.s32.totalorder %s21, 0
    %p147 = por %p145, %p146
    %p148 = scmp.ne.s32.totalorder %s136, %s137
    %p149 = scmp.eq.s32.totalorder %s22, 1
    %p150 = por %p148, %p149
    %p152 = scmp.ne.s32.totalorder %s137, %s151
    %p153 = scmp.eq.s32.totalorder %s22, 0
    %p154 = por %p152, %p153
    %s156 = sadd.s32 %s155, 1
    %p159 = scmp.eq.s32.totalorder %s16, 1
    %p160 = scmp.ne.s32.totalorder %s155, %s157
    %p161 = scmp.eq.s32.totalorder %s16, 0
    %p162 = por %p160, %p161
    %p163 = scmp.ne.s32.totalorder %s155, %s157
    %p164 = scmp.eq.s32.totalorder %s21, 1
    %p165 = por %p163, %p164
    %p166 = scmp.ne.s32.totalorder %s157, %s158
    %p167 = scmp.eq.s32.totalorder %s21, 0
    %p168 = por %p166, %p167
    %p169 = scmp.ne.s32.totalorder %s157, %s158
    %p170 = scmp.eq.s32.totalorder %s22, 1
    %p171 = por %p169, %p170
    %p173 = scmp.ne.s32.totalorder %s158, %s172
    %p174 = scmp.eq.s32.totalorder %s22, 0
    %p175 = por %p173, %p174
    %s177 = sadd.s32 %s176, 1
    %p180 = scmp.eq.s32.totalorder %s16, 1
    %p181 = scmp.ne.s32.totalorder %s176, %s178
    %p182 = scmp.eq.s32.totalorder %s16, 0
    %p183 = por %p181, %p182
    %p184 = scmp.ne.s32.totalorder %s176, %s178
    %p185 = scmp.eq.s32.totalorder %s21, 1
    %p186 = por %p184, %p185
    %p187 = scmp.ne.s32.totalorder %s178, %s179
    %p188 = scmp.eq.s32.totalorder %s21, 0
    %p189 = por %p187, %p188
    %p190 = scmp.ne.s32.totalorder %s178, %s179
    %p191 = scmp.eq.s32.totalorder %s22, 1
    %p192 = por %p190, %p191
    %p194 = scmp.ne.s32.totalorder %s179, %s193
    %p195 = scmp.eq.s32.totalorder %s22, 0
    %p196 = por %p194, %p195
    %s198 = sadd.s32 %s197, 1
    %p201 = scmp.eq.s32.totalorder %s16, 1
    %p202 = scmp.ne.s32.totalorder %s197, %s199
    %p203 = scmp.eq.s32.totalorder %s16, 0
    %p204 = por %p202, %p203
    %p205 = scmp.ne.s32.totalorder %s197, %s199
    %p206 = scmp.eq.s32.totalorder %s21, 1
    %p207 = por %p205, %p206
    %p208 = scmp.ne.s32.totalorder %s199, %s200
    %p209 = scmp.eq.s32.totalorder %s21, 0
    %p210 = por %p208, %p209
    %p211 = scmp.ne.s32.totalorder %s199, %s200
    %p212 = scmp.eq.s32.totalorder %s22, 1
    %p213 = por %p211, %p212
    %p215 = scmp.ne.s32.totalorder %s200, %s214
    %p216 = scmp.eq.s32.totalorder %s22, 0
    %p217 = por %p215, %p216
    %s219 = sadd.s32 %s218, 1
    %p222 = scmp.eq.s32.totalorder %s16, 1
    %p223 = scmp.ne.s32.totalorder %s218, %s220
    %p224 = scmp.eq.s32.totalorder %s16, 0
    %p225 = por %p223, %p224
    %p226 = scmp.ne.s32.totalorder %s218, %s220
    %p227 = scmp.eq.s32.totalorder %s21, 1
    %p228 = por %p226, %p227
    %p229 = scmp.ne.s32.totalorder %s220, %s221
    %p230 = scmp.eq.s32.totalorder %s21, 0
    %p231 = por %p229, %p230
    %p232 = scmp.ne.s32.totalorder %s220, %s221
    %p233 = scmp.eq.s32.totalorder %s22, 1
    %p234 = por %p232, %p233
    %p236 = scmp.ne.s32.totalorder %s221, %s235
    %p237 = scmp.eq.s32.totalorder %s22, 0
    %p238 = por %p236, %p237
    %s239 = ssub.s32 %s16, %s23
    %p240 = scmp.eq.s32.totalorder %s239, 0
    %s242 = sadd.s32 %s241, 1
    %s243 = scalar_select %p240, %s241, %s242
    %p246 = pneg %p240
    %p247 = scmp.eq.s32.totalorder %s16, 1
    %p248 = por %p246, %p247
    %p249 = scmp.ne.s32.totalorder %s241, %s244
    %p250 = scmp.eq.s32.totalorder %s16, 0
    %p251 = por %p249, %p250
    %p252 = scmp.ne.s32.totalorder %s241, %s244
    %p253 = scmp.eq.s32.totalorder %s21, 1
    %p254 = por %p252, %p253
    %p255 = scmp.ne.s32.totalorder %s244, %s245
    %p256 = scmp.eq.s32.totalorder %s21, 0
    %p257 = por %p255, %p256
    %p258 = scmp.ne.s32.totalorder %s244, %s245
    %p259 = scmp.eq.s32.totalorder %s22, 1
    %p260 = por %p258, %p259
    %p262 = scmp.ne.s32.totalorder %s245, %s261
    %p263 = scmp.eq.s32.totalorder %s22, 0
    %p264 = por %p262, %p263
    %p265 = scmp.le.s32.totalorder 1, %s16
    %p266 = scmp.lt.s32.totalorder %s16, 3
    %p267 = pnand %p265, %p266
    %p268 = pneg %p267
    // Predicated region
    $region9: #{basic_block_forward.1} parent=5 // pred_check
      _
    $region10: #{basic_block_forward.1} parent=5 // pred_check_branch
      %270 = sbr.rel (%p267) target = $region12
    $region11: #{basic_block_forward.1} parent=5 // pred_region
      %s271 = ssub.s32 %s16, 1
      // Predicated region
      $region13: #{basic_block_forward.1} parent=11 // pred_check
        %p272 = pneg %p63
      $region14: #{basic_block_forward.1} parent=11 // pred_check_branch
        %274 = sbr.rel (%p272) target = $region16
      $region15: #{basic_block_forward.1} parent=11 // pred_region
        _
      $region16: #{basic_block_forward.1} parent=11 // pred_fallthru
        _
      // Predicated region
      $region17: #{basic_block_forward.1} parent=11 // pred_check
        %p275 = pneg %p84
      $region18: #{basic_block_forward.1} parent=11 // pred_check_branch
        %277 = sbr.rel (%p275) target = $region20
      $region19: #{basic_block_forward.1} parent=11 // pred_region
        _
      $region20: #{basic_block_forward.1} parent=11 // pred_fallthru
        _
      // Predicated region
      $region21: #{basic_block_forward.1} parent=11 // pred_check
        %p278 = pneg %p105
      $region22: #{basic_block_forward.1} parent=11 // pred_check_branch
        %280 = sbr.rel (%p278) target = $region24
      $region23: #{basic_block_forward.1} parent=11 // pred_region
        _
      $region24: #{basic_block_forward.1} parent=11 // pred_fallthru
        _
      // Predicated region
      $region25: #{basic_block_forward.1} parent=11 // pred_check
        %p281 = pneg %p126
      $region26: #{basic_block_forward.1} parent=11 // pred_check_branch
        %283 = sbr.rel (%p281) target = $region28
      $region27: #{basic_block_forward.1} parent=11 // pred_region
        _
      $region28: #{basic_block_forward.1} parent=11 // pred_fallthru
        _
      // Predicated region
      $region29: #{basic_block_forward.1} parent=11 // pred_check
        %p284 = pneg %p147
      $region30: #{basic_block_forward.1} parent=11 // pred_check_branch
        %286 = sbr.rel (%p284) target = $region32
      $region31: #{basic_block_forward.1} parent=11 // pred_region
        _
      $region32: #{basic_block_forward.1} parent=11 // pred_fallthru
        _
      // Predicated region
      $region33: #{basic_block_forward.1} parent=11 // pred_check
        %p287 = pneg %p168
      $region34: #{basic_block_forward.1} parent=11 // pred_check_branch
        %289 = sbr.rel (%p287) target = $region36
      $region35: #{basic_block_forward.1} parent=11 // pred_region
        _
      $region36: #{basic_block_forward.1} parent=11 // pred_fallthru
        _
      // Predicated region
      $region37: #{basic_block_forward.1} parent=11 // pred_check
        %p290 = pneg %p189
      $region38: #{basic_block_forward.1} parent=11 // pred_check_branch
        %292 = sbr.rel (%p290) target = $region40
      $region39: #{basic_block_forward.1} parent=11 // pred_region
        _
      $region40: #{basic_block_forward.1} parent=11 // pred_fallthru
        _
      // Predicated region
      $region41: #{basic_block_forward.1} parent=11 // pred_check
        %p293 = pneg %p210
      $region42: #{basic_block_forward.1} parent=11 // pred_check_branch
        %295 = sbr.rel (%p293) target = $region44
      $region43: #{basic_block_forward.1} parent=11 // pred_region
        _
      $region44: #{basic_block_forward.1} parent=11 // pred_fallthru
        _
      // Predicated region
      $region45: #{basic_block_forward.1} parent=11 // pred_check
        %p296 = pneg %p231
      $region46: #{basic_block_forward.1} parent=11 // pred_check_branch
        %298 = sbr.rel (%p296) target = $region48
      $region47: #{basic_block_forward.1} parent=11 // pred_region
        _
      $region48: #{basic_block_forward.1} parent=11 // pred_fallthru
        _
    $region12: #{basic_block_forward.1} parent=5 // pred_fallthru
      _
    %p299 = scmp.lt.s32.totalorder %s16, 2
    // Predicated region
    $region49: #{basic_block_forward.1} parent=5 // pred_check
      %p300 = pneg %p299
    $region50: #{basic_block_forward.1} parent=5 // pred_check_branch
      %302 = sbr.rel (%p300) target = $region52
    $region51: #{basic_block_forward.1} parent=5 // pred_region
      // Predicated region
      $region53: #{basic_block_forward.1} parent=51 // pred_check
        %p303 = pneg %p36
      $region54: #{basic_block_forward.1} parent=51 // pred_check_branch
        %305 = sbr.rel (%p303) target = $region56
      $region55: #{basic_block_forward.1} parent=51 // pred_region
        %p306 = scmp.lt.s32.totalorder %s16, 1
        %s307 = scalar_select %p306, %s16, 1
        %s308 = smul.addr %s307, 8
        %s309 = smul.addr %s308, 4
        %s310 = scalar_lea.vmem %s0, %s309
      $region56: #{basic_block_forward.1} parent=51 // pred_fallthru
        _
    $region52: #{basic_block_forward.1} parent=5 // pred_fallthru
      _
    %p311 = scmp.le.s32.totalorder 1, %s16
    %p312 = scmp.lt.s32.totalorder %s16, 3
    %p313 = pnand %p311, %p312
    %p314 = pneg %p313
    // Predicated region
    $region57: #{basic_block_forward.1} parent=5 // pred_check
      _
    $region58: #{basic_block_forward.1} parent=5 // pred_check_branch
      %316 = sbr.rel (%p313) target = $region60
    $region59: #{basic_block_forward.1} parent=5 // pred_region
      %s317 = ssub.s32 %s16, 1
      %p318 = scmp.lt.s32.totalorder %s21, 1
      %s319 = scalar_select %p318, %s21, 1
      %s320 = smul.addr %s319, 8
      %s321 = smul.addr %s320, 4
      %s322 = scalar_lea.vmem %s0, %s321
      %p323 = pneg %p42
      %p324 = pneg %p39
      %p325 = pneg %p63
      %p326 = pneg %p60
      %p327 = pneg %p84
      %p328 = pneg %p81
      %p329 = pneg %p105
      %p330 = pneg %p102
      %p331 = pneg %p126
      %p332 = pneg %p123
      %p333 = pneg %p147
      %p334 = pneg %p144
      %p335 = pneg %p168
      %p336 = pneg %p165
      %p337 = pneg %p189
      %p338 = pneg %p186
      %p339 = pneg %p210
      %p340 = pneg %p207
      %p341 = pneg %p231
      %p342 = pneg %p228
      %p343 = pneg %p257
      %p344 = pneg %p254
      %p345 = scmp.lt.s32.totalorder %s21, 1
      %s346 = scalar_select %p345, %s21, 1
      %s347 = smul.addr %s346, 8
      %s348 = smul.addr %s347, 8
      %s349 = scalar_lea.vmem %s10, %s348
      %p350 = scmp.lt.s32.totalorder %s21, 1
      %s351 = scalar_select %p350, %s21, 1
      %s352 = smul.addr %s351, 8
      %s353 = smul.addr %s352, 4
      %s354 = scalar_lea.vmem %s0, %s353
      %p355 = scmp.lt.s32.totalorder %s21, 1
      %s356 = scalar_select %p355, %s21, 1
      %s357 = smul.addr %s356, 8
      %s358 = smul.addr %s357, 8
      %s359 = scalar_lea.vmem %s10, %s358
      %v361 = vld [vmem:[%s354] sm:$0xf]
      %v362 = vld [vmem:[%s354 + $0x4] sm:$0xf]
      %v363 = vld [vmem:[%s354 + $0x8] sm:$0xf]
      %v364 = vld [vmem:[%s354 + $0xc] sm:$0xf]
      %v365 = vld [vmem:[%s354 + $0x10] sm:$0xf]
      %v366 = vld [vmem:[%s354 + $0x14] sm:$0xf]
      %v367 = vld [vmem:[%s354 + $0x18] sm:$0xf]
      %v368 = vld [vmem:[%s354 + $0x1c] sm:$0xf]
      %v369 = vld [vmem:[%s1] sm:$0xf]
      %v370 = vld [vmem:[%s1 + $0x4] sm:$0xf]
      %v371 = vld [vmem:[%s1 + $0x8] sm:$0xf]
      %v372 = vld [vmem:[%s1 + $0xc] sm:$0xf]
      %v373 = vld [vmem:[%s1 + $0x10] sm:$0xf]
      %v374 = vld [vmem:[%s1 + $0x14] sm:$0xf]
      %v375 = vld [vmem:[%s1 + $0x18] sm:$0xf]
      %v376 = vld [vmem:[%s1 + $0x1c] sm:$0xf]
      %v377 = vld [vmem:[%s2] sm:$0xf]
      %v378 = vld [vmem:[%s2 + $0x4] sm:$0xf]
      %v379 = vld [vmem:[%s2 + $0x8] sm:$0xf]
      %v380 = vld [vmem:[%s2 + $0xc] sm:$0xf]
      %v381 = vld [vmem:[%s2 + $0x10] sm:$0xf]
      %v382 = vld [vmem:[%s2 + $0x14] sm:$0xf]
      %v383 = vld [vmem:[%s2 + $0x18] sm:$0xf]
      %v384 = vld [vmem:[%s2 + $0x1c] sm:$0xf]
      %vm385 = vcmask 130048
      %386 = vst.msk [vmem:[#allocation2] sm:$0xff] %vm385, 0
      %387 = vst.msk [vmem:[#allocation2 + $0x8] sm:$0xff] %vm385, 0
      %388 = vst.msk [vmem:[#allocation2 + $0x10] sm:$0xff] %vm385, 0
      %389 = vst.msk [vmem:[#allocation2 + $0x18] sm:$0xff] %vm385, 0
      %390 = vst.msk [vmem:[#allocation2 + $0x20] sm:$0xff] %vm385, 0
      %v391 = vmax.bf16 %v361, 0
      %v392 = vmax.bf16 %v362, 0
      %v393 = vmax.bf16 %v363, 0
      %v394 = vmax.bf16 %v364, 0
      %v395 = vmax.bf16 %v365, 0
      %v396 = vmax.bf16 %v366, 0
      %v397 = vmax.bf16 %v367, 0
      %v398 = vmax.bf16 %v368, 0
      %v407 = vunpack.c.l.b16 %v391
      %v408 = vunpack.c.l.b16 %v392
      %v409 = vunpack.c.l.b16 %v393
      %v410 = vunpack.c.l.b16 %v394
      %v411 = vunpack.c.l.b16 %v395
      %v412 = vunpack.c.l.b16 %v396
      %v413 = vunpack.c.l.b16 %v397
      %v414 = vunpack.c.l.b16 %v398
      %v415 = vpack.c.b16 %v408, %v407
      %v416 = vpack.c.b16 %v410, %v409
      %v417 = vpack.c.b16 %v412, %v411
      %v418 = vpack.c.b16 %v414, %v413
      %423 = vst.msk [vmem:[#allocation2 + $0x8] sm:$0xff] %vm385, %v415
      %424 = vst.msk [vmem:[#allocation2 + $0x10] sm:$0xff] %vm385, %v416
      %425 = vst.msk [vmem:[#allocation2 + $0x18] sm:$0xff] %vm385, %v417
      %426 = vst.msk [vmem:[#allocation2 + $0x20] sm:$0xff] %vm385, %v418
      %427 = vst [vmem:[#allocation4] sm:$0xff] 0.0
      %428 = vst [vmem:[#allocation4 + $0x8] sm:$0xff] 0.0
      %429 = vst [vmem:[#allocation4 + $0x10] sm:$0xff] 0.0
      %430 = vst [vmem:[#allocation4 + $0x18] sm:$0xff] 0.0
      %431 = vst [vmem:[#allocation4 + $0x20] sm:$0xff] 0.0
      %432 = vst [vmem:[#allocation4 + $0x28] sm:$0xff] 0.0
      %433 = vst [vmem:[#allocation4 + $0x30] sm:$0xff] 0.0
      %434 = vst [vmem:[#allocation4 + $0x38] sm:$0xff] 0.0
      %v435 = vld [vmem:[#allocation2] sm:$0xf8]
      %v436 = vld [vmem:[#allocation2 + $0x8] sm:$0xff]
      %v437 = vld [vmem:[#allocation2 + $0x10] sm:$0xff]
      %v438 = vld [vmem:[#allocation2 + $0x18] sm:$0xff]
      %v439 = vld [vmem:[#allocation2 + $0x20] sm:$0xf]
      %441 = vset.pattern.permute.xlu0 0
      %442 = vperm.xlu0 %441, %v369
      %v443 = vpop.permute.xlu0 %442
      %v446 = vunpack.c.l.s4 839922192
      %v447 = vunpack.c.0.s8 %v446
      %v448 = vlaneseq
      %v449 = vshrl.u32 %v448, 7
      %v450 = vsub.s32 %v447, %v449
      %v451 = vrot.slane %v443, %v450
      %453 = vset.pattern.permute.xlu0 0
      %454 = vperm.xlu0 %453, %v370
      %v455 = vpop.permute.xlu0 %454
      %v458 = vunpack.c.l.s4 839922192
      %v459 = vunpack.c.0.s8 %v458
      %v460 = vlaneseq
      %v461 = vshrl.u32 %v460, 7
      %v462 = vsub.s32 %v459, %v461
      %v463 = vrot.slane %v455, %v462
      %465 = vset.pattern.permute.xlu0 0
      %466 = vperm.xlu0 %465, %v371
      %v467 = vpop.permute.xlu0 %466
      %v470 = vunpack.c.l.s4 839922192
      %v471 = vunpack.c.0.s8 %v470
      %v472 = vlaneseq
      %v473 = vshrl.u32 %v472, 7
      %v474 = vsub.s32 %v471, %v473
      %v475 = vrot.slane %v467, %v474
      %477 = vset.pattern.permute.xlu0 0
      %478 = vperm.xlu0 %477, %v372
      %v479 = vpop.permute.xlu0 %478
      %v482 = vunpack.c.l.s4 839922192
      %v483 = vunpack.c.0.s8 %v482
      %v484 = vlaneseq
      %v485 = vshrl.u32 %v484, 7
      %v486 = vsub.s32 %v483, %v485
      %v487 = vrot.slane %v479, %v486
      %489 = vset.pattern.permute.xlu0 0
      %490 = vperm.xlu0 %489, %v373
      %v491 = vpop.permute.xlu0 %490
      %v494 = vunpack.c.l.s4 839922192
      %v495 = vunpack.c.0.s8 %v494
      %v496 = vlaneseq
      %v497 = vshrl.u32 %v496, 7
      %v498 = vsub.s32 %v495, %v497
      %v499 = vrot.slane %v491, %v498
      %501 = vset.pattern.permute.xlu0 0
      %502 = vperm.xlu0 %501, %v374
      %v503 = vpop.permute.xlu0 %502
      %v506 = vunpack.c.l.s4 839922192
      %v507 = vunpack.c.0.s8 %v506
      %v508 = vlaneseq
      %v509 = vshrl.u32 %v508, 7
      %v510 = vsub.s32 %v507, %v509
      %v511 = vrot.slane %v503, %v510
      %513 = vset.pattern.permute.xlu0 0
      %514 = vperm.xlu0 %513, %v375
      %v515 = vpop.permute.xlu0 %514
      %v518 = vunpack.c.l.s4 839922192
      %v519 = vunpack.c.0.s8 %v518
      %v520 = vlaneseq
      %v521 = vshrl.u32 %v520, 7
      %v522 = vsub.s32 %v519, %v521
      %v523 = vrot.slane %v515, %v522
      %525 = vset.pattern.permute.xlu0 0
      %526 = vperm.xlu0 %525, %v376
      %v527 = vpop.permute.xlu0 %526
      %v530 = vunpack.c.l.s4 839922192
      %v531 = vunpack.c.0.s8 %v530
      %v532 = vlaneseq
      %v533 = vshrl.u32 %v532, 7
      %v534 = vsub.s32 %v531, %v533
      %v535 = vrot.slane %v527, %v534
      %v544 = vunpack.c.l.b16 %v451
      %v545 = vunpack.c.l.b16 %v463
      %v546 = vunpack.c.l.b16 %v475
      %v547 = vunpack.c.l.b16 %v487
      %v548 = vunpack.c.l.b16 %v499
      %v549 = vunpack.c.l.b16 %v511
      %v550 = vunpack.c.l.b16 %v523
      %v551 = vunpack.c.l.b16 %v535
      %v552 = vpack.c.b16 %v545, %v544
      %v553 = vpack.c.b16 %v547, %v546
      %v554 = vpack.c.b16 %v549, %v548
      %v555 = vpack.c.b16 %v551, %v550
      %vm556 = vsmask.f32 3328
      %v558 = vshrl.u32 %v552, 16
      %v560 = vrot.slane %v558, 4
      %v561 = vshll.u32 %v552, 16
      %v563 = vrot.slane %v561, 5
      %v564 = vor.u32 %v560, %v563
      %v566 = vshrl.u32 %v553, 16
      %v568 = vrot.slane %v566, 4
      %v569 = vshll.u32 %v553, 16
      %v571 = vrot.slane %v569, 5
      %v572 = vor.u32 %v568, %v571
      %v573 = vsel %vm556, %v564, %v572
      %v575 = vshrl.u32 %v554, 16
      %v577 = vrot.slane %v575, 4
      %v578 = vshll.u32 %v554, 16
      %v580 = vrot.slane %v578, 5
      %v581 = vor.u32 %v577, %v580
      %v582 = vsel %vm556, %v572, %v581
      %v584 = vshrl.u32 %v555, 16
      %v586 = vrot.slane %v584, 4
      %v587 = vshll.u32 %v555, 16
      %v589 = vrot.slane %v587, 5
      %v590 = vor.u32 %v586, %v589
      %v591 = vsel %vm556, %v581, %v590
      %v597 = vmul.bf16 %v435, %v564
      %v598 = vmul.bf16 %v436, %v573
      %v599 = vmul.bf16 %v437, %v582
      %v600 = vmul.bf16 %v438, %v591
      %v601 = vmul.bf16 %v439, %v590
      %v602 = vld [vmem:[#allocation4] sm:$0xff]
      %v603 = vld [vmem:[#allocation4 + $0x8] sm:$0xff]
      %v604 = vld [vmem:[#allocation4 + $0x10] sm:$0xff]
      %v605 = vld [vmem:[#allocation4 + $0x18] sm:$0xff]
      %v606 = vld [vmem:[#allocation4 + $0x20] sm:$0xff]
      %v607 = vld [vmem:[#allocation4 + $0x28] sm:$0xff]
      %v608 = vld [vmem:[#allocation4 + $0x30] sm:$0xff]
      %v609 = vld [vmem:[#allocation4 + $0x38] sm:$0xff]
      %v610 = vld [vmem:[%s3] sm:$0xf]
      %v611 = vld [vmem:[%s3 + $0x4] sm:$0xf]
      %vm612 = vsmask.f32 4352
      %v614 = vshrl.u32 %v597, 16
      %v616 = vrot.slane %v614, 3
      %v617 = vshll.u32 %v597, 16
      %v619 = vrot.slane %v617, 4
      %v620 = vor.u32 %v616, %v619
      %v622 = vshrl.u32 %v598, 16
      %v624 = vrot.slane %v622, 3
      %v625 = vshll.u32 %v598, 16
      %v627 = vrot.slane %v625, 4
      %v628 = vor.u32 %v624, %v627
      %v629 = vsel %vm612, %v620, %v628
      %v631 = vshrl.u32 %v599, 16
      %v633 = vrot.slane %v631, 3
      %v634 = vshll.u32 %v599, 16
      %v636 = vrot.slane %v634, 4
      %v637 = vor.u32 %v633, %v636
      %v638 = vsel %vm612, %v628, %v637
      %v640 = vshrl.u32 %v600, 16
      %v642 = vrot.slane %v640, 3
      %v643 = vshll.u32 %v600, 16
      %v645 = vrot.slane %v643, 4
      %v646 = vor.u32 %v642, %v645
      %v647 = vsel %vm612, %v637, %v646
      %v649 = vshrl.u32 %v601, 16
      %v651 = vrot.slane %v649, 3
      %v652 = vshll.u32 %v601, 16
      %v654 = vrot.slane %v652, 4
      %v655 = vor.u32 %v651, %v654
      %v656 = vsel %vm612, %v646, %v655
      %v659 = vunpack.c.l.b16 %v610
      %v660 = vunpack.c.l.b16 %v611
      %v661 = vpack.c.b16 %v660, %v659
      %v664 = vsel %vm385, %v629, 0
      %v667 = vsel %vm385, %v638, 0
      %v670 = vsel %vm385, %v647, 0
      %v673 = vsel %vm385, %v656, 0
      %675 = vmatprep.subr.bf16.mxu0 0
      %676 = vmatpush1.bf16.msra.mxu0 %v661
      %677 = vmatprep.subr.bf16.mxu0 0
      %678 = vmatpush1.bf16.msra.mxu0 0
      %679 = vmatprep.subr.bf16.mxu0 0
      %680 = vmatpush1.bf16.msra.mxu0 0
      %681 = vmatprep.subr.bf16.mxu0 0
      %682 = vmatpush1.bf16.msra.mxu0 0
      %683 = vmatprep.subr.bf16.mxu0 0
      %684 = vmatpush1.bf16.msra.mxu0 0
      %685 = vmatprep.subr.bf16.mxu0 0
      %686 = vmatpush1.bf16.msra.mxu0 0
      %687 = vmatprep.subr.bf16.mxu0 0
      %688 = vmatpush1.bf16.msra.mxu0 0
      %689 = vmatprep.subr.bf16.mxu0 0
      %690 = vmatpush1.bf16.msra.mxu0 0
      %691 = vmatprep.subr.bf16.mxu0 0
      %692 = vmatpush1.bf16.msra.mxu0 0
      %693 = vmatprep.subr.bf16.mxu0 0
      %694 = vmatpush1.bf16.msra.mxu0 0
      %695 = vmatprep.subr.bf16.mxu0 0
      %696 = vmatpush1.bf16.msra.mxu0 0
      %697 = vmatprep.subr.bf16.mxu0 0
      %698 = vmatpush1.bf16.msra.mxu0 0
      %699 = vmatprep.subr.bf16.mxu0 0
      %700 = vmatpush1.bf16.msra.mxu0 0
      %701 = vmatprep.subr.bf16.mxu0 0
      %702 = vmatpush1.bf16.msra.mxu0 0
      %703 = vmatprep.subr.bf16.mxu0 0
      %704 = vmatpush1.bf16.msra.mxu0 0
      %705 = vmatprep.subr.bf16.mxu0 0
      %706 = vmatpush1.bf16.msra.mxu0 0
      %707 = vmatprep.mubr.bf16.mxu0 0
      %708 = vmatmul.mubr.bf16.gmra.mrb[0].mxu0 %v664
      %v709 = vpop.f32.mrb[0].mxu0
      %v710 = vadd.f32 0.0, %v709
      %v711 = vpop.f32.mrb[0].mxu0
      %v712 = vpop.f32.mrb[0].mxu0
      %v713 = vadd.f32 0.0, %v712
      %v714 = vpop.f32.mrb[0].mxu0
      %715 = vmatprep.mubr.bf16.mxu0 0
      %716 = vmatmul.mubr.bf16.gmra.mrb[0].mxu0 %v667
      %v717 = vpop.f32.mrb[0].mxu0
      %v718 = vadd.f32 0.0, %v717
      %v719 = vpop.f32.mrb[0].mxu0
      %v720 = vpop.f32.mrb[0].mxu0
      %v721 = vadd.f32 0.0, %v720
      %v722 = vpop.f32.mrb[0].mxu0
      %723 = vmatprep.mubr.bf16.mxu0 0
      %724 = vmatmul.mubr.bf16.gmra.mrb[0].mxu0 %v670
      %v725 = vpop.f32.mrb[0].mxu0
      %v726 = vadd.f32 0.0, %v725
      %v727 = vpop.f32.mrb[0].mxu0
      %v728 = vpop.f32.mrb[0].mxu0
      %v729 = vadd.f32 0.0, %v728
      %v730 = vpop.f32.mrb[0].mxu0
      %731 = vmatprep.mubr.bf16.mxu0 0
      %732 = vmatmul.mubr.bf16.gmra.mrb[0].mxu0 %v673
      %v733 = vpop.f32.mrb[0].mxu0
      %v734 = vadd.f32 0.0, %v733
      %v735 = vpop.f32.mrb[0].mxu0
      %v736 = vpop.f32.mrb[0].mxu0
      %v737 = vadd.f32 0.0, %v736
      %v738 = vpop.f32.mrb[0].mxu0
      %739 = vdwg.mxu0
      %v740 = vadd.f32 %v602, %v710
      %v741 = vadd.f32 %v603, %v713
      %v742 = vadd.f32 %v604, %v718
      %v743 = vadd.f32 %v605, %v721
      %v744 = vadd.f32 %v606, %v726
      %v745 = vadd.f32 %v607, %v729
      %v746 = vadd.f32 %v608, %v734
      %v747 = vadd.f32 %v609, %v737
      %748 = vst [vmem:[#allocation4] sm:$0xff] %v740
      %749 = vst [vmem:[#allocation4 + $0x8] sm:$0xff] %v741
      %750 = vst [vmem:[#allocation4 + $0x10] sm:$0xff] %v742
      %751 = vst [vmem:[#allocation4 + $0x18] sm:$0xff] %v743
      %752 = vst [vmem:[#allocation4 + $0x20] sm:$0xff] %v744
      %753 = vst [vmem:[#allocation4 + $0x28] sm:$0xff] %v745
      %754 = vst [vmem:[#allocation4 + $0x30] sm:$0xff] %v746
      %755 = vst [vmem:[#allocation4 + $0x38] sm:$0xff] %v747
      %v756 = vld [vmem:[#allocation2] sm:$0xf0]
      %v757 = vld [vmem:[#allocation2 + $0x8] sm:$0xff]
      %v758 = vld [vmem:[#allocation2 + $0x10] sm:$0xff]
      %v759 = vld [vmem:[#allocation2 + $0x18] sm:$0xff]
      %v760 = vld [vmem:[#allocation2 + $0x20] sm:$0xf]
      %v761 = vld [vmem:[#allocation4] sm:$0xff]
      %v762 = vld [vmem:[#allocation4 + $0x8] sm:$0xff]
      %v763 = vld [vmem:[#allocation4 + $0x10] sm:$0xff]
      %v764 = vld [vmem:[#allocation4 + $0x18] sm:$0xff]
      %v765 = vld [vmem:[#allocation4 + $0x20] sm:$0xff]
      %v766 = vld [vmem:[#allocation4 + $0x28] sm:$0xff]
      %v767 = vld [vmem:[#allocation4 + $0x30] sm:$0xff]
      %v768 = vld [vmem:[#allocation4 + $0x38] sm:$0xff]
      %s769 = scalar_lea.vmem %s3, 8
      %v770 = vld [vmem:[%s769] sm:$0xf]
      %v771 = vld [vmem:[%s769 + $0x4] sm:$0xf]
      %vm777 = vcmask 1043456
      %v778 = vrot.slane %v756, 4
      %v779 = vrot.slane %v757, 4
      %v780 = vsel %vm777, %v778, %v779
      %v781 = vrot.slane %v758, 4
      %v782 = vsel %vm777, %v779, %v781
      %v783 = vrot.slane %v759, 4
      %v784 = vsel %vm777, %v781, %v783
      %v785 = vrot.slane %v760, 4
      %v786 = vsel %vm777, %v783, %v785
      %v789 = vunpack.c.l.b16 %v770
      %v790 = vunpack.c.l.b16 %v771
      %v791 = vpack.c.b16 %v790, %v789
      %v794 = vsel %vm385, %v780, 0
      %v797 = vsel %vm385, %v782, 0
      %v800 = vsel %vm385, %v784, 0
      %v803 = vsel %vm385, %v786, 0
      %805 = vmatprep.subr.bf16.mxu0 0
      %806 = vmatpush1.bf16.msra.mxu0 %v791
      %807 = vmatprep.subr.bf16.mxu0 0
      %808 = vmatpush1.bf16.msra.mxu0 0
      %809 = vmatprep.subr.bf16.mxu0 0
      %810 = vmatpush1.bf16.msra.mxu0 0
      %811 = vmatprep.subr.bf16.mxu0 0
      %812 = vmatpush1.bf16.msra.mxu0 0
      %813 = vmatprep.subr.bf16.mxu0 0
      %814 = vmatpush1.bf16.msra.mxu0 0
      %815 = vmatprep.subr.bf16.mxu0 0
      %816 = vmatpush1.bf16.msra.mxu0 0
      %817 = vmatprep.subr.bf16.mxu0 0
      %818 = vmatpush1.bf16.msra.mxu0 0
      %819 = vmatprep.subr.bf16.mxu0 0
      %820 = vmatpush1.bf16.msra.mxu0 0
      %821 = vmatprep.subr.bf16.mxu0 0
      %822 = vmatpush1.bf16.msra.mxu0 0
      %823 = vmatprep.subr.bf16.mxu0 0
      %824 = vmatpush1.bf16.msra.mxu0 0
      %825 = vmatprep.subr.bf16.mxu0 0
      %826 = vmatpush1.bf16.msra.mxu0 0
      %827 = vmatprep.subr.bf16.mxu0 0
      %828 = vmatpush1.bf16.msra.mxu0 0
      %829 = vmatprep.subr.bf16.mxu0 0
      %830 = vmatpush1.bf16.msra.mxu0 0
      %831 = vmatprep.subr.bf16.mxu0 0
      %832 = vmatpush1.bf16.msra.mxu0 0
      %833 = vmatprep.subr.bf16.mxu0 0
      %834 = vmatpush1.bf16.msra.mxu0 0
      %835 = vmatprep.subr.bf16.mxu0 0
      %836 = vmatpush1.bf16.msra.mxu0 0
      %837 = vmatprep.mubr.bf16.mxu0 0
      %838 = vmatmul.mubr.bf16.gmra.mrb[0].mxu0 %v794
      %v839 = vpop.f32.mrb[0].mxu0
      %v840 = vadd.f32 0.0, %v839
      %v841 = vpop.f32.mrb[0].mxu0
      %v842 = vpop.f32.mrb[0].mxu0
      %v843 = vadd.f32 0.0, %v842
      %v844 = vpop.f32.mrb[0].mxu0
      %845 = vmatprep.mubr.bf16.mxu0 0
      %846 = vmatmul.mubr.bf16.gmra.mrb[0].mxu0 %v797
      %v847 = vpop.f32.mrb[0].mxu0
      %v848 = vadd.f32 0.0, %v847
      %v849 = vpop.f32.mrb[0].mxu0
      %v850 = vpop.f32.mrb[0].mxu0
      %v851 = vadd.f32 0.0, %v850
      %v852 = vpop.f32.mrb[0].mxu0
      %853 = vmatprep.mubr.bf16.mxu0 0
      %854 = vmatmul.mubr.bf16.gmra.mrb[0].mxu0 %v800
      %v855 = vpop.f32.mrb[0].mxu0
      %v856 = vadd.f32 0.0, %v855
      %v857 = vpop.f32.mrb[0].mxu0
      %v858 = vpop.f32.mrb[0].mxu0
      %v859 = vadd.f32 0.0, %v858
      %v860 = vpop.f32.mrb[0].mxu0
      %861 = vmatprep.mubr.bf16.mxu0 0
      %862 = vmatmul.mubr.bf16.gmra.mrb[0].mxu0 %v803
      %v863 = vpop.f32.mrb[0].mxu0
      %v864 = vadd.f32 0.0, %v863
      %v865 = vpop.f32.mrb[0].mxu0
      %v866 = vpop.f32.mrb[0].mxu0
      %v867 = vadd.f32 0.0, %v866
      %v868 = vpop.f32.mrb[0].mxu0
      %869 = vdwg.mxu0
      %v870 = vadd.f32 %v761, %v840
      %v871 = vadd.f32 %v762, %v843
      %v872 = vadd.f32 %v763, %v848
      %v873 = vadd.f32 %v764, %v851
      %v874 = vadd.f32 %v765, %v856
      %v875 = vadd.f32 %v766, %v859
      %v876 = vadd.f32 %v767, %v864
      %v877 = vadd.f32 %v768, %v867
      %878 = vst [vmem:[#allocation4] sm:$0xff] %v870
      %879 = vst [vmem:[#allocation4 + $0x8] sm:$0xff] %v871
      %880 = vst [vmem:[#allocation4 + $0x10] sm:$0xff] %v872
      %881 = vst [vmem:[#allocation4 + $0x18] sm:$0xff] %v873
      %882 = vst [vmem:[#allocation4 + $0x20] sm:$0xff] %v874
      %883 = vst [vmem:[#allocation4 + $0x28] sm:$0xff] %v875
      %884 = vst [vmem:[#allocation4 + $0x30] sm:$0xff] %v876
      %885 = vst [vmem:[#allocation4 + $0x38] sm:$0xff] %v877
      %v886 = vld [vmem:[#allocation2] sm:$0x80]
      %v887 = vld [vmem:[#allocation2 + $0x8] sm:$0xff]
      %v888 = vld [vmem:[#allocation2 + $0x10] sm:$0xff]
      %v889 = vld [vmem:[#allocation2 + $0x18] sm:$0xff]
      %v890 = vld [vmem:[#allocation2 + $0x20] sm:$0xff]
      %vm891 = vsmask.f32 7424
      %v892 = vrot.slane %v561, 1
      %v893 = vor.u32 %v558, %v892
      %v894 = vrot.slane %v569, 1
      %v895 = vsel %vm891, %v893, %v894
      %v896 = vor.u32 %v566, %v894
      %v897 = vrot.slane %v578, 1
      %v898 = vsel %vm891, %v896, %v897
      %v899 = vor.u32 %v575, %v897
      %v900 = vrot.slane %v587, 1
      %v901 = vsel %vm891, %v899, %v900
      %v902 = vor.u32 %v584, %v900
      %v908 = vmul.bf16 %v886, %v892
      %v909 = vmul.bf16 %v887, %v895
      %v910 = vmul.bf16 %v888, %v898
      %v911 = vmul.bf16 %v889, %v901
      %v912 = vmul.bf16 %v890, %v902
      %v913 = vld [vmem:[#allocation4] sm:$0xff]
      %v914 = vld [vmem:[#allocation4 + $0x8] sm:$0xff]
      %v915 = vld [vmem:[#allocation4 + $0x10] sm:$0xff]
      %v916 = vld [vmem:[#allocation4 + $0x18] sm:$0xff]
      %v917 = vld [vmem:[#allocation4 + $0x20] sm:$0xff]
      %v918 = vld [vmem:[#allocation4 + $0x28] sm:$0xff]
      %v919 = vld [vmem:[#allocation4 + $0x30] sm:$0xff]
      %v920 = vld [vmem:[#allocation4 + $0x38] sm:$0xff]
      %s921 = scalar_lea.vmem %s3, 16
      %v922 = vld [vmem:[%s921] sm:$0xf]
      %v923 = vld [vmem:[%s921 + $0x4] sm:$0xf]
      %vm924 = vsmask.f32 256
      %v926 = vshrl.u32 %v908, 16
      %v928 = vrot.slane %v926, 7
      %v930 = vshrl.u32 %v909, 16
      %v932 = vrot.slane %v930, 7
      %v933 = vshll.u32 %v909, 16
      %v935 = vor.u32 %v932, %v933
      %v936 = vsel %vm924, %v928, %v935
      %v938 = vshrl.u32 %v910, 16
      %v940 = vrot.slane %v938, 7
      %v941 = vshll.u32 %v910, 16
      %v943 = vor.u32 %v940, %v941
      %v944 = vsel %vm924, %v932, %v943
      %v946 = vshrl.u32 %v911, 16
      %v948 = vrot.slane %v946, 7
      %v949 = vshll.u32 %v911, 16
      %v951 = vor.u32 %v948, %v949
      %v952 = vsel %vm924, %v940, %v951
      %v954 = vshrl.u32 %v912, 16
      %v956 = vrot.slane %v954, 7
      %v957 = vshll.u32 %v912, 16
      %v959 = vor.u32 %v956, %v957
      %v960 = vsel %vm924, %v948, %v959
      %v963 = vunpack.c.l.b16 %v922
      %v964 = vunpack.c.l.b16 %v923
      %v965 = vpack.c.b16 %v964, %v963
      %v968 = vsel %vm385, %v936, 0
      %v971 = vsel %vm385, %v944, 0
      %v974 = vsel %vm385, %v952, 0
      %v977 = vsel %vm385, %v960, 0
      %979 = vmatprep.subr.bf16.mxu0 0
      %980 = vmatpush1.bf16.msra.mxu0 %v965
      %981 = vmatprep.subr.bf16.mxu0 0
      %982 = vmatpush1.bf16.msra.mxu0 0
      %983 = vmatprep.subr.bf16.mxu0 0
      %984 = vmatpush1.bf16.msra.mxu0 0
      %985 = vmatprep.subr.bf16.mxu0 0
      %986 = vmatpush1.bf16.msra.mxu0 0
      %987 = vmatprep.subr.bf16.mxu0 0
      %988 = vmatpush1.bf16.msra.mxu0 0
      %989 = vmatprep.subr.bf16.mxu0 0
      %990 = vmatpush1.bf16.msra.mxu0 0
      %991 = vmatprep.subr.bf16.mxu0 0
      %992 = vmatpush1.bf16.msra.mxu0 0
      %993 = vmatprep.subr.bf16.mxu0 0
      %994 = vmatpush1.bf16.msra.mxu0 0
      %995 = vmatprep.subr.bf16.mxu0 0
      %996 = vmatpush1.bf16.msra.mxu0 0
      %997 = vmatprep.subr.bf16.mxu0 0
      %998 = vmatpush1.bf16.msra.mxu0 0
      %999 = vmatprep.subr.bf16.mxu0 0
      %1000 = vmatpush1.bf16.msra.mxu0 0
      %1001 = vmatprep.subr.bf16.mxu0 0
      %1002 = vmatpush1.bf16.msra.mxu0 0
      %1003 = vmatprep.subr.bf16.mxu0 0
      %1004 = vmatpush1.bf16.msra.mxu0 0
      %1005 = vmatprep.subr.bf16.mxu0 0
      %1006 = vmatpush1.bf16.msra.mxu0 0
      %1007 = vmatprep.subr.bf16.mxu0 0
      %1008 = vmatpush1.bf16.msra.mxu0 0
      %1009 = vmatprep.subr.bf16.mxu0 0
      %1010 = vmatpush1.bf16.msra.mxu0 0
      %1011 = vmatprep.mubr.bf16.mxu0 0
      %1012 = vmatmul.mubr.bf16.gmra.mrb[0].mxu0 %v968
      %v1013 = vpop.f32.mrb[0].mxu0
      %v1014 = vadd.f32 0.0, %v1013
      %v1015 = vpop.f32.mrb[0].mxu0
      %v1016 = vpop.f32.mrb[0].mxu0
      %v1017 = vadd.f32 0.0, %v1016
      %v1018 = vpop.f32.mrb[0].mxu0
      %1019 = vmatprep.mubr.bf16.mxu0 0
      %1020 = vmatmul.mubr.bf16.gmra.mrb[0].mxu0 %v971
      %v1021 = vpop.f32.mrb[0].mxu0
      %v1022 = vadd.f32 0.0, %v1021
      %v1023 = vpop.f32.mrb[0].mxu0
      %v1024 = vpop.f32.mrb[0].mxu0
      %v1025 = vadd.f32 0.0, %v1024
      %v1026 = vpop.f32.mrb[0].mxu0
      %1027 = vmatprep.mubr.bf16.mxu0 0
      %1028 = vmatmul.mubr.bf16.gmra.mrb[0].mxu0 %v974
      %v1029 = vpop.f32.mrb[0].mxu0
      %v1030 = vadd.f32 0.0, %v1029
      %v1031 = vpop.f32.mrb[0].mxu0
      %v1032 = vpop.f32.mrb[0].mxu0
      %v1033 = vadd.f32 0.0, %v1032
      %v1034 = vpop.f32.mrb[0].mxu0
      %1035 = vmatprep.mubr.bf16.mxu0 0
      %1036 = vmatmul.mubr.bf16.gmra.mrb[0].mxu0 %v977
      %v1037 = vpop.f32.mrb[0].mxu0
      %v1038 = vadd.f32 0.0, %v1037
      %v1039 = vpop.f32.mrb[0].mxu0
      %v1040 = vpop.f32.mrb[0].mxu0
      %v1041 = vadd.f32 0.0, %v1040
      %v1042 = vpop.f32.mrb[0].mxu0
      %1043 = vdwg.mxu0
      %v1044 = vadd.f32 %v913, %v1014
      %v1045 = vadd.f32 %v914, %v1017
      %v1046 = vadd.f32 %v915, %v1022
      %v1047 = vadd.f32 %v916, %v1025
      %v1048 = vadd.f32 %v917, %v1030
      %v1049 = vadd.f32 %v918, %v1033
      %v1050 = vadd.f32 %v919, %v1038
      %v1051 = vadd.f32 %v920, %v1041
      %1052 = vst [vmem:[#allocation4] sm:$0xff] %v1044
      %1053 = vst [vmem:[#allocation4 + $0x8] sm:$0xff] %v1045
      %1054 = vst [vmem:[#allocation4 + $0x10] sm:$0xff] %v1046
      %1055 = vst [vmem:[#allocation4 + $0x18] sm:$0xff] %v1047
      %1056 = vst [vmem:[#allocation4 + $0x20] sm:$0xff] %v1048
      %1057 = vst [vmem:[#allocation4 + $0x28] sm:$0xff] %v1049
      %1058 = vst [vmem:[#allocation4 + $0x30] sm:$0xff] %v1050
      %1059 = vst [vmem:[#allocation4 + $0x38] sm:$0xff] %v1051
      %v1060 = vld [vmem:[#allocation2 + $0x8] sm:$0xff]
      %v1061 = vld [vmem:[#allocation2 + $0x10] sm:$0xff]
      %v1062 = vld [vmem:[#allocation2 + $0x18] sm:$0xff]
      %v1063 = vld [vmem:[#allocation2 + $0x20] sm:$0xff]
      %v1064 = vld [vmem:[#allocation4] sm:$0xff]
      %v1065 = vld [vmem:[#allocation4 + $0x8] sm:$0xff]
      %v1066 = vld [vmem:[#allocation4 + $0x10] sm:$0xff]
      %v1067 = vld [vmem:[#allocation4 + $0x18] sm:$0xff]
      %v1068 = vld [vmem:[#allocation4 + $0x20] sm:$0xff]
      %v1069 = vld [vmem:[#allocation4 + $0x28] sm:$0xff]
      %v1070 = vld [vmem:[#allocation4 + $0x30] sm:$0xff]
      %v1071 = vld [vmem:[#allocation4 + $0x38] sm:$0xff]
      %s1072 = scalar_lea.vmem %s3, 24
      %v1073 = vld [vmem:[%s1072] sm:$0xf]
      %v1074 = vld [vmem:[%s1072 + $0x4] sm:$0xf]
      %v1077 = vunpack.c.l.b16 %v1073
      %v1078 = vunpack.c.l.b16 %v1074
      %v1079 = vpack.c.b16 %v1078, %v1077
      %v1082 = vsel %vm385, %v1060, 0
      %v1085 = vsel %vm385, %v1061, 0
      %v1088 = vsel %vm385, %v1062, 0
      %v1091 = vsel %vm385, %v1063, 0
      %1093 = vmatprep.subr.bf16.mxu0 0
      %1094 = vmatpush1.bf16.msra.mxu0 %v1079
      %1095 = vmatprep.subr.bf16.mxu0 0
      %1096 = vmatpush1.bf16.msra.mxu0 0
      %1097 = vmatprep.subr.bf16.mxu0 0
      %1098 = vmatpush1.bf16.msra.mxu0 0
      %1099 = vmatprep.subr.bf16.mxu0 0
      %1100 = vmatpush1.bf16.msra.mxu0 0
      %1101 = vmatprep.subr.bf16.mxu0 0
      %1102 = vmatpush1.bf16.msra.mxu0 0
      %1103 = vmatprep.subr.bf16.mxu0 0
      %1104 = vmatpush1.bf16.msra.mxu0 0
      %1105 = vmatprep.subr.bf16.mxu0 0
      %1106 = vmatpush1.bf16.msra.mxu0 0
      %1107 = vmatprep.subr.bf16.mxu0 0
      %1108 = vmatpush1.bf16.msra.mxu0 0
      %1109 = vmatprep.subr.bf16.mxu0 0
      %1110 = vmatpush1.bf16.msra.mxu0 0
      %1111 = vmatprep.subr.bf16.mxu0 0
      %1112 = vmatpush1.bf16.msra.mxu0 0
      %1113 = vmatprep.subr.bf16.mxu0 0
      %1114 = vmatpush1.bf16.msra.mxu0 0
      %1115 = vmatprep.subr.bf16.mxu0 0
      %1116 = vmatpush1.bf16.msra.mxu0 0
      %1117 = vmatprep.subr.bf16.mxu0 0
      %1118 = vmatpush1.bf16.msra.mxu0 0
      %1119 = vmatprep.subr.bf16.mxu0 0
      %1120 = vmatpush1.bf16.msra.mxu0 0
      %1121 = vmatprep.subr.bf16.mxu0 0
      %1122 = vmatpush1.bf16.msra.mxu0 0
      %1123 = vmatprep.subr.bf16.mxu0 0
      %1124 = vmatpush1.bf16.msra.mxu0 0
      %1125 = vmatprep.mubr.bf16.mxu0 0
      %1126 = vmatmul.mubr.bf16.gmra.mrb[0].mxu0 %v1082
      %v1127 = vpop.f32.mrb[0].mxu0
      %v1128 = vadd.f32 0.0, %v1127
      %v1129 = vpop.f32.mrb[0].mxu0
      %v1130 = vpop.f32.mrb[0].mxu0
      %v1131 = vadd.f32 0.0, %v1130
      %v1132 = vpop.f32.mrb[0].mxu0
      %1133 = vmatprep.mubr.bf16.mxu0 0
      %1134 = vmatmul.mubr.bf16.gmra.mrb[0].mxu0 %v1085
      %v1135 = vpop.f32.mrb[0].mxu0
      %v1136 = vadd.f32 0.0, %v1135
      %v1137 = vpop.f32.mrb[0].mxu0
      %v1138 = vpop.f32.mrb[0].mxu0
      %v1139 = vadd.f32 0.0, %v1138
      %v1140 = vpop.f32.mrb[0].mxu0
      %1141 = vmatprep.mubr.bf16.mxu0 0
      %1142 = vmatmul.mubr.bf16.gmra.mrb[0].mxu0 %v1088
      %v1143 = vpop.f32.mrb[0].mxu0
      %v1144 = vadd.f32 0.0, %v1143
      %v1145 = vpop.f32.mrb[0].mxu0
      %v1146 = vpop.f32.mrb[0].mxu0
      %v1147 = vadd.f32 0.0, %v1146
      %v1148 = vpop.f32.mrb[0].mxu0
      %1149 = vmatprep.mubr.bf16.mxu0 0
      %1150 = vmatmul.mubr.bf16.gmra.mrb[0].mxu0 %v1091
      %v1151 = vpop.f32.mrb[0].mxu0
      %v1152 = vadd.f32 0.0, %v1151
      %v1153 = vpop.f32.mrb[0].mxu0
      %v1154 = vpop.f32.mrb[0].mxu0
      %v1155 = vadd.f32 0.0, %v1154
      %v1156 = vpop.f32.mrb[0].mxu0
      %1157 = vdwg.mxu0
      %v1158 = vadd.f32 %v1064, %v1128
      %v1159 = vadd.f32 %v1065, %v1131
      %v1160 = vadd.f32 %v1066, %v1136
      %v1161 = vadd.f32 %v1067, %v1139
      %v1162 = vadd.f32 %v1068, %v1144
      %v1163 = vadd.f32 %v1069, %v1147
      %v1164 = vadd.f32 %v1070, %v1152
      %v1165 = vadd.f32 %v1071, %v1155
      %1166 = vst [vmem:[#allocation4] sm:$0xff] %v1158
      %1167 = vst [vmem:[#allocation4 + $0x8] sm:$0xff] %v1159
      %1168 = vst [vmem:[#allocation4 + $0x10] sm:$0xff] %v1160
      %1169 = vst [vmem:[#allocation4 + $0x18] sm:$0xff] %v1161
      %1170 = vst [vmem:[#allocation4 + $0x20] sm:$0xff] %v1162
      %1171 = vst [vmem:[#allocation4 + $0x28] sm:$0xff] %v1163
      %1172 = vst [vmem:[#allocation4 + $0x30] sm:$0xff] %v1164
      %1173 = vst [vmem:[#allocation4 + $0x38] sm:$0xff] %v1165
      %v1174 = vld [vmem:[#allocation4] sm:$0xff]
      %v1175 = vld [vmem:[#allocation4 + $0x8] sm:$0xff]
      %v1176 = vld [vmem:[#allocation4 + $0x10] sm:$0xff]
      %v1177 = vld [vmem:[#allocation4 + $0x18] sm:$0xff]
      %v1178 = vld [vmem:[#allocation4 + $0x20] sm:$0xff]
      %v1179 = vld [vmem:[#allocation4 + $0x28] sm:$0xff]
      %v1180 = vld [vmem:[#allocation4 + $0x30] sm:$0xff]
      %v1181 = vld [vmem:[#allocation4 + $0x38] sm:$0xff]
      %v1182 = vld [vmem:[%s6] sm:$0x1]
      %v1184 = vlaneseq
      %v1185 = vshrl.u32 %v1184, 7
      %v1186 = vsub.s32 0, %v1185
      %v1187 = vrot.slane %v1182, %v1186
      %v1189 = vmul.f32 %v1174, %v1187
      %v1190 = vmul.f32 %v1175, %v1187
      %v1191 = vmul.f32 %v1176, %v1187
      %v1192 = vmul.f32 %v1177, %v1187
      %v1193 = vmul.f32 %v1178, %v1187
      %v1194 = vmul.f32 %v1179, %v1187
      %v1195 = vmul.f32 %v1180, %v1187
      %v1196 = vmul.f32 %v1181, %v1187
      %v1197 = vld [vmem:[%s7] sm:$0x1]
      %v1199 = vlaneseq
      %v1200 = vshrl.u32 %v1199, 7
      %v1201 = vsub.s32 0, %v1200
      %v1202 = vrot.slane %v1197, %v1201
      %v1204 = vadd.f32 %v1189, %v1202
      %v1205 = vadd.f32 %v1190, %v1202
      %v1206 = vadd.f32 %v1191, %v1202
      %v1207 = vadd.f32 %v1192, %v1202
      %v1208 = vadd.f32 %v1193, %v1202
      %v1209 = vadd.f32 %v1194, %v1202
      %v1210 = vadd.f32 %v1195, %v1202
      %v1211 = vadd.f32 %v1196, %v1202
      %v1212 = vmax.f32 %v1204, 0.0
      %v1213 = vmax.f32 %v1205, 0.0
      %v1214 = vmax.f32 %v1206, 0.0
      %v1215 = vmax.f32 %v1207, 0.0
      %v1216 = vmax.f32 %v1208, 0.0
      %v1217 = vmax.f32 %v1209, 0.0
      %v1218 = vmax.f32 %v1210, 0.0
      %v1219 = vmax.f32 %v1211, 0.0
      %v1220 = vpack.c.bf16 %v1213, %v1212
      %v1221 = vpack.c.bf16 %v1215, %v1214
      %v1222 = vpack.c.bf16 %v1217, %v1216
      %v1223 = vpack.c.bf16 %v1219, %v1218
      %1224 = vst [vmem:[#allocation3] sm:$0xff] 0
      %1225 = vst [vmem:[#allocation3 + $0x8] sm:$0xff] 0
      %1226 = vst [vmem:[#allocation3 + $0x10] sm:$0xff] 0
      %1227 = vst [vmem:[#allocation3 + $0x18] sm:$0xff] 0
      %1228 = vst [vmem:[#allocation3 + $0x20] sm:$0xff] 0
      %1229 = vst [vmem:[#allocation3 + $0x28] sm:$0xff] 0
      %1230 = vst [vmem:[#allocation3 + $0x8] sm:$0xff] %v1220
      %1231 = vst [vmem:[#allocation3 + $0x10] sm:$0xff] %v1221
      %1232 = vst [vmem:[#allocation3 + $0x18] sm:$0xff] %v1222
      %1233 = vst [vmem:[#allocation3 + $0x20] sm:$0xff] %v1223
      %1234 = vst [vmem:[#allocation4] sm:$0xff] 0.0
      %1235 = vst [vmem:[#allocation4 + $0x8] sm:$0xff] 0.0
      %1236 = vst [vmem:[#allocation4 + $0x10] sm:$0xff] 0.0
      %1237 = vst [vmem:[#allocation4 + $0x18] sm:$0xff] 0.0
      %1238 = vst [vmem:[#allocation4 + $0x20] sm:$0xff] 0.0
      %1239 = vst [vmem:[#allocation4 + $0x28] sm:$0xff] 0.0
      %1240 = vst [vmem:[#allocation4 + $0x30] sm:$0xff] 0.0
      %1241 = vst [vmem:[#allocation4 + $0x38] sm:$0xff] 0.0
      %v1242 = vld [vmem:[#allocation3] sm:$0xf8]
      %v1243 = vld [vmem:[#allocation3 + $0x8] sm:$0xff]
      %v1244 = vld [vmem:[#allocation3 + $0x10] sm:$0xff]
      %v1245 = vld [vmem:[#allocation3 + $0x18] sm:$0xff]
      %v1246 = vld [vmem:[#allocation3 + $0x20] sm:$0xf]
      %v1247 = vmul.bf16 %v1242, %v564
      %v1248 = vmul.bf16 %v1243, %v573
      %v1249 = vmul.bf16 %v1244, %v582
      %v1250 = vmul.bf16 %v1245, %v591
      %v1251 = vmul.bf16 %v1246, %v590
      %v1252 = vld [vmem:[#allocation4] sm:$0xff]
      %v1253 = vld [vmem:[#allocation4 + $0x8] sm:$0xff]
      %v1254 = vld [vmem:[#allocation4 + $0x10] sm:$0xff]
      %v1255 = vld [vmem:[#allocation4 + $0x18] sm:$0xff]
      %v1256 = vld [vmem:[#allocation4 + $0x20] sm:$0xff]
      %v1257 = vld [vmem:[#allocation4 + $0x28] sm:$0xff]
      %v1258 = vld [vmem:[#allocation4 + $0x30] sm:$0xff]
      %v1259 = vld [vmem:[#allocation4 + $0x38] sm:$0xff]
      %v1260 = vld [vmem:[%s4] sm:$0xf]
      %v1261 = vld [vmem:[%s4 + $0x4] sm:$0xf]
      %v1262 = vld [vmem:[%s4 + $0x8] sm:$0xf]
      %v1263 = vld [vmem:[%s4 + $0xc] sm:$0xf]
      %v1264 = vld [vmem:[%s4 + $0x10] sm:$0xf]
      %v1265 = vld [vmem:[%s4 + $0x14] sm:$0xf]
      %v1266 = vld [vmem:[%s4 + $0x18] sm:$0xf]
      %v1267 = vld [vmem:[%s4 + $0x1c] sm:$0xf]
      %v1268 = vld [vmem:[%s4 + $0x20] sm:$0xf]
      %v1269 = vld [vmem:[%s4 + $0x24] sm:$0xf]
      %v1270 = vld [vmem:[%s4 + $0x28] sm:$0xf]
      %v1271 = vld [vmem:[%s4 + $0x2c] sm:$0xf]
      %v1272 = vld [vmem:[%s4 + $0x30] sm:$0xf]
      %v1273 = vld [vmem:[%s4 + $0x34] sm:$0xf]
      %v1274 = vld [vmem:[%s4 + $0x38] sm:$0xf]
      %v1275 = vld [vmem:[%s4 + $0x3c] sm:$0xf]
      %v1277 = vshrl.u32 %v1247, 16
      %v1279 = vrot.slane %v1277, 3
      %v1280 = vshll.u32 %v1247, 16
      %v1282 = vrot.slane %v1280, 4
      %v1283 = vor.u32 %v1279, %v1282
      %v1285 = vshrl.u32 %v1248, 16
      %v1287 = vrot.slane %v1285, 3
      %v1288 = vshll.u32 %v1248, 16
      %v1290 = vrot.slane %v1288, 4
      %v1291 = vor.u32 %v1287, %v1290
      %v1292 = vsel %vm612, %v1283, %v1291
      %v1294 = vshrl.u32 %v1249, 16
      %v1296 = vrot.slane %v1294, 3
      %v1297 = vshll.u32 %v1249, 16
      %v1299 = vrot.slane %v1297, 4
      %v1300 = vor.u32 %v1296, %v1299
      %v1301 = vsel %vm612, %v1291, %v1300
      %v1303 = vshrl.u32 %v1250, 16
      %v1305 = vrot.slane %v1303, 3
      %v1306 = vshll.u32 %v1250, 16
      %v1308 = vrot.slane %v1306, 4
      %v1309 = vor.u32 %v1305, %v1308
      %v1310 = vsel %vm612, %v1300, %v1309
      %v1312 = vshrl.u32 %v1251, 16
      %v1314 = vrot.slane %v1312, 3
      %v1315 = vshll.u32 %v1251, 16
      %v1317 = vrot.slane %v1315, 4
      %v1318 = vor.u32 %v1314, %v1317
      %v1319 = vsel %vm612, %v1309, %v1318
      %v1340 = vunpack.c.l.b16 %v1260
      %v1341 = vunpack.c.l.b16 %v1261
      %v1342 = vunpack.c.l.b16 %v1262
      %v1343 = vunpack.c.l.b16 %v1263
      %v1344 = vunpack.c.l.b16 %v1264
      %v1345 = vunpack.c.l.b16 %v1265
      %v1346 = vunpack.c.l.b16 %v1266
      %v1347 = vunpack.c.l.b16 %v1267
      %v1348 = vunpack.c.l.b16 %v1268
      %v1349 = vunpack.c.l.b16 %v1269
      %v1350 = vunpack.c.l.b16 %v1270
      %v1351 = vunpack.c.l.b16 %v1271
      %v1352 = vunpack.c.l.b16 %v1272
      %v1353 = vunpack.c.l.b16 %v1273
      %v1354 = vunpack.c.l.b16 %v1274
      %v1355 = vunpack.c.l.b16 %v1275
      %v1356 = vpack.c.b16 %v1341, %v1340
      %v1357 = vpack.c.b16 %v1343, %v1342
      %v1358 = vpack.c.b16 %v1345, %v1344
      %v1359 = vpack.c.b16 %v1347, %v1346
      %v1360 = vpack.c.b16 %v1349, %v1348
      %v1361 = vpack.c.b16 %v1351, %v1350
      %v1362 = vpack.c.b16 %v1353, %v1352
      %v1363 = vpack.c.b16 %v1355, %v1354
      %1372 = vmatprep.subr.bf16.mxu0 0
      %1373 = vmatpush1.bf16.msra.mxu0 %v1356
      %1374 = vmatprep.subr.bf16.mxu0 0
      %1375 = vmatpush1.bf16.msra.mxu0 %v1357
      %1376 = vmatprep.subr.bf16.mxu0 0
      %1377 = vmatpush1.bf16.msra.mxu0 %v1358
      %1378 = vmatprep.subr.bf16.mxu0 0
      %1379 = vmatpush1.bf16.msra.mxu0 %v1359
      %1380 = vmatprep.subr.bf16.mxu0 0
      %1381 = vmatpush1.bf16.msra.mxu0 %v1360
      %1382 = vmatprep.subr.bf16.mxu0 0
      %1383 = vmatpush1.bf16.msra.mxu0 %v1361
      %1384 = vmatprep.subr.bf16.mxu0 0
      %1385 = vmatpush1.bf16.msra.mxu0 %v1362
      %1386 = vmatprep.subr.bf16.mxu0 0
      %1387 = vmatpush1.bf16.msra.mxu0 %v1363
      %1388 = vmatprep.subr.bf16.mxu0 0
      %1389 = vmatpush1.bf16.msra.mxu0 0
      %1390 = vmatprep.subr.bf16.mxu0 0
      %1391 = vmatpush1.bf16.msra.mxu0 0
      %1392 = vmatprep.subr.bf16.mxu0 0
      %1393 = vmatpush1.bf16.msra.mxu0 0
      %1394 = vmatprep.subr.bf16.mxu0 0
      %1395 = vmatpush1.bf16.msra.mxu0 0
      %1396 = vmatprep.subr.bf16.mxu0 0
      %1397 = vmatpush1.bf16.msra.mxu0 0
      %1398 = vmatprep.subr.bf16.mxu0 0
      %1399 = vmatpush1.bf16.msra.mxu0 0
      %1400 = vmatprep.subr.bf16.mxu0 0
      %1401 = vmatpush1.bf16.msra.mxu0 0
      %1402 = vmatprep.subr.bf16.mxu0 0
      %1403 = vmatpush1.bf16.msra.mxu0 0
      %1404 = vmatprep.mubr.bf16.mxu0 0
      %1405 = vmatmul.mubr.bf16.gmra.mrb[0].mxu0 %v1292
      %v1406 = vpop.f32.mrb[0].mxu0
      %v1407 = vadd.f32 0.0, %v1406
      %v1408 = vpop.f32.mrb[0].mxu0
      %v1409 = vpop.f32.mrb[0].mxu0
      %v1410 = vadd.f32 0.0, %v1409
      %v1411 = vpop.f32.mrb[0].mxu0
      %1412 = vmatprep.mubr.bf16.mxu0 0
      %1413 = vmatmul.mubr.bf16.gmra.mrb[0].mxu0 %v1301
      %v1414 = vpop.f32.mrb[0].mxu0
      %v1415 = vadd.f32 0.0, %v1414
      %v1416 = vpop.f32.mrb[0].mxu0
      %v1417 = vpop.f32.mrb[0].mxu0
      %v1418 = vadd.f32 0.0, %v1417
      %v1419 = vpop.f32.mrb[0].mxu0
      %1420 = vmatprep.mubr.bf16.mxu0 0
      %1421 = vmatmul.mubr.bf16.gmra.mrb[0].mxu0 %v1310
      %v1422 = vpop.f32.mrb[0].mxu0
      %v1423 = vadd.f32 0.0, %v1422
      %v1424 = vpop.f32.mrb[0].mxu0
      %v1425 = vpop.f32.mrb[0].mxu0
      %v1426 = vadd.f32 0.0, %v1425
      %v1427 = vpop.f32.mrb[0].mxu0
      %1428 = vmatprep.mubr.bf16.mxu0 0
      %1429 = vmatmul.mubr.bf16.gmra.mrb[0].mxu0 %v1319
      %v1430 = vpop.f32.mrb[0].mxu0
      %v1431 = vadd.f32 0.0, %v1430
      %v1432 = vpop.f32.mrb[0].mxu0
      %v1433 = vpop.f32.mrb[0].mxu0
      %v1434 = vadd.f32 0.0, %v1433
      %v1435 = vpop.f32.mrb[0].mxu0
      %1436 = vdwg.mxu0
      %v1437 = vadd.f32 %v1252, %v1407
      %v1438 = vadd.f32 %v1253, %v1410
      %v1439 = vadd.f32 %v1254, %v1415
      %v1440 = vadd.f32 %v1255, %v1418
      %v1441 = vadd.f32 %v1256, %v1423
      %v1442 = vadd.f32 %v1257, %v1426
      %v1443 = vadd.f32 %v1258, %v1431
      %v1444 = vadd.f32 %v1259, %v1434
      %1445 = vst [vmem:[#allocation4] sm:$0xff] %v1437
      %1446 = vst [vmem:[#allocation4 + $0x8] sm:$0xff] %v1438
      %1447 = vst [vmem:[#allocation4 + $0x10] sm:$0xff] %v1439
      %1448 = vst [vmem:[#allocation4 + $0x18] sm:$0xff] %v1440
      %1449 = vst [vmem:[#allocation4 + $0x20] sm:$0xff] %v1441
      %1450 = vst [vmem:[#allocation4 + $0x28] sm:$0xff] %v1442
      %1451 = vst [vmem:[#allocation4 + $0x30] sm:$0xff] %v1443
      %1452 = vst [vmem:[#allocation4 + $0x38] sm:$0xff] %v1444
      %v1453 = vld [vmem:[#allocation3] sm:$0xf0]
      %v1454 = vld [vmem:[#allocation3 + $0x8] sm:$0xff]
      %v1455 = vld [vmem:[#allocation3 + $0x10] sm:$0xff]
      %v1456 = vld [vmem:[#allocation3 + $0x18] sm:$0xff]
      %v1457 = vld [vmem:[#allocation3 + $0x20] sm:$0xf]
      %v1458 = vld [vmem:[#allocation4] sm:$0xff]
      %v1459 = vld [vmem:[#allocation4 + $0x8] sm:$0xff]
      %v1460 = vld [vmem:[#allocation4 + $0x10] sm:$0xff]
      %v1461 = vld [vmem:[#allocation4 + $0x18] sm:$0xff]
      %v1462 = vld [vmem:[#allocation4 + $0x20] sm:$0xff]
      %v1463 = vld [vmem:[#allocation4 + $0x28] sm:$0xff]
      %v1464 = vld [vmem:[#allocation4 + $0x30] sm:$0xff]
      %v1465 = vld [vmem:[#allocation4 + $0x38] sm:$0xff]
      %s1466 = scalar_lea.vmem %s4, 64
      %v1467 = vld [vmem:[%s1466] sm:$0xf]
      %v1468 = vld [vmem:[%s1466 + $0x4] sm:$0xf]
      %v1469 = vld [vmem:[%s1466 + $0x8] sm:$0xf]
      %v1470 = vld [vmem:[%s1466 + $0xc] sm:$0xf]
      %v1471 = vld [vmem:[%s1466 + $0x10] sm:$0xf]
      %v1472 = vld [vmem:[%s1466 + $0x14] sm:$0xf]
      %v1473 = vld [vmem:[%s1466 + $0x18] sm:$0xf]
      %v1474 = vld [vmem:[%s1466 + $0x1c] sm:$0xf]
      %v1475 = vld [vmem:[%s1466 + $0x20] sm:$0xf]
      %v1476 = vld [vmem:[%s1466 + $0x24] sm:$0xf]
      %v1477 = vld [vmem:[%s1466 + $0x28] sm:$0xf]
      %v1478 = vld [vmem:[%s1466 + $0x2c] sm:$0xf]
      %v1479 = vld [vmem:[%s1466 + $0x30] sm:$0xf]
      %v1480 = vld [vmem:[%s1466 + $0x34] sm:$0xf]
      %v1481 = vld [vmem:[%s1466 + $0x38] sm:$0xf]
      %v1482 = vld [vmem:[%s1466 + $0x3c] sm:$0xf]
      %v1488 = vrot.slane %v1453, 4
      %v1489 = vrot.slane %v1454, 4
      %v1490 = vsel %vm777, %v1488, %v1489
      %v1491 = vrot.slane %v1455, 4
      %v1492 = vsel %vm777, %v1489, %v1491
      %v1493 = vrot.slane %v1456, 4
      %v1494 = vsel %vm777, %v1491, %v1493
      %v1495 = vrot.slane %v1457, 4
      %v1496 = vsel %vm777, %v1493, %v1495
      %v1517 = vunpack.c.l.b16 %v1467
      %v1518 = vunpack.c.l.b16 %v1468
      %v1519 = vunpack.c.l.b16 %v1469
      %v1520 = vunpack.c.l.b16 %v1470
      %v1521 = vunpack.c.l.b16 %v1471
      %v1522 = vunpack.c.l.b16 %v1472
      %v1523 = vunpack.c.l.b16 %v1473
      %v1524 = vunpack.c.l.b16 %v1474
      %v1525 = vunpack.c.l.b16 %v1475
      %v1526 = vunpack.c.l.b16 %v1476
      %v1527 = vunpack.c.l.b16 %v1477
      %v1528 = vunpack.c.l.b16 %v1478
      %v1529 = vunpack.c.l.b16 %v1479
      %v1530 = vunpack.c.l.b16 %v1480
      %v1531 = vunpack.c.l.b16 %v1481
      %v1532 = vunpack.c.l.b16 %v1482
      %v1533 = vpack.c.b16 %v1518, %v1517
      %v1534 = vpack.c.b16 %v1520, %v1519
      %v1535 = vpack.c.b16 %v1522, %v1521
      %v1536 = vpack.c.b16 %v1524, %v1523
      %v1537 = vpack.c.b16 %v1526, %v1525
      %v1538 = vpack.c.b16 %v1528, %v1527
      %v1539 = vpack.c.b16 %v1530, %v1529
      %v1540 = vpack.c.b16 %v1532, %v1531
      %1549 = vmatprep.subr.bf16.mxu0 0
      %1550 = vmatpush1.bf16.msra.mxu0 %v1533
      %1551 = vmatprep.subr.bf16.mxu0 0
      %1552 = vmatpush1.bf16.msra.mxu0 %v1534
      %1553 = vmatprep.subr.bf16.mxu0 0
      %1554 = vmatpush1.bf16.msra.mxu0 %v1535
      %1555 = vmatprep.subr.bf16.mxu0 0
      %1556 = vmatpush1.bf16.msra.mxu0 %v1536
      %1557 = vmatprep.subr.bf16.mxu0 0
      %1558 = vmatpush1.bf16.msra.mxu0 %v1537
      %1559 = vmatprep.subr.bf16.mxu0 0
      %1560 = vmatpush1.bf16.msra.mxu0 %v1538
      %1561 = vmatprep.subr.bf16.mxu0 0
      %1562 = vmatpush1.bf16.msra.mxu0 %v1539
      %1563 = vmatprep.subr.bf16.mxu0 0
      %1564 = vmatpush1.bf16.msra.mxu0 %v1540
      %1565 = vmatprep.subr.bf16.mxu0 0
      %1566 = vmatpush1.bf16.msra.mxu0 0
      %1567 = vmatprep.subr.bf16.mxu0 0
      %1568 = vmatpush1.bf16.msra.mxu0 0
      %1569 = vmatprep.subr.bf16.mxu0 0
      %1570 = vmatpush1.bf16.msra.mxu0 0
      %1571 = vmatprep.subr.bf16.mxu0 0
      %1572 = vmatpush1.bf16.msra.mxu0 0
      %1573 = vmatprep.subr.bf16.mxu0 0
      %1574 = vmatpush1.bf16.msra.mxu0 0
      %1575 = vmatprep.subr.bf16.mxu0 0
      %1576 = vmatpush1.bf16.msra.mxu0 0
      %1577 = vmatprep.subr.bf16.mxu0 0
      %1578 = vmatpush1.bf16.msra.mxu0 0
      %1579 = vmatprep.subr.bf16.mxu0 0
      %1580 = vmatpush1.bf16.msra.mxu0 0
      %1581 = vmatprep.mubr.bf16.mxu0 0
      %1582 = vmatmul.mubr.bf16.gmra.mrb[0].mxu0 %v1490
      %v1583 = vpop.f32.mrb[0].mxu0
      %v1584 = vadd.f32 0.0, %v1583
      %v1585 = vpop.f32.mrb[0].mxu0
      %v1586 = vpop.f32.mrb[0].mxu0
      %v1587 = vadd.f32 0.0, %v1586
      %v1588 = vpop.f32.mrb[0].mxu0
      %1589 = vmatprep.mubr.bf16.mxu0 0
      %1590 = vmatmul.mubr.bf16.gmra.mrb[0].mxu0 %v1492
      %v1591 = vpop.f32.mrb[0].mxu0
      %v1592 = vadd.f32 0.0, %v1591
      %v1593 = vpop.f32.mrb[0].mxu0
      %v1594 = vpop.f32.mrb[0].mxu0
      %v1595 = vadd.f32 0.0, %v1594
      %v1596 = vpop.f32.mrb[0].mxu0
      %1597 = vmatprep.mubr.bf16.mxu0 0
      %1598 = vmatmul.mubr.bf16.gmra.mrb[0].mxu0 %v1494
      %v1599 = vpop.f32.mrb[0].mxu0
      %v1600 = vadd.f32 0.0, %v1599
      %v1601 = vpop.f32.mrb[0].mxu0
      %v1602 = vpop.f32.mrb[0].mxu0
      %v1603 = vadd.f32 0.0, %v1602
      %v1604 = vpop.f32.mrb[0].mxu0
      %1605 = vmatprep.mubr.bf16.mxu0 0
      %1606 = vmatmul.mubr.bf16.gmra.mrb[0].mxu0 %v1496
      %v1607 = vpop.f32.mrb[0].mxu0
      %v1608 = vadd.f32 0.0, %v1607
      %v1609 = vpop.f32.mrb[0].mxu0
      %v1610 = vpop.f32.mrb[0].mxu0
      %v1611 = vadd.f32 0.0, %v1610
      %v1612 = vpop.f32.mrb[0].mxu0
      %1613 = vdwg.mxu0
      %v1614 = vadd.f32 %v1458, %v1584
      %v1615 = vadd.f32 %v1459, %v1587
      %v1616 = vadd.f32 %v1460, %v1592
      %v1617 = vadd.f32 %v1461, %v1595
      %v1618 = vadd.f32 %v1462, %v1600
      %v1619 = vadd.f32 %v1463, %v1603
      %v1620 = vadd.f32 %v1464, %v1608
      %v1621 = vadd.f32 %v1465, %v1611
      %1622 = vst [vmem:[#allocation4] sm:$0xff] %v1614
      %1623 = vst [vmem:[#allocation4 + $0x8] sm:$0xff] %v1615
      %1624 = vst [vmem:[#allocation4 + $0x10] sm:$0xff] %v1616
      %1625 = vst [vmem:[#allocation4 + $0x18] sm:$0xff] %v1617
      %1626 = vst [vmem:[#allocation4 + $0x20] sm:$0xff] %v1618
      %1627 = vst [vmem:[#allocation4 + $0x28] sm:$0xff] %v1619
      %1628 = vst [vmem:[#allocation4 + $0x30] sm:$0xff] %v1620
      %1629 = vst [vmem:[#allocation4 + $0x38] sm:$0xff] %v1621
      %v1630 = vld [vmem:[#allocation3] sm:$0xf0]
      %v1631 = vld [vmem:[#allocation3 + $0x8] sm:$0xff]
      %v1632 = vld [vmem:[#allocation3 + $0x10] sm:$0xff]
      %v1633 = vld [vmem:[#allocation3 + $0x18] sm:$0xff]
      %v1634 = vld [vmem:[#allocation3 + $0x20] sm:$0x1f]
      %1636 = vset.pattern.permute.xlu0 0
      %1637 = vperm.xlu0 %1636, %v377
      %v1638 = vpop.permute.xlu0 %1637
      %v1641 = vunpack.c.l.s4 839922192
      %v1642 = vunpack.c.0.s8 %v1641
      %v1643 = vlaneseq
      %v1644 = vshrl.u32 %v1643, 7
      %v1645 = vsub.s32 %v1642, %v1644
      %v1646 = vrot.slane %v1638, %v1645
      %1648 = vset.pattern.permute.xlu0 0
      %1649 = vperm.xlu0 %1648, %v378
      %v1650 = vpop.permute.xlu0 %1649
      %v1653 = vunpack.c.l.s4 839922192
      %v1654 = vunpack.c.0.s8 %v1653
      %v1655 = vlaneseq
      %v1656 = vshrl.u32 %v1655, 7
      %v1657 = vsub.s32 %v1654, %v1656
      %v1658 = vrot.slane %v1650, %v1657
      %1660 = vset.pattern.permute.xlu0 0
      %1661 = vperm.xlu0 %1660, %v379
      %v1662 = vpop.permute.xlu0 %1661
      %v1665 = vunpack.c.l.s4 839922192
      %v1666 = vunpack.c.0.s8 %v1665
      %v1667 = vlaneseq
      %v1668 = vshrl.u32 %v1667, 7
      %v1669 = vsub.s32 %v1666, %v1668
      %v1670 = vrot.slane %v1662, %v1669
      %1672 = vset.pattern.permute.xlu0 0
      %1673 = vperm.xlu0 %1672, %v380
      %v1674 = vpop.permute.xlu0 %1673
      %v1677 = vunpack.c.l.s4 839922192
      %v1678 = vunpack.c.0.s8 %v1677
      %v1679 = vlaneseq
      %v1680 = vshrl.u32 %v1679, 7
      %v1681 = vsub.s32 %v1678, %v1680
      %v1682 = vrot.slane %v1674, %v1681
      %1684 = vset.pattern.permute.xlu0 0
      %1685 = vperm.xlu0 %1684, %v381
      %v1686 = vpop.permute.xlu0 %1685
      %v1689 = vunpack.c.l.s4 839922192
      %v1690 = vunpack.c.0.s8 %v1689
      %v1691 = vlaneseq
      %v1692 = vshrl.u32 %v1691, 7
      %v1693 = vsub.s32 %v1690, %v1692
      %v1694 = vrot.slane %v1686, %v1693
      %1696 = vset.pattern.permute.xlu0 0
      %1697 = vperm.xlu0 %1696, %v382
      %v1698 = vpop.permute.xlu0 %1697
      %v1701 = vunpack.c.l.s4 839922192
      %v1702 = vunpack.c.0.s8 %v1701
      %v1703 = vlaneseq
      %v1704 = vshrl.u32 %v1703, 7
      %v1705 = vsub.s32 %v1702, %v1704
      %v1706 = vrot.slane %v1698, %v1705
      %1708 = vset.pattern.permute.xlu0 0
      %1709 = vperm.xlu0 %1708, %v383
      %v1710 = vpop.permute.xlu0 %1709
      %v1713 = vunpack.c.l.s4 839922192
      %v1714 = vunpack.c.0.s8 %v1713
      %v1715 = vlaneseq
      %v1716 = vshrl.u32 %v1715, 7
      %v1717 = vsub.s32 %v1714, %v1716
      %v1718 = vrot.slane %v1710, %v1717
      %1720 = vset.pattern.permute.xlu0 0
      %1721 = vperm.xlu0 %1720, %v384
      %v1722 = vpop.permute.xlu0 %1721
      %v1725 = vunpack.c.l.s4 839922192
      %v1726 = vunpack.c.0.s8 %v1725
      %v1727 = vlaneseq
      %v1728 = vshrl.u32 %v1727, 7
      %v1729 = vsub.s32 %v1726, %v1728
      %v1730 = vrot.slane %v1722, %v1729
      %v1739 = vunpack.c.l.b16 %v1646
      %v1740 = vunpack.c.l.b16 %v1658
      %v1741 = vunpack.c.l.b16 %v1670
      %v1742 = vunpack.c.l.b16 %v1682
      %v1743 = vunpack.c.l.b16 %v1694
      %v1744 = vunpack.c.l.b16 %v1706
      %v1745 = vunpack.c.l.b16 %v1718
      %v1746 = vunpack.c.l.b16 %v1730
      %v1747 = vpack.c.b16 %v1740, %v1739
      %v1748 = vpack.c.b16 %v1742, %v1741
      %v1749 = vpack.c.b16 %v1744, %v1743
      %v1750 = vpack.c.b16 %v1746, %v1745
      %v1752 = vshrl.u32 %v1747, 16
      %v1754 = vrot.slane %v1752, 3
      %v1755 = vshll.u32 %v1747, 16
      %v1757 = vrot.slane %v1755, 4
      %v1758 = vor.u32 %v1754, %v1757
      %v1760 = vshrl.u32 %v1748, 16
      %v1762 = vrot.slane %v1760, 3
      %v1763 = vshll.u32 %v1748, 16
      %v1765 = vrot.slane %v1763, 4
      %v1766 = vor.u32 %v1762, %v1765
      %v1767 = vsel %vm612, %v1758, %v1766
      %v1769 = vshrl.u32 %v1749, 16
      %v1771 = vrot.slane %v1769, 3
      %v1772 = vshll.u32 %v1749, 16
      %v1774 = vrot.slane %v1772, 4
      %v1775 = vor.u32 %v1771, %v1774
      %v1776 = vsel %vm612, %v1766, %v1775
      %v1778 = vshrl.u32 %v1750, 16
      %v1780 = vrot.slane %v1778, 3
      %v1781 = vshll.u32 %v1750, 16
      %v1783 = vrot.slane %v1781, 4
      %v1784 = vor.u32 %v1780, %v1783
      %v1785 = vsel %vm612, %v1775, %v1784
      %v1791 = vmul.bf16 %v1630, %v1758
      %v1792 = vmul.bf16 %v1631, %v1767
      %v1793 = vmul.bf16 %v1632, %v1776
      %v1794 = vmul.bf16 %v1633, %v1785
      %v1795 = vmul.bf16 %v1634, %v1784
      %v1796 = vld [vmem:[#allocation4] sm:$0xff]
      %v1797 = vld [vmem:[#allocation4 + $0x8] sm:$0xff]
      %v1798 = vld [vmem:[#allocation4 + $0x10] sm:$0xff]
      %v1799 = vld [vmem:[#allocation4 + $0x18] sm:$0xff]
      %v1800 = vld [vmem:[#allocation4 + $0x20] sm:$0xff]
      %v1801 = vld [vmem:[#allocation4 + $0x28] sm:$0xff]
      %v1802 = vld [vmem:[#allocation4 + $0x30] sm:$0xff]
      %v1803 = vld [vmem:[#allocation4 + $0x38] sm:$0xff]
      %s1804 = scalar_lea.vmem %s4, 128
      %v1805 = vld [vmem:[%s1804] sm:$0xf]
      %v1806 = vld [vmem:[%s1804 + $0x4] sm:$0xf]
      %v1807 = vld [vmem:[%s1804 + $0x8] sm:$0xf]
      %v1808 = vld [vmem:[%s1804 + $0xc] sm:$0xf]
      %v1809 = vld [vmem:[%s1804 + $0x10] sm:$0xf]
      %v1810 = vld [vmem:[%s1804 + $0x14] sm:$0xf]
      %v1811 = vld [vmem:[%s1804 + $0x18] sm:$0xf]
      %v1812 = vld [vmem:[%s1804 + $0x1c] sm:$0xf]
      %v1813 = vld [vmem:[%s1804 + $0x20] sm:$0xf]
      %v1814 = vld [vmem:[%s1804 + $0x24] sm:$0xf]
      %v1815 = vld [vmem:[%s1804 + $0x28] sm:$0xf]
      %v1816 = vld [vmem:[%s1804 + $0x2c] sm:$0xf]
      %v1817 = vld [vmem:[%s1804 + $0x30] sm:$0xf]
      %v1818 = vld [vmem:[%s1804 + $0x34] sm:$0xf]
      %v1819 = vld [vmem:[%s1804 + $0x38] sm:$0xf]
      %v1820 = vld [vmem:[%s1804 + $0x3c] sm:$0xf]
      %v1822 = vshrl.u32 %v1791, 16
      %v1824 = vrot.slane %v1822, 4
      %v1825 = vshll.u32 %v1791, 16
      %v1827 = vrot.slane %v1825, 5
      %v1828 = vor.u32 %v1824, %v1827
      %v1830 = vshrl.u32 %v1792, 16
      %v1832 = vrot.slane %v1830, 4
      %v1833 = vshll.u32 %v1792, 16
      %v1835 = vrot.slane %v1833, 5
      %v1836 = vor.u32 %v1832, %v1835
      %v1837 = vsel %vm556, %v1828, %v1836
      %v1839 = vshrl.u32 %v1793, 16
      %v1841 = vrot.slane %v1839, 4
      %v1842 = vshll.u32 %v1793, 16
      %v1844 = vrot.slane %v1842, 5
      %v1845 = vor.u32 %v1841, %v1844
      %v1846 = vsel %vm556, %v1836, %v1845
      %v1848 = vshrl.u32 %v1794, 16
      %v1850 = vrot.slane %v1848, 4
      %v1851 = vshll.u32 %v1794, 16
      %v1853 = vrot.slane %v1851, 5
      %v1854 = vor.u32 %v1850, %v1853
      %v1855 = vsel %vm556, %v1845, %v1854
      %v1857 = vshrl.u32 %v1795, 16
      %v1859 = vrot.slane %v1857, 4
      %v1860 = vshll.u32 %v1795, 16
      %v1862 = vrot.slane %v1860, 5
      %v1863 = vor.u32 %v1859, %v1862
      %v1864 = vsel %vm556, %v1854, %v1863
      %v1885 = vunpack.c.l.b16 %v1805
      %v1886 = vunpack.c.l.b16 %v1806
      %v1887 = vunpack.c.l.b16 %v1807
      %v1888 = vunpack.c.l.b16 %v1808
      %v1889 = vunpack.c.l.b16 %v1809
      %v1890 = vunpack.c.l.b16 %v1810
      %v1891 = vunpack.c.l.b16 %v1811
      %v1892 = vunpack.c.l.b16 %v1812
      %v1893 = vunpack.c.l.b16 %v1813
      %v1894 = vunpack.c.l.b16 %v1814
      %v1895 = vunpack.c.l.b16 %v1815
      %v1896 = vunpack.c.l.b16 %v1816
      %v1897 = vunpack.c.l.b16 %v1817
      %v1898 = vunpack.c.l.b16 %v1818
      %v1899 = vunpack.c.l.b16 %v1819
      %v1900 = vunpack.c.l.b16 %v1820
      %v1901 = vpack.c.b16 %v1886, %v1885
      %v1902 = vpack.c.b16 %v1888, %v1887
      %v1903 = vpack.c.b16 %v1890, %v1889
      %v1904 = vpack.c.b16 %v1892, %v1891
      %v1905 = vpack.c.b16 %v1894, %v1893
      %v1906 = vpack.c.b16 %v1896, %v1895
      %v1907 = vpack.c.b16 %v1898, %v1897
      %v1908 = vpack.c.b16 %v1900, %v1899
      %1917 = vmatprep.subr.bf16.mxu0 0
      %1918 = vmatpush1.bf16.msra.mxu0 %v1901
      %1919 = vmatprep.subr.bf16.mxu0 0
      %1920 = vmatpush1.bf16.msra.mxu0 %v1902
      %1921 = vmatprep.subr.bf16.mxu0 0
      %1922 = vmatpush1.bf16.msra.mxu0 %v1903
      %1923 = vmatprep.subr.bf16.mxu0 0
      %1924 = vmatpush1.bf16.msra.mxu0 %v1904
      %1925 = vmatprep.subr.bf16.mxu0 0
      %1926 = vmatpush1.bf16.msra.mxu0 %v1905
      %1927 = vmatprep.subr.bf16.mxu0 0
      %1928 = vmatpush1.bf16.msra.mxu0 %v1906
      %1929 = vmatprep.subr.bf16.mxu0 0
      %1930 = vmatpush1.bf16.msra.mxu0 %v1907
      %1931 = vmatprep.subr.bf16.mxu0 0
      %1932 = vmatpush1.bf16.msra.mxu0 %v1908
      %1933 = vmatprep.subr.bf16.mxu0 0
      %1934 = vmatpush1.bf16.msra.mxu0 0
      %1935 = vmatprep.subr.bf16.mxu0 0
      %1936 = vmatpush1.bf16.msra.mxu0 0
      %1937 = vmatprep.subr.bf16.mxu0 0
      %1938 = vmatpush1.bf16.msra.mxu0 0
      %1939 = vmatprep.subr.bf16.mxu0 0
      %1940 = vmatpush1.bf16.msra.mxu0 0
      %1941 = vmatprep.subr.bf16.mxu0 0
      %1942 = vmatpush1.bf16.msra.mxu0 0
      %1943 = vmatprep.subr.bf16.mxu0 0
      %1944 = vmatpush1.bf16.msra.mxu0 0
      %1945 = vmatprep.subr.bf16.mxu0 0
      %1946 = vmatpush1.bf16.msra.mxu0 0
      %1947 = vmatprep.subr.bf16.mxu0 0
      %1948 = vmatpush1.bf16.msra.mxu0 0
      %1949 = vmatprep.mubr.bf16.mxu0 0
      %1950 = vmatmul.mubr.bf16.gmra.mrb[0].mxu0 %v1837
      %v1951 = vpop.f32.mrb[0].mxu0
      %v1952 = vadd.f32 0.0, %v1951
      %v1953 = vpop.f32.mrb[0].mxu0
      %v1954 = vpop.f32.mrb[0].mxu0
      %v1955 = vadd.f32 0.0, %v1954
      %v1956 = vpop.f32.mrb[0].mxu0
      %1957 = vmatprep.mubr.bf16.mxu0 0
      %1958 = vmatmul.mubr.bf16.gmra.mrb[0].mxu0 %v1846
      %v1959 = vpop.f32.mrb[0].mxu0
      %v1960 = vadd.f32 0.0, %v1959
      %v1961 = vpop.f32.mrb[0].mxu0
      %v1962 = vpop.f32.mrb[0].mxu0
      %v1963 = vadd.f32 0.0, %v1962
      %v1964 = vpop.f32.mrb[0].mxu0
      %1965 = vmatprep.mubr.bf16.mxu0 0
      %1966 = vmatmul.mubr.bf16.gmra.mrb[0].mxu0 %v1855
      %v1967 = vpop.f32.mrb[0].mxu0
      %v1968 = vadd.f32 0.0, %v1967
      %v1969 = vpop.f32.mrb[0].mxu0
      %v1970 = vpop.f32.mrb[0].mxu0
      %v1971 = vadd.f32 0.0, %v1970
      %v1972 = vpop.f32.mrb[0].mxu0
      %1973 = vmatprep.mubr.bf16.mxu0 0
      %1974 = vmatmul.mubr.bf16.gmra.mrb[0].mxu0 %v1864
      %v1975 = vpop.f32.mrb[0].mxu0
      %v1976 = vadd.f32 0.0, %v1975
      %v1977 = vpop.f32.mrb[0].mxu0
      %v1978 = vpop.f32.mrb[0].mxu0
      %v1979 = vadd.f32 0.0, %v1978
      %v1980 = vpop.f32.mrb[0].mxu0
      %1981 = vdwg.mxu0
      %v1982 = vadd.f32 %v1796, %v1952
      %v1983 = vadd.f32 %v1797, %v1955
      %v1984 = vadd.f32 %v1798, %v1960
      %v1985 = vadd.f32 %v1799, %v1963
      %v1986 = vadd.f32 %v1800, %v1968
      %v1987 = vadd.f32 %v1801, %v1971
      %v1988 = vadd.f32 %v1802, %v1976
      %v1989 = vadd.f32 %v1803, %v1979
      %1990 = vst [vmem:[#allocation4] sm:$0xff] %v1982
      %1991 = vst [vmem:[#allocation4 + $0x8] sm:$0xff] %v1983
      %1992 = vst [vmem:[#allocation4 + $0x10] sm:$0xff] %v1984
      %1993 = vst [vmem:[#allocation4 + $0x18] sm:$0xff] %v1985
      %1994 = vst [vmem:[#allocation4 + $0x20] sm:$0xff] %v1986
      %1995 = vst [vmem:[#allocation4 + $0x28] sm:$0xff] %v1987
      %1996 = vst [vmem:[#allocation4 + $0x30] sm:$0xff] %v1988
      %1997 = vst [vmem:[#allocation4 + $0x38] sm:$0xff] %v1989
      %v1998 = vld [vmem:[#allocation3] sm:$0x80]
      %v1999 = vld [vmem:[#allocation3 + $0x8] sm:$0xff]
      %v2000 = vld [vmem:[#allocation3 + $0x10] sm:$0xff]
      %v2001 = vld [vmem:[#allocation3 + $0x18] sm:$0xff]
      %v2002 = vld [vmem:[#allocation3 + $0x20] sm:$0xff]
      %v2003 = vmul.bf16 %v1998, %v892
      %v2004 = vmul.bf16 %v1999, %v895
      %v2005 = vmul.bf16 %v2000, %v898
      %v2006 = vmul.bf16 %v2001, %v901
      %v2007 = vmul.bf16 %v2002, %v902
      %v2008 = vld [vmem:[#allocation4] sm:$0xff]
      %v2009 = vld [vmem:[#allocation4 + $0x8] sm:$0xff]
      %v2010 = vld [vmem:[#allocation4 + $0x10] sm:$0xff]
      %v2011 = vld [vmem:[#allocation4 + $0x18] sm:$0xff]
      %v2012 = vld [vmem:[#allocation4 + $0x20] sm:$0xff]
      %v2013 = vld [vmem:[#allocation4 + $0x28] sm:$0xff]
      %v2014 = vld [vmem:[#allocation4 + $0x30] sm:$0xff]
      %v2015 = vld [vmem:[#allocation4 + $0x38] sm:$0xff]
      %s2016 = scalar_lea.vmem %s4, 192
      %v2017 = vld [vmem:[%s2016] sm:$0xf]
      %v2018 = vld [vmem:[%s2016 + $0x4] sm:$0xf]
      %v2019 = vld [vmem:[%s2016 + $0x8] sm:$0xf]
      %v2020 = vld [vmem:[%s2016 + $0xc] sm:$0xf]
      %v2021 = vld [vmem:[%s2016 + $0x10] sm:$0xf]
      %v2022 = vld [vmem:[%s2016 + $0x14] sm:$0xf]
      %v2023 = vld [vmem:[%s2016 + $0x18] sm:$0xf]
      %v2024 = vld [vmem:[%s2016 + $0x1c] sm:$0xf]
      %v2025 = vld [vmem:[%s2016 + $0x20] sm:$0xf]
      %v2026 = vld [vmem:[%s2016 + $0x24] sm:$0xf]
      %v2027 = vld [vmem:[%s2016 + $0x28] sm:$0xf]
      %v2028 = vld [vmem:[%s2016 + $0x2c] sm:$0xf]
      %v2029 = vld [vmem:[%s2016 + $0x30] sm:$0xf]
      %v2030 = vld [vmem:[%s2016 + $0x34] sm:$0xf]
      %v2031 = vld [vmem:[%s2016 + $0x38] sm:$0xf]
      %v2032 = vld [vmem:[%s2016 + $0x3c] sm:$0xf]
      %v2034 = vshrl.u32 %v2003, 16
      %v2036 = vrot.slane %v2034, 7
      %v2038 = vshrl.u32 %v2004, 16
      %v2040 = vrot.slane %v2038, 7
      %v2041 = vshll.u32 %v2004, 16
      %v2043 = vor.u32 %v2040, %v2041
      %v2044 = vsel %vm924, %v2036, %v2043
      %v2046 = vshrl.u32 %v2005, 16
      %v2048 = vrot.slane %v2046, 7
      %v2049 = vshll.u32 %v2005, 16
      %v2051 = vor.u32 %v2048, %v2049
      %v2052 = vsel %vm924, %v2040, %v2051
      %v2054 = vshrl.u32 %v2006, 16
      %v2056 = vrot.slane %v2054, 7
      %v2057 = vshll.u32 %v2006, 16
      %v2059 = vor.u32 %v2056, %v2057
      %v2060 = vsel %vm924, %v2048, %v2059
      %v2062 = vshrl.u32 %v2007, 16
      %v2064 = vrot.slane %v2062, 7
      %v2065 = vshll.u32 %v2007, 16
      %v2067 = vor.u32 %v2064, %v2065
      %v2068 = vsel %vm924, %v2056, %v2067
      %v2089 = vunpack.c.l.b16 %v2017
      %v2090 = vunpack.c.l.b16 %v2018
      %v2091 = vunpack.c.l.b16 %v2019
      %v2092 = vunpack.c.l.b16 %v2020
      %v2093 = vunpack.c.l.b16 %v2021
      %v2094 = vunpack.c.l.b16 %v2022
      %v2095 = vunpack.c.l.b16 %v2023
      %v2096 = vunpack.c.l.b16 %v2024
      %v2097 = vunpack.c.l.b16 %v2025
      %v2098 = vunpack.c.l.b16 %v2026
      %v2099 = vunpack.c.l.b16 %v2027
      %v2100 = vunpack.c.l.b16 %v2028
      %v2101 = vunpack.c.l.b16 %v2029
      %v2102 = vunpack.c.l.b16 %v2030
      %v2103 = vunpack.c.l.b16 %v2031
      %v2104 = vunpack.c.l.b16 %v2032
      %v2105 = vpack.c.b16 %v2090, %v2089
      %v2106 = vpack.c.b16 %v2092, %v2091
      %v2107 = vpack.c.b16 %v2094, %v2093
      %v2108 = vpack.c.b16 %v2096, %v2095
      %v2109 = vpack.c.b16 %v2098, %v2097
      %v2110 = vpack.c.b16 %v2100, %v2099
      %v2111 = vpack.c.b16 %v2102, %v2101
      %v2112 = vpack.c.b16 %v2104, %v2103
      %2121 = vmatprep.subr.bf16.mxu0 0
      %2122 = vmatpush1.bf16.msra.mxu0 %v2105
      %2123 = vmatprep.subr.bf16.mxu0 0
      %2124 = vmatpush1.bf16.msra.mxu0 %v2106
      %2125 = vmatprep.subr.bf16.mxu0 0
      %2126 = vmatpush1.bf16.msra.mxu0 %v2107
      %2127 = vmatprep.subr.bf16.mxu0 0
      %2128 = vmatpush1.bf16.msra.mxu0 %v2108
      %2129 = vmatprep.subr.bf16.mxu0 0
      %2130 = vmatpush1.bf16.msra.mxu0 %v2109
      %2131 = vmatprep.subr.bf16.mxu0 0
      %2132 = vmatpush1.bf16.msra.mxu0 %v2110
      %2133 = vmatprep.subr.bf16.mxu0 0
      %2134 = vmatpush1.bf16.msra.mxu0 %v2111
      %2135 = vmatprep.subr.bf16.mxu0 0
      %2136 = vmatpush1.bf16.msra.mxu0 %v2112
      %2137 = vmatprep.subr.bf16.mxu0 0
      %2138 = vmatpush1.bf16.msra.mxu0 0
      %2139 = vmatprep.subr.bf16.mxu0 0
      %2140 = vmatpush1.bf16.msra.mxu0 0
      %2141 = vmatprep.subr.bf16.mxu0 0
      %2142 = vmatpush1.bf16.msra.mxu0 0
      %2143 = vmatprep.subr.bf16.mxu0 0
      %2144 = vmatpush1.bf16.msra.mxu0 0
      %2145 = vmatprep.subr.bf16.mxu0 0
      %2146 = vmatpush1.bf16.msra.mxu0 0
      %2147 = vmatprep.subr.bf16.mxu0 0
      %2148 = vmatpush1.bf16.msra.mxu0 0
      %2149 = vmatprep.subr.bf16.mxu0 0
      %2150 = vmatpush1.bf16.msra.mxu0 0
      %2151 = vmatprep.subr.bf16.mxu0 0
      %2152 = vmatpush1.bf16.msra.mxu0 0
      %2153 = vmatprep.mubr.bf16.mxu0 0
      %2154 = vmatmul.mubr.bf16.gmra.mrb[0].mxu0 %v2044
      %v2155 = vpop.f32.mrb[0].mxu0
      %v2156 = vadd.f32 0.0, %v2155
      %v2157 = vpop.f32.mrb[0].mxu0
      %v2158 = vpop.f32.mrb[0].mxu0
      %v2159 = vadd.f32 0.0, %v2158
      %v2160 = vpop.f32.mrb[0].mxu0
      %2161 = vmatprep.mubr.bf16.mxu0 0
      %2162 = vmatmul.mubr.bf16.gmra.mrb[0].mxu0 %v2052
      %v2163 = vpop.f32.mrb[0].mxu0
      %v2164 = vadd.f32 0.0, %v2163
      %v2165 = vpop.f32.mrb[0].mxu0
      %v2166 = vpop.f32.mrb[0].mxu0
      %v2167 = vadd.f32 0.0, %v2166
      %v2168 = vpop.f32.mrb[0].mxu0
      %2169 = vmatprep.mubr.bf16.mxu0 0
      %2170 = vmatmul.mubr.bf16.gmra.mrb[0].mxu0 %v2060
      %v2171 = vpop.f32.mrb[0].mxu0
      %v2172 = vadd.f32 0.0, %v2171
      %v2173 = vpop.f32.mrb[0].mxu0
      %v2174 = vpop.f32.mrb[0].mxu0
      %v2175 = vadd.f32 0.0, %v2174
      %v2176 = vpop.f32.mrb[0].mxu0
      %2177 = vmatprep.mubr.bf16.mxu0 0
      %2178 = vmatmul.mubr.bf16.gmra.mrb[0].mxu0 %v2068
      %v2179 = vpop.f32.mrb[0].mxu0
      %v2180 = vadd.f32 0.0, %v2179
      %v2181 = vpop.f32.mrb[0].mxu0
      %v2182 = vpop.f32.mrb[0].mxu0
      %v2183 = vadd.f32 0.0, %v2182
      %v2184 = vpop.f32.mrb[0].mxu0
      %2185 = vdwg.mxu0
      %v2186 = vadd.f32 %v2008, %v2156
      %v2187 = vadd.f32 %v2009, %v2159
      %v2188 = vadd.f32 %v2010, %v2164
      %v2189 = vadd.f32 %v2011, %v2167
      %v2190 = vadd.f32 %v2012, %v2172
      %v2191 = vadd.f32 %v2013, %v2175
      %v2192 = vadd.f32 %v2014, %v2180
      %v2193 = vadd.f32 %v2015, %v2183
      %2194 = vst [vmem:[#allocation4] sm:$0xff] %v2186
      %2195 = vst [vmem:[#allocation4 + $0x8] sm:$0xff] %v2187
      %2196 = vst [vmem:[#allocation4 + $0x10] sm:$0xff] %v2188
      %2197 = vst [vmem:[#allocation4 + $0x18] sm:$0xff] %v2189
      %2198 = vst [vmem:[#allocation4 + $0x20] sm:$0xff] %v2190
      %2199 = vst [vmem:[#allocation4 + $0x28] sm:$0xff] %v2191
      %2200 = vst [vmem:[#allocation4 + $0x30] sm:$0xff] %v2192
      %2201 = vst [vmem:[#allocation4 + $0x38] sm:$0xff] %v2193
      %v2202 = vld [vmem:[#allocation3 + $0x8] sm:$0xff]
      %v2203 = vld [vmem:[#allocation3 + $0x10] sm:$0xff]
      %v2204 = vld [vmem:[#allocation3 + $0x18] sm:$0xff]
      %v2205 = vld [vmem:[#allocation3 + $0x20] sm:$0xff]
      %v2206 = vld [vmem:[#allocation4] sm:$0xff]
      %v2207 = vld [vmem:[#allocation4 + $0x8] sm:$0xff]
      %v2208 = vld [vmem:[#allocation4 + $0x10] sm:$0xff]
      %v2209 = vld [vmem:[#allocation4 + $0x18] sm:$0xff]
      %v2210 = vld [vmem:[#allocation4 + $0x20] sm:$0xff]
      %v2211 = vld [vmem:[#allocation4 + $0x28] sm:$0xff]
      %v2212 = vld [vmem:[#allocation4 + $0x30] sm:$0xff]
      %v2213 = vld [vmem:[#allocation4 + $0x38] sm:$0xff]
      %s2214 = scalar_lea.vmem %s4, 256
      %v2215 = vld [vmem:[%s2214] sm:$0xf]
      %v2216 = vld [vmem:[%s2214 + $0x4] sm:$0xf]
      %v2217 = vld [vmem:[%s2214 + $0x8] sm:$0xf]
      %v2218 = vld [vmem:[%s2214 + $0xc] sm:$0xf]
      %v2219 = vld [vmem:[%s2214 + $0x10] sm:$0xf]
      %v2220 = vld [vmem:[%s2214 + $0x14] sm:$0xf]
      %v2221 = vld [vmem:[%s2214 + $0x18] sm:$0xf]
      %v2222 = vld [vmem:[%s2214 + $0x1c] sm:$0xf]
      %v2223 = vld [vmem:[%s2214 + $0x20] sm:$0xf]
      %v2224 = vld [vmem:[%s2214 + $0x24] sm:$0xf]
      %v2225 = vld [vmem:[%s2214 + $0x28] sm:$0xf]
      %v2226 = vld [vmem:[%s2214 + $0x2c] sm:$0xf]
      %v2227 = vld [vmem:[%s2214 + $0x30] sm:$0xf]
      %v2228 = vld [vmem:[%s2214 + $0x34] sm:$0xf]
      %v2229 = vld [vmem:[%s2214 + $0x38] sm:$0xf]
      %v2230 = vld [vmem:[%s2214 + $0x3c] sm:$0xf]
      %v2247 = vunpack.c.l.b16 %v2215
      %v2248 = vunpack.c.l.b16 %v2216
      %v2249 = vunpack.c.l.b16 %v2217
      %v2250 = vunpack.c.l.b16 %v2218
      %v2251 = vunpack.c.l.b16 %v2219
      %v2252 = vunpack.c.l.b16 %v2220
      %v2253 = vunpack.c.l.b16 %v2221
      %v2254 = vunpack.c.l.b16 %v2222
      %v2255 = vunpack.c.l.b16 %v2223
      %v2256 = vunpack.c.l.b16 %v2224
      %v2257 = vunpack.c.l.b16 %v2225
      %v2258 = vunpack.c.l.b16 %v2226
      %v2259 = vunpack.c.l.b16 %v2227
      %v2260 = vunpack.c.l.b16 %v2228
      %v2261 = vunpack.c.l.b16 %v2229
      %v2262 = vunpack.c.l.b16 %v2230
      %v2263 = vpack.c.b16 %v2248, %v2247
      %v2264 = vpack.c.b16 %v2250, %v2249
      %v2265 = vpack.c.b16 %v2252, %v2251
      %v2266 = vpack.c.b16 %v2254, %v2253
      %v2267 = vpack.c.b16 %v2256, %v2255
      %v2268 = vpack.c.b16 %v2258, %v2257
      %v2269 = vpack.c.b16 %v2260, %v2259
      %v2270 = vpack.c.b16 %v2262, %v2261
      %2279 = vmatprep.subr.bf16.mxu0 0
      %2280 = vmatpush1.bf16.msra.mxu0 %v2263
      %2281 = vmatprep.subr.bf16.mxu0 0
      %2282 = vmatpush1.bf16.msra.mxu0 %v2264
      %2283 = vmatprep.subr.bf16.mxu0 0
      %2284 = vmatpush1.bf16.msra.mxu0 %v2265
      %2285 = vmatprep.subr.bf16.mxu0 0
      %2286 = vmatpush1.bf16.msra.mxu0 %v2266
      %2287 = vmatprep.subr.bf16.mxu0 0
      %2288 = vmatpush1.bf16.msra.mxu0 %v2267
      %2289 = vmatprep.subr.bf16.mxu0 0
      %2290 = vmatpush1.bf16.msra.mxu0 %v2268
      %2291 = vmatprep.subr.bf16.mxu0 0
      %2292 = vmatpush1.bf16.msra.mxu0 %v2269
      %2293 = vmatprep.subr.bf16.mxu0 0
      %2294 = vmatpush1.bf16.msra.mxu0 %v2270
      %2295 = vmatprep.subr.bf16.mxu0 0
      %2296 = vmatpush1.bf16.msra.mxu0 0
      %2297 = vmatprep.subr.bf16.mxu0 0
      %2298 = vmatpush1.bf16.msra.mxu0 0
      %2299 = vmatprep.subr.bf16.mxu0 0
      %2300 = vmatpush1.bf16.msra.mxu0 0
      %2301 = vmatprep.subr.bf16.mxu0 0
      %2302 = vmatpush1.bf16.msra.mxu0 0
      %2303 = vmatprep.subr.bf16.mxu0 0
      %2304 = vmatpush1.bf16.msra.mxu0 0
      %2305 = vmatprep.subr.bf16.mxu0 0
      %2306 = vmatpush1.bf16.msra.mxu0 0
      %2307 = vmatprep.subr.bf16.mxu0 0
      %2308 = vmatpush1.bf16.msra.mxu0 0
      %2309 = vmatprep.subr.bf16.mxu0 0
      %2310 = vmatpush1.bf16.msra.mxu0 0
      %2311 = vmatprep.mubr.bf16.mxu0 0
      %2312 = vmatmul.mubr.bf16.gmra.mrb[0].mxu0 %v2202
      %v2313 = vpop.f32.mrb[0].mxu0
      %v2314 = vadd.f32 0.0, %v2313
      %v2315 = vpop.f32.mrb[0].mxu0
      %v2316 = vpop.f32.mrb[0].mxu0
      %v2317 = vadd.f32 0.0, %v2316
      %v2318 = vpop.f32.mrb[0].mxu0
      %2319 = vmatprep.mubr.bf16.mxu0 0
      %2320 = vmatmul.mubr.bf16.gmra.mrb[0].mxu0 %v2203
      %v2321 = vpop.f32.mrb[0].mxu0
      %v2322 = vadd.f32 0.0, %v2321
      %v2323 = vpop.f32.mrb[0].mxu0
      %v2324 = vpop.f32.mrb[0].mxu0
      %v2325 = vadd.f32 0.0, %v2324
      %v2326 = vpop.f32.mrb[0].mxu0
      %2327 = vmatprep.mubr.bf16.mxu0 0
      %2328 = vmatmul.mubr.bf16.gmra.mrb[0].mxu0 %v2204
      %v2329 = vpop.f32.mrb[0].mxu0
      %v2330 = vadd.f32 0.0, %v2329
      %v2331 = vpop.f32.mrb[0].mxu0
      %v2332 = vpop.f32.mrb[0].mxu0
      %v2333 = vadd.f32 0.0, %v2332
      %v2334 = vpop.f32.mrb[0].mxu0
      %2335 = vmatprep.mubr.bf16.mxu0 0
      %2336 = vmatmul.mubr.bf16.gmra.mrb[0].mxu0 %v2205
      %v2337 = vpop.f32.mrb[0].mxu0
      %v2338 = vadd.f32 0.0, %v2337
      %v2339 = vpop.f32.mrb[0].mxu0
      %v2340 = vpop.f32.mrb[0].mxu0
      %v2341 = vadd.f32 0.0, %v2340
      %v2342 = vpop.f32.mrb[0].mxu0
      %2343 = vdwg.mxu0
      %v2344 = vadd.f32 %v2206, %v2314
      %v2345 = vadd.f32 %v2207, %v2317
      %v2346 = vadd.f32 %v2208, %v2322
      %v2347 = vadd.f32 %v2209, %v2325
      %v2348 = vadd.f32 %v2210, %v2330
      %v2349 = vadd.f32 %v2211, %v2333
      %v2350 = vadd.f32 %v2212, %v2338
      %v2351 = vadd.f32 %v2213, %v2341
      %2352 = vst [vmem:[#allocation4] sm:$0xff] %v2344
      %2353 = vst [vmem:[#allocation4 + $0x8] sm:$0xff] %v2345
      %2354 = vst [vmem:[#allocation4 + $0x10] sm:$0xff] %v2346
      %2355 = vst [vmem:[#allocation4 + $0x18] sm:$0xff] %v2347
      %2356 = vst [vmem:[#allocation4 + $0x20] sm:$0xff] %v2348
      %2357 = vst [vmem:[#allocation4 + $0x28] sm:$0xff] %v2349
      %2358 = vst [vmem:[#allocation4 + $0x30] sm:$0xff] %v2350
      %2359 = vst [vmem:[#allocation4 + $0x38] sm:$0xff] %v2351
      %v2360 = vld [vmem:[#allocation3 + $0x8] sm:$0xff]
      %v2361 = vld [vmem:[#allocation3 + $0x10] sm:$0xff]
      %v2362 = vld [vmem:[#allocation3 + $0x18] sm:$0xff]
      %v2363 = vld [vmem:[#allocation3 + $0x20] sm:$0xff]
      %v2364 = vld [vmem:[#allocation3 + $0x28] sm:$0x1]
      %v2365 = vrot.slane %v1752, 7
      %v2366 = vor.u32 %v2365, %v1755
      %v2367 = vrot.slane %v1760, 7
      %v2368 = vor.u32 %v2367, %v1763
      %v2369 = vsel %vm924, %v2365, %v2368
      %v2370 = vrot.slane %v1769, 7
      %v2371 = vor.u32 %v2370, %v1772
      %v2372 = vsel %vm924, %v2367, %v2371
      %v2373 = vrot.slane %v1778, 7
      %v2374 = vor.u32 %v2373, %v1781
      %v2375 = vsel %vm924, %v2370, %v2374
      %v2381 = vmul.bf16 %v2360, %v2366
      %v2382 = vmul.bf16 %v2361, %v2369
      %v2383 = vmul.bf16 %v2362, %v2372
      %v2384 = vmul.bf16 %v2363, %v2375
      %v2385 = vmul.bf16 %v2364, %v2373
      %v2386 = vld [vmem:[#allocation4] sm:$0xff]
      %v2387 = vld [vmem:[#allocation4 + $0x8] sm:$0xff]
      %v2388 = vld [vmem:[#allocation4 + $0x10] sm:$0xff]
      %v2389 = vld [vmem:[#allocation4 + $0x18] sm:$0xff]
      %v2390 = vld [vmem:[#allocation4 + $0x20] sm:$0xff]
      %v2391 = vld [vmem:[#allocation4 + $0x28] sm:$0xff]
      %v2392 = vld [vmem:[#allocation4 + $0x30] sm:$0xff]
      %v2393 = vld [vmem:[#allocation4 + $0x38] sm:$0xff]
      %s2394 = scalar_lea.vmem %s4, 320
      %v2395 = vld [vmem:[%s2394] sm:$0xf]
      %v2396 = vld [vmem:[%s2394 + $0x4] sm:$0xf]
      %v2397 = vld [vmem:[%s2394 + $0x8] sm:$0xf]
      %v2398 = vld [vmem:[%s2394 + $0xc] sm:$0xf]
      %v2399 = vld [vmem:[%s2394 + $0x10] sm:$0xf]
      %v2400 = vld [vmem:[%s2394 + $0x14] sm:$0xf]
      %v2401 = vld [vmem:[%s2394 + $0x18] sm:$0xf]
      %v2402 = vld [vmem:[%s2394 + $0x1c] sm:$0xf]
      %v2403 = vld [vmem:[%s2394 + $0x20] sm:$0xf]
      %v2404 = vld [vmem:[%s2394 + $0x24] sm:$0xf]
      %v2405 = vld [vmem:[%s2394 + $0x28] sm:$0xf]
      %v2406 = vld [vmem:[%s2394 + $0x2c] sm:$0xf]
      %v2407 = vld [vmem:[%s2394 + $0x30] sm:$0xf]
      %v2408 = vld [vmem:[%s2394 + $0x34] sm:$0xf]
      %v2409 = vld [vmem:[%s2394 + $0x38] sm:$0xf]
      %v2410 = vld [vmem:[%s2394 + $0x3c] sm:$0xf]
      %v2412 = vshrl.u32 %v2381, 16
      %v2414 = vshll.u32 %v2381, 16
      %v2416 = vrot.slane %v2414, 1
      %v2417 = vor.u32 %v2412, %v2416
      %v2419 = vshll.u32 %v2382, 16
      %v2421 = vrot.slane %v2419, 1
      %v2422 = vsel %vm891, %v2417, %v2421
      %v2423 = vshrl.u32 %v2382, 16
      %v2425 = vor.u32 %v2423, %v2421
      %v2427 = vshll.u32 %v2383, 16
      %v2429 = vrot.slane %v2427, 1
      %v2430 = vsel %vm891, %v2425, %v2429
      %v2431 = vshrl.u32 %v2383, 16
      %v2433 = vor.u32 %v2431, %v2429
      %v2435 = vshll.u32 %v2384, 16
      %v2437 = vrot.slane %v2435, 1
      %v2438 = vsel %vm891, %v2433, %v2437
      %v2439 = vshrl.u32 %v2384, 16
      %v2441 = vor.u32 %v2439, %v2437
      %v2443 = vshll.u32 %v2385, 16
      %v2445 = vrot.slane %v2443, 1
      %v2446 = vsel %vm891, %v2441, %v2445
      %v2467 = vunpack.c.l.b16 %v2395
      %v2468 = vunpack.c.l.b16 %v2396
      %v2469 = vunpack.c.l.b16 %v2397
      %v2470 = vunpack.c.l.b16 %v2398
      %v2471 = vunpack.c.l.b16 %v2399
      %v2472 = vunpack.c.l.b16 %v2400
      %v2473 = vunpack.c.l.b16 %v2401
      %v2474 = vunpack.c.l.b16 %v2402
      %v2475 = vunpack.c.l.b16 %v2403
      %v2476 = vunpack.c.l.b16 %v2404
      %v2477 = vunpack.c.l.b16 %v2405
      %v2478 = vunpack.c.l.b16 %v2406
      %v2479 = vunpack.c.l.b16 %v2407
      %v2480 = vunpack.c.l.b16 %v2408
      %v2481 = vunpack.c.l.b16 %v2409
      %v2482 = vunpack.c.l.b16 %v2410
      %v2483 = vpack.c.b16 %v2468, %v2467
      %v2484 = vpack.c.b16 %v2470, %v2469
      %v2485 = vpack.c.b16 %v2472, %v2471
      %v2486 = vpack.c.b16 %v2474, %v2473
      %v2487 = vpack.c.b16 %v2476, %v2475
      %v2488 = vpack.c.b16 %v2478, %v2477
      %v2489 = vpack.c.b16 %v2480, %v2479
      %v2490 = vpack.c.b16 %v2482, %v2481
      %2499 = vmatprep.subr.bf16.mxu0 0
      %2500 = vmatpush1.bf16.msra.mxu0 %v2483
      %2501 = vmatprep.subr.bf16.mxu0 0
      %2502 = vmatpush1.bf16.msra.mxu0 %v2484
      %2503 = vmatprep.subr.bf16.mxu0 0
      %2504 = vmatpush1.bf16.msra.mxu0 %v2485
      %2505 = vmatprep.subr.bf16.mxu0 0
      %2506 = vmatpush1.bf16.msra.mxu0 %v2486
      %2507 = vmatprep.subr.bf16.mxu0 0
      %2508 = vmatpush1.bf16.msra.mxu0 %v2487
      %2509 = vmatprep.subr.bf16.mxu0 0
      %2510 = vmatpush1.bf16.msra.mxu0 %v2488
      %2511 = vmatprep.subr.bf16.mxu0 0
      %2512 = vmatpush1.bf16.msra.mxu0 %v2489
      %2513 = vmatprep.subr.bf16.mxu0 0
      %2514 = vmatpush1.bf16.msra.mxu0 %v2490
      %2515 = vmatprep.subr.bf16.mxu0 0
      %2516 = vmatpush1.bf16.msra.mxu0 0
      %2517 = vmatprep.subr.bf16.mxu0 0
      %2518 = vmatpush1.bf16.msra.mxu0 0
      %2519 = vmatprep.subr.bf16.mxu0 0
      %2520 = vmatpush1.bf16.msra.mxu0 0
      %2521 = vmatprep.subr.bf16.mxu0 0
      %2522 = vmatpush1.bf16.msra.mxu0 0
      %2523 = vmatprep.subr.bf16.mxu0 0
      %2524 = vmatpush1.bf16.msra.mxu0 0
      %2525 = vmatprep.subr.bf16.mxu0 0
      %2526 = vmatpush1.bf16.msra.mxu0 0
      %2527 = vmatprep.subr.bf16.mxu0 0
      %2528 = vmatpush1.bf16.msra.mxu0 0
      %2529 = vmatprep.subr.bf16.mxu0 0
      %2530 = vmatpush1.bf16.msra.mxu0 0
      %2531 = vmatprep.mubr.bf16.mxu0 0
      %2532 = vmatmul.mubr.bf16.gmra.mrb[0].mxu0 %v2422
      %v2533 = vpop.f32.mrb[0].mxu0
      %v2534 = vadd.f32 0.0, %v2533
      %v2535 = vpop.f32.mrb[0].mxu0
      %v2536 = vpop.f32.mrb[0].mxu0
      %v2537 = vadd.f32 0.0, %v2536
      %v2538 = vpop.f32.mrb[0].mxu0
      %2539 = vmatprep.mubr.bf16.mxu0 0
      %2540 = vmatmul.mubr.bf16.gmra.mrb[0].mxu0 %v2430
      %v2541 = vpop.f32.mrb[0].mxu0
      %v2542 = vadd.f32 0.0, %v2541
      %v2543 = vpop.f32.mrb[0].mxu0
      %v2544 = vpop.f32.mrb[0].mxu0
      %v2545 = vadd.f32 0.0, %v2544
      %v2546 = vpop.f32.mrb[0].mxu0
      %2547 = vmatprep.mubr.bf16.mxu0 0
      %2548 = vmatmul.mubr.bf16.gmra.mrb[0].mxu0 %v2438
      %v2549 = vpop.f32.mrb[0].mxu0
      %v2550 = vadd.f32 0.0, %v2549
      %v2551 = vpop.f32.mrb[0].mxu0
      %v2552 = vpop.f32.mrb[0].mxu0
      %v2553 = vadd.f32 0.0, %v2552
      %v2554 = vpop.f32.mrb[0].mxu0
      %2555 = vmatprep.mubr.bf16.mxu0 0
      %2556 = vmatmul.mubr.bf16.gmra.mrb[0].mxu0 %v2446
      %v2557 = vpop.f32.mrb[0].mxu0
      %v2558 = vadd.f32 0.0, %v2557
      %v2559 = vpop.f32.mrb[0].mxu0
      %v2560 = vpop.f32.mrb[0].mxu0
      %v2561 = vadd.f32 0.0, %v2560
      %v2562 = vpop.f32.mrb[0].mxu0
      %2563 = vdwg.mxu0
      %v2564 = vadd.f32 %v2386, %v2534
      %v2565 = vadd.f32 %v2387, %v2537
      %v2566 = vadd.f32 %v2388, %v2542
      %v2567 = vadd.f32 %v2389, %v2545
      %v2568 = vadd.f32 %v2390, %v2550
      %v2569 = vadd.f32 %v2391, %v2553
      %v2570 = vadd.f32 %v2392, %v2558
      %v2571 = vadd.f32 %v2393, %v2561
      %2572 = vst [vmem:[#allocation4] sm:$0xff] %v2564
      %2573 = vst [vmem:[#allocation4 + $0x8] sm:$0xff] %v2565
      %2574 = vst [vmem:[#allocation4 + $0x10] sm:$0xff] %v2566
      %2575 = vst [vmem:[#allocation4 + $0x18] sm:$0xff] %v2567
      %2576 = vst [vmem:[#allocation4 + $0x20] sm:$0xff] %v2568
      %2577 = vst [vmem:[#allocation4 + $0x28] sm:$0xff] %v2569
      %2578 = vst [vmem:[#allocation4 + $0x30] sm:$0xff] %v2570
      %2579 = vst [vmem:[#allocation4 + $0x38] sm:$0xff] %v2571
      %v2580 = vld [vmem:[#allocation3 + $0x8] sm:$0xf8]
      %v2581 = vld [vmem:[#allocation3 + $0x10] sm:$0xff]
      %v2582 = vld [vmem:[#allocation3 + $0x18] sm:$0xff]
      %v2583 = vld [vmem:[#allocation3 + $0x20] sm:$0xff]
      %v2584 = vld [vmem:[#allocation3 + $0x28] sm:$0xf]
      %v2585 = vmul.bf16 %v2580, %v564
      %v2586 = vmul.bf16 %v2581, %v573
      %v2587 = vmul.bf16 %v2582, %v582
      %v2588 = vmul.bf16 %v2583, %v591
      %v2589 = vmul.bf16 %v2584, %v590
      %v2590 = vld [vmem:[#allocation4] sm:$0xff]
      %v2591 = vld [vmem:[#allocation4 + $0x8] sm:$0xff]
      %v2592 = vld [vmem:[#allocation4 + $0x10] sm:$0xff]
      %v2593 = vld [vmem:[#allocation4 + $0x18] sm:$0xff]
      %v2594 = vld [vmem:[#allocation4 + $0x20] sm:$0xff]
      %v2595 = vld [vmem:[#allocation4 + $0x28] sm:$0xff]
      %v2596 = vld [vmem:[#allocation4 + $0x30] sm:$0xff]
      %v2597 = vld [vmem:[#allocation4 + $0x38] sm:$0xff]
      %s2598 = scalar_lea.vmem %s4, 384
      %v2599 = vld [vmem:[%s2598] sm:$0xf]
      %v2600 = vld [vmem:[%s2598 + $0x4] sm:$0xf]
      %v2601 = vld [vmem:[%s2598 + $0x8] sm:$0xf]
      %v2602 = vld [vmem:[%s2598 + $0xc] sm:$0xf]
      %v2603 = vld [vmem:[%s2598 + $0x10] sm:$0xf]
      %v2604 = vld [vmem:[%s2598 + $0x14] sm:$0xf]
      %v2605 = vld [vmem:[%s2598 + $0x18] sm:$0xf]
      %v2606 = vld [vmem:[%s2598 + $0x1c] sm:$0xf]
      %v2607 = vld [vmem:[%s2598 + $0x20] sm:$0xf]
      %v2608 = vld [vmem:[%s2598 + $0x24] sm:$0xf]
      %v2609 = vld [vmem:[%s2598 + $0x28] sm:$0xf]
      %v2610 = vld [vmem:[%s2598 + $0x2c] sm:$0xf]
      %v2611 = vld [vmem:[%s2598 + $0x30] sm:$0xf]
      %v2612 = vld [vmem:[%s2598 + $0x34] sm:$0xf]
      %v2613 = vld [vmem:[%s2598 + $0x38] sm:$0xf]
      %v2614 = vld [vmem:[%s2598 + $0x3c] sm:$0xf]
      %v2616 = vshrl.u32 %v2585, 16
      %v2618 = vrot.slane %v2616, 3
      %v2619 = vshll.u32 %v2585, 16
      %v2621 = vrot.slane %v2619, 4
      %v2622 = vor.u32 %v2618, %v2621
      %v2624 = vshrl.u32 %v2586, 16
      %v2626 = vrot.slane %v2624, 3
      %v2627 = vshll.u32 %v2586, 16
      %v2629 = vrot.slane %v2627, 4
      %v2630 = vor.u32 %v2626, %v2629
      %v2631 = vsel %vm612, %v2622, %v2630
      %v2633 = vshrl.u32 %v2587, 16
      %v2635 = vrot.slane %v2633, 3
      %v2636 = vshll.u32 %v2587, 16
      %v2638 = vrot.slane %v2636, 4
      %v2639 = vor.u32 %v2635, %v2638
      %v2640 = vsel %vm612, %v2630, %v2639
      %v2642 = vshrl.u32 %v2588, 16
      %v2644 = vrot.slane %v2642, 3
      %v2645 = vshll.u32 %v2588, 16
      %v2647 = vrot.slane %v2645, 4
      %v2648 = vor.u32 %v2644, %v2647
      %v2649 = vsel %vm612, %v2639, %v2648
      %v2651 = vshrl.u32 %v2589, 16
      %v2653 = vrot.slane %v2651, 3
      %v2654 = vshll.u32 %v2589, 16
      %v2656 = vrot.slane %v2654, 4
      %v2657 = vor.u32 %v2653, %v2656
      %v2658 = vsel %vm612, %v2648, %v2657
      %v2679 = vunpack.c.l.b16 %v2599
      %v2680 = vunpack.c.l.b16 %v2600
      %v2681 = vunpack.c.l.b16 %v2601
      %v2682 = vunpack.c.l.b16 %v2602
      %v2683 = vunpack.c.l.b16 %v2603
      %v2684 = vunpack.c.l.b16 %v2604
      %v2685 = vunpack.c.l.b16 %v2605
      %v2686 = vunpack.c.l.b16 %v2606
      %v2687 = vunpack.c.l.b16 %v2607
      %v2688 = vunpack.c.l.b16 %v2608
      %v2689 = vunpack.c.l.b16 %v2609
      %v2690 = vunpack.c.l.b16 %v2610
      %v2691 = vunpack.c.l.b16 %v2611
      %v2692 = vunpack.c.l.b16 %v2612
      %v2693 = vunpack.c.l.b16 %v2613
      %v2694 = vunpack.c.l.b16 %v2614
      %v2695 = vpack.c.b16 %v2680, %v2679
      %v2696 = vpack.c.b16 %v2682, %v2681
      %v2697 = vpack.c.b16 %v2684, %v2683
      %v2698 = vpack.c.b16 %v2686, %v2685
      %v2699 = vpack.c.b16 %v2688, %v2687
      %v2700 = vpack.c.b16 %v2690, %v2689
      %v2701 = vpack.c.b16 %v2692, %v2691
      %v2702 = vpack.c.b16 %v2694, %v2693
      %2711 = vmatprep.subr.bf16.mxu0 0
      %2712 = vmatpush1.bf16.msra.mxu0 %v2695
      %2713 = vmatprep.subr.bf16.mxu0 0
      %2714 = vmatpush1.bf16.msra.mxu0 %v2696
      %2715 = vmatprep.subr.bf16.mxu0 0
      %2716 = vmatpush1.bf16.msra.mxu0 %v2697
      %2717 = vmatprep.subr.bf16.mxu0 0
      %2718 = vmatpush1.bf16.msra.mxu0 %v2698
      %2719 = vmatprep.subr.bf16.mxu0 0
      %2720 = vmatpush1.bf16.msra.mxu0 %v2699
      %2721 = vmatprep.subr.bf16.mxu0 0
      %2722 = vmatpush1.bf16.msra.mxu0 %v2700
      %2723 = vmatprep.subr.bf16.mxu0 0
      %2724 = vmatpush1.bf16.msra.mxu0 %v2701
      %2725 = vmatprep.subr.bf16.mxu0 0
      %2726 = vmatpush1.bf16.msra.mxu0 %v2702
      %2727 = vmatprep.subr.bf16.mxu0 0
      %2728 = vmatpush1.bf16.msra.mxu0 0
      %2729 = vmatprep.subr.bf16.mxu0 0
      %2730 = vmatpush1.bf16.msra.mxu0 0
      %2731 = vmatprep.subr.bf16.mxu0 0
      %2732 = vmatpush1.bf16.msra.mxu0 0
      %2733 = vmatprep.subr.bf16.mxu0 0
      %2734 = vmatpush1.bf16.msra.mxu0 0
      %2735 = vmatprep.subr.bf16.mxu0 0
      %2736 = vmatpush1.bf16.msra.mxu0 0
      %2737 = vmatprep.subr.bf16.mxu0 0
      %2738 = vmatpush1.bf16.msra.mxu0 0
      %2739 = vmatprep.subr.bf16.mxu0 0
      %2740 = vmatpush1.bf16.msra.mxu0 0
      %2741 = vmatprep.subr.bf16.mxu0 0
      %2742 = vmatpush1.bf16.msra.mxu0 0
      %2743 = vmatprep.mubr.bf16.mxu0 0
      %2744 = vmatmul.mubr.bf16.gmra.mrb[0].mxu0 %v2631
      %v2745 = vpop.f32.mrb[0].mxu0
      %v2746 = vadd.f32 0.0, %v2745
      %v2747 = vpop.f32.mrb[0].mxu0
      %v2748 = vpop.f32.mrb[0].mxu0
      %v2749 = vadd.f32 0.0, %v2748
      %v2750 = vpop.f32.mrb[0].mxu0
      %2751 = vmatprep.mubr.bf16.mxu0 0
      %2752 = vmatmul.mubr.bf16.gmra.mrb[0].mxu0 %v2640
      %v2753 = vpop.f32.mrb[0].mxu0
      %v2754 = vadd.f32 0.0, %v2753
      %v2755 = vpop.f32.mrb[0].mxu0
      %v2756 = vpop.f32.mrb[0].mxu0
      %v2757 = vadd.f32 0.0, %v2756
      %v2758 = vpop.f32.mrb[0].mxu0
      %2759 = vmatprep.mubr.bf16.mxu0 0
      %2760 = vmatmul.mubr.bf16.gmra.mrb[0].mxu0 %v2649
      %v2761 = vpop.f32.mrb[0].mxu0
      %v2762 = vadd.f32 0.0, %v2761
      %v2763 = vpop.f32.mrb[0].mxu0
      %v2764 = vpop.f32.mrb[0].mxu0
      %v2765 = vadd.f32 0.0, %v2764
      %v2766 = vpop.f32.mrb[0].mxu0
      %2767 = vmatprep.mubr.bf16.mxu0 0
      %2768 = vmatmul.mubr.bf16.gmra.mrb[0].mxu0 %v2658
      %v2769 = vpop.f32.mrb[0].mxu0
      %v2770 = vadd.f32 0.0, %v2769
      %v2771 = vpop.f32.mrb[0].mxu0
      %v2772 = vpop.f32.mrb[0].mxu0
      %v2773 = vadd.f32 0.0, %v2772
      %v2774 = vpop.f32.mrb[0].mxu0
      %2775 = vdwg.mxu0
      %v2776 = vadd.f32 %v2590, %v2746
      %v2777 = vadd.f32 %v2591, %v2749
      %v2778 = vadd.f32 %v2592, %v2754
      %v2779 = vadd.f32 %v2593, %v2757
      %v2780 = vadd.f32 %v2594, %v2762
      %v2781 = vadd.f32 %v2595, %v2765
      %v2782 = vadd.f32 %v2596, %v2770
      %v2783 = vadd.f32 %v2597, %v2773
      %2784 = vst [vmem:[#allocation4] sm:$0xff] %v2776
      %2785 = vst [vmem:[#allocation4 + $0x8] sm:$0xff] %v2777
      %2786 = vst [vmem:[#allocation4 + $0x10] sm:$0xff] %v2778
      %2787 = vst [vmem:[#allocation4 + $0x18] sm:$0xff] %v2779
      %2788 = vst [vmem:[#allocation4 + $0x20] sm:$0xff] %v2780
      %2789 = vst [vmem:[#allocation4 + $0x28] sm:$0xff] %v2781
      %2790 = vst [vmem:[#allocation4 + $0x30] sm:$0xff] %v2782
      %2791 = vst [vmem:[#allocation4 + $0x38] sm:$0xff] %v2783
      %v2792 = vld [vmem:[#allocation3 + $0x8] sm:$0xf0]
      %v2793 = vld [vmem:[#allocation3 + $0x10] sm:$0xff]
      %v2794 = vld [vmem:[#allocation3 + $0x18] sm:$0xff]
      %v2795 = vld [vmem:[#allocation3 + $0x20] sm:$0xff]
      %v2796 = vld [vmem:[#allocation3 + $0x28] sm:$0xf]
      %v2797 = vld [vmem:[#allocation4] sm:$0xff]
      %v2798 = vld [vmem:[#allocation4 + $0x8] sm:$0xff]
      %v2799 = vld [vmem:[#allocation4 + $0x10] sm:$0xff]
      %v2800 = vld [vmem:[#allocation4 + $0x18] sm:$0xff]
      %v2801 = vld [vmem:[#allocation4 + $0x20] sm:$0xff]
      %v2802 = vld [vmem:[#allocation4 + $0x28] sm:$0xff]
      %v2803 = vld [vmem:[#allocation4 + $0x30] sm:$0xff]
      %v2804 = vld [vmem:[#allocation4 + $0x38] sm:$0xff]
      %s2805 = scalar_lea.vmem %s4, 448
      %v2806 = vld [vmem:[%s2805] sm:$0xf]
      %v2807 = vld [vmem:[%s2805 + $0x4] sm:$0xf]
      %v2808 = vld [vmem:[%s2805 + $0x8] sm:$0xf]
      %v2809 = vld [vmem:[%s2805 + $0xc] sm:$0xf]
      %v2810 = vld [vmem:[%s2805 + $0x10] sm:$0xf]
      %v2811 = vld [vmem:[%s2805 + $0x14] sm:$0xf]
      %v2812 = vld [vmem:[%s2805 + $0x18] sm:$0xf]
      %v2813 = vld [vmem:[%s2805 + $0x1c] sm:$0xf]
      %v2814 = vld [vmem:[%s2805 + $0x20] sm:$0xf]
      %v2815 = vld [vmem:[%s2805 + $0x24] sm:$0xf]
      %v2816 = vld [vmem:[%s2805 + $0x28] sm:$0xf]
      %v2817 = vld [vmem:[%s2805 + $0x2c] sm:$0xf]
      %v2818 = vld [vmem:[%s2805 + $0x30] sm:$0xf]
      %v2819 = vld [vmem:[%s2805 + $0x34] sm:$0xf]
      %v2820 = vld [vmem:[%s2805 + $0x38] sm:$0xf]
      %v2821 = vld [vmem:[%s2805 + $0x3c] sm:$0xf]
      %v2827 = vrot.slane %v2792, 4
      %v2828 = vrot.slane %v2793, 4
      %v2829 = vsel %vm777, %v2827, %v2828
      %v2830 = vrot.slane %v2794, 4
      %v2831 = vsel %vm777, %v2828, %v2830
      %v2832 = vrot.slane %v2795, 4
      %v2833 = vsel %vm777, %v2830, %v2832
      %v2834 = vrot.slane %v2796, 4
      %v2835 = vsel %vm777, %v2832, %v2834
      %v2856 = vunpack.c.l.b16 %v2806
      %v2857 = vunpack.c.l.b16 %v2807
      %v2858 = vunpack.c.l.b16 %v2808
      %v2859 = vunpack.c.l.b16 %v2809
      %v2860 = vunpack.c.l.b16 %v2810
      %v2861 = vunpack.c.l.b16 %v2811
      %v2862 = vunpack.c.l.b16 %v2812
      %v2863 = vunpack.c.l.b16 %v2813
      %v2864 = vunpack.c.l.b16 %v2814
      %v2865 = vunpack.c.l.b16 %v2815
      %v2866 = vunpack.c.l.b16 %v2816
      %v2867 = vunpack.c.l.b16 %v2817
      %v2868 = vunpack.c.l.b16 %v2818
      %v2869 = vunpack.c.l.b16 %v2819
      %v2870 = vunpack.c.l.b16 %v2820
      %v2871 = vunpack.c.l.b16 %v2821
      %v2872 = vpack.c.b16 %v2857, %v2856
      %v2873 = vpack.c.b16 %v2859, %v2858
      %v2874 = vpack.c.b16 %v2861, %v2860
      %v2875 = vpack.c.b16 %v2863, %v2862
      %v2876 = vpack.c.b16 %v2865, %v2864
      %v2877 = vpack.c.b16 %v2867, %v2866
      %v2878 = vpack.c.b16 %v2869, %v2868
      %v2879 = vpack.c.b16 %v2871, %v2870
      %2888 = vmatprep.subr.bf16.mxu0 0
      %2889 = vmatpush1.bf16.msra.mxu0 %v2872
      %2890 = vmatprep.subr.bf16.mxu0 0
      %2891 = vmatpush1.bf16.msra.mxu0 %v2873
      %2892 = vmatprep.subr.bf16.mxu0 0
      %2893 = vmatpush1.bf16.msra.mxu0 %v2874
      %2894 = vmatprep.subr.bf16.mxu0 0
      %2895 = vmatpush1.bf16.msra.mxu0 %v2875
      %2896 = vmatprep.subr.bf16.mxu0 0
      %2897 = vmatpush1.bf16.msra.mxu0 %v2876
      %2898 = vmatprep.subr.bf16.mxu0 0
      %2899 = vmatpush1.bf16.msra.mxu0 %v2877
      %2900 = vmatprep.subr.bf16.mxu0 0
      %2901 = vmatpush1.bf16.msra.mxu0 %v2878
      %2902 = vmatprep.subr.bf16.mxu0 0
      %2903 = vmatpush1.bf16.msra.mxu0 %v2879
      %2904 = vmatprep.subr.bf16.mxu0 0
      %2905 = vmatpush1.bf16.msra.mxu0 0
      %2906 = vmatprep.subr.bf16.mxu0 0
      %2907 = vmatpush1.bf16.msra.mxu0 0
      %2908 = vmatprep.subr.bf16.mxu0 0
      %2909 = vmatpush1.bf16.msra.mxu0 0
      %2910 = vmatprep.subr.bf16.mxu0 0
      %2911 = vmatpush1.bf16.msra.mxu0 0
      %2912 = vmatprep.subr.bf16.mxu0 0
      %2913 = vmatpush1.bf16.msra.mxu0 0
      %2914 = vmatprep.subr.bf16.mxu0 0
      %2915 = vmatpush1.bf16.msra.mxu0 0
      %2916 = vmatprep.subr.bf16.mxu0 0
      %2917 = vmatpush1.bf16.msra.mxu0 0
      %2918 = vmatprep.subr.bf16.mxu0 0
      %2919 = vmatpush1.bf16.msra.mxu0 0
      %2920 = vmatprep.mubr.bf16.mxu0 0
      %2921 = vmatmul.mubr.bf16.gmra.mrb[0].mxu0 %v2829
      %v2922 = vpop.f32.mrb[0].mxu0
      %v2923 = vadd.f32 0.0, %v2922
      %v2924 = vpop.f32.mrb[0].mxu0
      %v2925 = vpop.f32.mrb[0].mxu0
      %v2926 = vadd.f32 0.0, %v2925
      %v2927 = vpop.f32.mrb[0].mxu0
      %2928 = vmatprep.mubr.bf16.mxu0 0
      %2929 = vmatmul.mubr.bf16.gmra.mrb[0].mxu0 %v2831
      %v2930 = vpop.f32.mrb[0].mxu0
      %v2931 = vadd.f32 0.0, %v2930
      %v2932 = vpop.f32.mrb[0].mxu0
      %v2933 = vpop.f32.mrb[0].mxu0
      %v2934 = vadd.f32 0.0, %v2933
      %v2935 = vpop.f32.mrb[0].mxu0
      %2936 = vmatprep.mubr.bf16.mxu0 0
      %2937 = vmatmul.mubr.bf16.gmra.mrb[0].mxu0 %v2833
      %v2938 = vpop.f32.mrb[0].mxu0
      %v2939 = vadd.f32 0.0, %v2938
      %v2940 = vpop.f32.mrb[0].mxu0
      %v2941 = vpop.f32.mrb[0].mxu0
      %v2942 = vadd.f32 0.0, %v2941
      %v2943 = vpop.f32.mrb[0].mxu0
      %2944 = vmatprep.mubr.bf16.mxu0 0
      %2945 = vmatmul.mubr.bf16.gmra.mrb[0].mxu0 %v2835
      %v2946 = vpop.f32.mrb[0].mxu0
      %v2947 = vadd.f32 0.0, %v2946
      %v2948 = vpop.f32.mrb[0].mxu0
      %v2949 = vpop.f32.mrb[0].mxu0
      %v2950 = vadd.f32 0.0, %v2949
      %v2951 = vpop.f32.mrb[0].mxu0
      %2952 = vdwg.mxu0
      %v2953 = vadd.f32 %v2797, %v2923
      %v2954 = vadd.f32 %v2798, %v2926
      %v2955 = vadd.f32 %v2799, %v2931
      %v2956 = vadd.f32 %v2800, %v2934
      %v2957 = vadd.f32 %v2801, %v2939
      %v2958 = vadd.f32 %v2802, %v2942
      %v2959 = vadd.f32 %v2803, %v2947
      %v2960 = vadd.f32 %v2804, %v2950
      %2961 = vst [vmem:[#allocation4] sm:$0xff] %v2953
      %2962 = vst [vmem:[#allocation4 + $0x8] sm:$0xff] %v2954
      %2963 = vst [vmem:[#allocation4 + $0x10] sm:$0xff] %v2955
      %2964 = vst [vmem:[#allocation4 + $0x18] sm:$0xff] %v2956
      %2965 = vst [vmem:[#allocation4 + $0x20] sm:$0xff] %v2957
      %2966 = vst [vmem:[#allocation4 + $0x28] sm:$0xff] %v2958
      %2967 = vst [vmem:[#allocation4 + $0x30] sm:$0xff] %v2959
      %2968 = vst [vmem:[#allocation4 + $0x38] sm:$0xff] %v2960
      %v2969 = vld [vmem:[#allocation3 + $0x8] sm:$0xf0]
      %v2970 = vld [vmem:[#allocation3 + $0x10] sm:$0xff]
      %v2971 = vld [vmem:[#allocation3 + $0x18] sm:$0xff]
      %v2972 = vld [vmem:[#allocation3 + $0x20] sm:$0xff]
      %v2973 = vld [vmem:[#allocation3 + $0x28] sm:$0x1f]
      %v2974 = vmul.bf16 %v2969, %v1758
      %v2975 = vmul.bf16 %v2970, %v1767
      %v2976 = vmul.bf16 %v2971, %v1776
      %v2977 = vmul.bf16 %v2972, %v1785
      %v2978 = vmul.bf16 %v2973, %v1784
      %v2979 = vld [vmem:[#allocation4] sm:$0xff]
      %v2980 = vld [vmem:[#allocation4 + $0x8] sm:$0xff]
      %v2981 = vld [vmem:[#allocation4 + $0x10] sm:$0xff]
      %v2982 = vld [vmem:[#allocation4 + $0x18] sm:$0xff]
      %v2983 = vld [vmem:[#allocation4 + $0x20] sm:$0xff]
      %v2984 = vld [vmem:[#allocation4 + $0x28] sm:$0xff]
      %v2985 = vld [vmem:[#allocation4 + $0x30] sm:$0xff]
      %v2986 = vld [vmem:[#allocation4 + $0x38] sm:$0xff]
      %s2987 = scalar_lea.vmem %s4, 512
      %v2988 = vld [vmem:[%s2987] sm:$0xf]
      %v2989 = vld [vmem:[%s2987 + $0x4] sm:$0xf]
      %v2990 = vld [vmem:[%s2987 + $0x8] sm:$0xf]
      %v2991 = vld [vmem:[%s2987 + $0xc] sm:$0xf]
      %v2992 = vld [vmem:[%s2987 + $0x10] sm:$0xf]
      %v2993 = vld [vmem:[%s2987 + $0x14] sm:$0xf]
      %v2994 = vld [vmem:[%s2987 + $0x18] sm:$0xf]
      %v2995 = vld [vmem:[%s2987 + $0x1c] sm:$0xf]
      %v2996 = vld [vmem:[%s2987 + $0x20] sm:$0xf]
      %v2997 = vld [vmem:[%s2987 + $0x24] sm:$0xf]
      %v2998 = vld [vmem:[%s2987 + $0x28] sm:$0xf]
      %v2999 = vld [vmem:[%s2987 + $0x2c] sm:$0xf]
      %v3000 = vld [vmem:[%s2987 + $0x30] sm:$0xf]
      %v3001 = vld [vmem:[%s2987 + $0x34] sm:$0xf]
      %v3002 = vld [vmem:[%s2987 + $0x38] sm:$0xf]
      %v3003 = vld [vmem:[%s2987 + $0x3c] sm:$0xf]
      %v3005 = vshrl.u32 %v2974, 16
      %v3007 = vrot.slane %v3005, 4
      %v3008 = vshll.u32 %v2974, 16
      %v3010 = vrot.slane %v3008, 5
      %v3011 = vor.u32 %v3007, %v3010
      %v3013 = vshrl.u32 %v2975, 16
      %v3015 = vrot.slane %v3013, 4
      %v3016 = vshll.u32 %v2975, 16
      %v3018 = vrot.slane %v3016, 5
      %v3019 = vor.u32 %v3015, %v3018
      %v3020 = vsel %vm556, %v3011, %v3019
      %v3022 = vshrl.u32 %v2976, 16
      %v3024 = vrot.slane %v3022, 4
      %v3025 = vshll.u32 %v2976, 16
      %v3027 = vrot.slane %v3025, 5
      %v3028 = vor.u32 %v3024, %v3027
      %v3029 = vsel %vm556, %v3019, %v3028
      %v3031 = vshrl.u32 %v2977, 16
      %v3033 = vrot.slane %v3031, 4
      %v3034 = vshll.u32 %v2977, 16
      %v3036 = vrot.slane %v3034, 5
      %v3037 = vor.u32 %v3033, %v3036
      %v3038 = vsel %vm556, %v3028, %v3037
      %v3040 = vshrl.u32 %v2978, 16
      %v3042 = vrot.slane %v3040, 4
      %v3043 = vshll.u32 %v2978, 16
      %v3045 = vrot.slane %v3043, 5
      %v3046 = vor.u32 %v3042, %v3045
      %v3047 = vsel %vm556, %v3037, %v3046
      %v3068 = vunpack.c.l.b16 %v2988
      %v3069 = vunpack.c.l.b16 %v2989
      %v3070 = vunpack.c.l.b16 %v2990
      %v3071 = vunpack.c.l.b16 %v2991
      %v3072 = vunpack.c.l.b16 %v2992
      %v3073 = vunpack.c.l.b16 %v2993
      %v3074 = vunpack.c.l.b16 %v2994
      %v3075 = vunpack.c.l.b16 %v2995
      %v3076 = vunpack.c.l.b16 %v2996
      %v3077 = vunpack.c.l.b16 %v2997
      %v3078 = vunpack.c.l.b16 %v2998
      %v3079 = vunpack.c.l.b16 %v2999
      %v3080 = vunpack.c.l.b16 %v3000
      %v3081 = vunpack.c.l.b16 %v3001
      %v3082 = vunpack.c.l.b16 %v3002
      %v3083 = vunpack.c.l.b16 %v3003
      %v3084 = vpack.c.b16 %v3069, %v3068
      %v3085 = vpack.c.b16 %v3071, %v3070
      %v3086 = vpack.c.b16 %v3073, %v3072
      %v3087 = vpack.c.b16 %v3075, %v3074
      %v3088 = vpack.c.b16 %v3077, %v3076
      %v3089 = vpack.c.b16 %v3079, %v3078
      %v3090 = vpack.c.b16 %v3081, %v3080
      %v3091 = vpack.c.b16 %v3083, %v3082
      %3100 = vmatprep.subr.bf16.mxu0 0
      %3101 = vmatpush1.bf16.msra.mxu0 %v3084
      %3102 = vmatprep.subr.bf16.mxu0 0
      %3103 = vmatpush1.bf16.msra.mxu0 %v3085
      %3104 = vmatprep.subr.bf16.mxu0 0
      %3105 = vmatpush1.bf16.msra.mxu0 %v3086
      %3106 = vmatprep.subr.bf16.mxu0 0
      %3107 = vmatpush1.bf16.msra.mxu0 %v3087
      %3108 = vmatprep.subr.bf16.mxu0 0
      %3109 = vmatpush1.bf16.msra.mxu0 %v3088
      %3110 = vmatprep.subr.bf16.mxu0 0
      %3111 = vmatpush1.bf16.msra.mxu0 %v3089
      %3112 = vmatprep.subr.bf16.mxu0 0
      %3113 = vmatpush1.bf16.msra.mxu0 %v3090
      %3114 = vmatprep.subr.bf16.mxu0 0
      %3115 = vmatpush1.bf16.msra.mxu0 %v3091
      %3116 = vmatprep.subr.bf16.mxu0 0
      %3117 = vmatpush1.bf16.msra.mxu0 0
      %3118 = vmatprep.subr.bf16.mxu0 0
      %3119 = vmatpush1.bf16.msra.mxu0 0
      %3120 = vmatprep.subr.bf16.mxu0 0
      %3121 = vmatpush1.bf16.msra.mxu0 0
      %3122 = vmatprep.subr.bf16.mxu0 0
      %3123 = vmatpush1.bf16.msra.mxu0 0
      %3124 = vmatprep.subr.bf16.mxu0 0
      %3125 = vmatpush1.bf16.msra.mxu0 0
      %3126 = vmatprep.subr.bf16.mxu0 0
      %3127 = vmatpush1.bf16.msra.mxu0 0
      %3128 = vmatprep.subr.bf16.mxu0 0
      %3129 = vmatpush1.bf16.msra.mxu0 0
      %3130 = vmatprep.subr.bf16.mxu0 0
      %3131 = vmatpush1.bf16.msra.mxu0 0
      %3132 = vmatprep.mubr.bf16.mxu0 0
      %3133 = vmatmul.mubr.bf16.gmra.mrb[0].mxu0 %v3020
      %v3134 = vpop.f32.mrb[0].mxu0
      %v3135 = vadd.f32 0.0, %v3134
      %v3136 = vpop.f32.mrb[0].mxu0
      %v3137 = vpop.f32.mrb[0].mxu0
      %v3138 = vadd.f32 0.0, %v3137
      %v3139 = vpop.f32.mrb[0].mxu0
      %3140 = vmatprep.mubr.bf16.mxu0 0
      %3141 = vmatmul.mubr.bf16.gmra.mrb[0].mxu0 %v3029
      %v3142 = vpop.f32.mrb[0].mxu0
      %v3143 = vadd.f32 0.0, %v3142
      %v3144 = vpop.f32.mrb[0].mxu0
      %v3145 = vpop.f32.mrb[0].mxu0
      %v3146 = vadd.f32 0.0, %v3145
      %v3147 = vpop.f32.mrb[0].mxu0
      %3148 = vmatprep.mubr.bf16.mxu0 0
      %3149 = vmatmul.mubr.bf16.gmra.mrb[0].mxu0 %v3038
      %v3150 = vpop.f32.mrb[0].mxu0
      %v3151 = vadd.f32 0.0, %v3150
      %v3152 = vpop.f32.mrb[0].mxu0
      %v3153 = vpop.f32.mrb[0].mxu0
      %v3154 = vadd.f32 0.0, %v3153
      %v3155 = vpop.f32.mrb[0].mxu0
      %3156 = vmatprep.mubr.bf16.mxu0 0
      %3157 = vmatmul.mubr.bf16.gmra.mrb[0].mxu0 %v3047
      %v3158 = vpop.f32.mrb[0].mxu0
      %v3159 = vadd.f32 0.0, %v3158
      %v3160 = vpop.f32.mrb[0].mxu0
      %v3161 = vpop.f32.mrb[0].mxu0
      %v3162 = vadd.f32 0.0, %v3161
      %v3163 = vpop.f32.mrb[0].mxu0
      %3164 = vdwg.mxu0
      %v3165 = vadd.f32 %v2979, %v3135
      %v3166 = vadd.f32 %v2980, %v3138
      %v3167 = vadd.f32 %v2981, %v3143
      %v3168 = vadd.f32 %v2982, %v3146
      %v3169 = vadd.f32 %v2983, %v3151
      %v3170 = vadd.f32 %v2984, %v3154
      %v3171 = vadd.f32 %v2985, %v3159
      %v3172 = vadd.f32 %v2986, %v3162
      %3173 = vst [vmem:[#allocation4] sm:$0xff] %v3165
      %3174 = vst [vmem:[#allocation4 + $0x8] sm:$0xff] %v3166
      %3175 = vst [vmem:[#allocation4 + $0x10] sm:$0xff] %v3167
      %3176 = vst [vmem:[#allocation4 + $0x18] sm:$0xff] %v3168
      %3177 = vst [vmem:[#allocation4 + $0x20] sm:$0xff] %v3169
      %3178 = vst [vmem:[#allocation4 + $0x28] sm:$0xff] %v3170
      %3179 = vst [vmem:[#allocation4 + $0x30] sm:$0xff] %v3171
      %3180 = vst [vmem:[#allocation4 + $0x38] sm:$0xff] %v3172
      %v3181 = vld [vmem:[%s5] sm:$0xf]
      %v3182 = vld [vmem:[%s5 + $0x4] sm:$0xf]
      %v3191 = vunpack.c.l.b16 %v361
      %v3192 = vunpack.c.l.b16 %v362
      %v3193 = vunpack.c.l.b16 %v363
      %v3194 = vunpack.c.l.b16 %v364
      %v3195 = vunpack.c.l.b16 %v365
      %v3196 = vunpack.c.l.b16 %v366
      %v3197 = vunpack.c.l.b16 %v367
      %v3198 = vunpack.c.l.b16 %v368
      %v3199 = vpack.c.b16 %v3192, %v3191
      %v3200 = vpack.c.b16 %v3194, %v3193
      %v3201 = vpack.c.b16 %v3196, %v3195
      %v3202 = vpack.c.b16 %v3198, %v3197
      %v3205 = vunpack.c.l.b16 %v3181
      %v3206 = vunpack.c.l.b16 %v3182
      %v3207 = vpack.c.b16 %v3206, %v3205
      %v3210 = vsel %vm385, %v3199, 0
      %v3213 = vsel %vm385, %v3200, 0
      %v3216 = vsel %vm385, %v3201, 0
      %v3219 = vsel %vm385, %v3202, 0
      %3221 = vmatprep.subr.bf16.mxu0 0
      %3222 = vmatpush1.bf16.msra.mxu0 %v3207
      %3223 = vmatprep.subr.bf16.mxu0 0
      %3224 = vmatpush1.bf16.msra.mxu0 0
      %3225 = vmatprep.subr.bf16.mxu0 0
      %3226 = vmatpush1.bf16.msra.mxu0 0
      %3227 = vmatprep.subr.bf16.mxu0 0
      %3228 = vmatpush1.bf16.msra.mxu0 0
      %3229 = vmatprep.subr.bf16.mxu0 0
      %3230 = vmatpush1.bf16.msra.mxu0 0
      %3231 = vmatprep.subr.bf16.mxu0 0
      %3232 = vmatpush1.bf16.msra.mxu0 0
      %3233 = vmatprep.subr.bf16.mxu0 0
      %3234 = vmatpush1.bf16.msra.mxu0 0
      %3235 = vmatprep.subr.bf16.mxu0 0
      %3236 = vmatpush1.bf16.msra.mxu0 0
      %3237 = vmatprep.subr.bf16.mxu0 0
      %3238 = vmatpush1.bf16.msra.mxu0 0
      %3239 = vmatprep.subr.bf16.mxu0 0
      %3240 = vmatpush1.bf16.msra.mxu0 0
      %3241 = vmatprep.subr.bf16.mxu0 0
      %3242 = vmatpush1.bf16.msra.mxu0 0
      %3243 = vmatprep.subr.bf16.mxu0 0
      %3244 = vmatpush1.bf16.msra.mxu0 0
      %3245 = vmatprep.subr.bf16.mxu0 0
      %3246 = vmatpush1.bf16.msra.mxu0 0
      %3247 = vmatprep.subr.bf16.mxu0 0
      %3248 = vmatpush1.bf16.msra.mxu0 0
      %3249 = vmatprep.subr.bf16.mxu0 0
      %3250 = vmatpush1.bf16.msra.mxu0 0
      %3251 = vmatprep.subr.bf16.mxu0 0
      %3252 = vmatpush1.bf16.msra.mxu0 0
      %3253 = vmatprep.mubr.bf16.mxu0 0
      %3254 = vmatmul.mubr.bf16.gmra.mrb[0].mxu0 %v3210
      %v3255 = vpop.f32.mrb[0].mxu0
      %v3256 = vadd.f32 0.0, %v3255
      %v3257 = vpop.f32.mrb[0].mxu0
      %v3258 = vpop.f32.mrb[0].mxu0
      %v3259 = vadd.f32 0.0, %v3258
      %v3260 = vpop.f32.mrb[0].mxu0
      %3261 = vmatprep.mubr.bf16.mxu0 0
      %3262 = vmatmul.mubr.bf16.gmra.mrb[0].mxu0 %v3213
      %v3263 = vpop.f32.mrb[0].mxu0
      %v3264 = vadd.f32 0.0, %v3263
      %v3265 = vpop.f32.mrb[0].mxu0
      %v3266 = vpop.f32.mrb[0].mxu0
      %v3267 = vadd.f32 0.0, %v3266
      %v3268 = vpop.f32.mrb[0].mxu0
      %3269 = vmatprep.mubr.bf16.mxu0 0
      %3270 = vmatmul.mubr.bf16.gmra.mrb[0].mxu0 %v3216
      %v3271 = vpop.f32.mrb[0].mxu0
      %v3272 = vadd.f32 0.0, %v3271
      %v3273 = vpop.f32.mrb[0].mxu0
      %v3274 = vpop.f32.mrb[0].mxu0
      %v3275 = vadd.f32 0.0, %v3274
      %v3276 = vpop.f32.mrb[0].mxu0
      %3277 = vmatprep.mubr.bf16.mxu0 0
      %3278 = vmatmul.mubr.bf16.gmra.mrb[0].mxu0 %v3219
      %v3279 = vpop.f32.mrb[0].mxu0
      %v3280 = vadd.f32 0.0, %v3279
      %v3281 = vpop.f32.mrb[0].mxu0
      %v3282 = vpop.f32.mrb[0].mxu0
      %v3283 = vadd.f32 0.0, %v3282
      %v3284 = vpop.f32.mrb[0].mxu0
      %3285 = vdwg.mxu0
      %v3286 = vld [vmem:[#allocation4] sm:$0xff]
      %v3287 = vld [vmem:[#allocation4 + $0x8] sm:$0xff]
      %v3288 = vld [vmem:[#allocation4 + $0x10] sm:$0xff]
      %v3289 = vld [vmem:[#allocation4 + $0x18] sm:$0xff]
      %v3290 = vld [vmem:[#allocation4 + $0x20] sm:$0xff]
      %v3291 = vld [vmem:[#allocation4 + $0x28] sm:$0xff]
      %v3292 = vld [vmem:[#allocation4 + $0x30] sm:$0xff]
      %v3293 = vld [vmem:[#allocation4 + $0x38] sm:$0xff]
      %v3294 = vld [vmem:[%s8] sm:$0x1]
      %v3296 = vlaneseq
      %v3297 = vshrl.u32 %v3296, 7
      %v3298 = vsub.s32 0, %v3297
      %v3299 = vrot.slane %v3294, %v3298
      %v3301 = vmul.f32 %v3286, %v3299
      %v3302 = vmul.f32 %v3287, %v3299
      %v3303 = vmul.f32 %v3288, %v3299
      %v3304 = vmul.f32 %v3289, %v3299
      %v3305 = vmul.f32 %v3290, %v3299
      %v3306 = vmul.f32 %v3291, %v3299
      %v3307 = vmul.f32 %v3292, %v3299
      %v3308 = vmul.f32 %v3293, %v3299
      %v3309 = vld [vmem:[%s9] sm:$0x1]
      %v3311 = vlaneseq
      %v3312 = vshrl.u32 %v3311, 7
      %v3313 = vsub.s32 0, %v3312
      %v3314 = vrot.slane %v3309, %v3313
      %v3316 = vadd.f32 %v3301, %v3314
      %v3317 = vadd.f32 %v3302, %v3314
      %v3318 = vadd.f32 %v3303, %v3314
      %v3319 = vadd.f32 %v3304, %v3314
      %v3320 = vadd.f32 %v3305, %v3314
      %v3321 = vadd.f32 %v3306, %v3314
      %v3322 = vadd.f32 %v3307, %v3314
      %v3323 = vadd.f32 %v3308, %v3314
      %v3324 = vadd.f32 %v3316, %v3256
      %v3325 = vadd.f32 %v3317, %v3259
      %v3326 = vadd.f32 %v3318, %v3264
      %v3327 = vadd.f32 %v3319, %v3267
      %v3328 = vadd.f32 %v3320, %v3272
      %v3329 = vadd.f32 %v3321, %v3275
      %v3330 = vadd.f32 %v3322, %v3280
      %v3331 = vadd.f32 %v3323, %v3283
      %v3332 = vmax.f32 %v3324, 0.0
      %v3333 = vmax.f32 %v3325, 0.0
      %v3334 = vmax.f32 %v3326, 0.0
      %v3335 = vmax.f32 %v3327, 0.0
      %v3336 = vmax.f32 %v3328, 0.0
      %v3337 = vmax.f32 %v3329, 0.0
      %v3338 = vmax.f32 %v3330, 0.0
      %v3339 = vmax.f32 %v3331, 0.0
      %3340 = vst [vmem:[%s359] sm:$0xff] %v3332
      %3341 = vst [vmem:[%s359 + $0x8] sm:$0xff] %v3333
      %3342 = vst [vmem:[%s359 + $0x10] sm:$0xff] %v3334
      %3343 = vst [vmem:[%s359 + $0x18] sm:$0xff] %v3335
      %3344 = vst [vmem:[%s359 + $0x20] sm:$0xff] %v3336
      %3345 = vst [vmem:[%s359 + $0x28] sm:$0xff] %v3337
      %3346 = vst [vmem:[%s359 + $0x30] sm:$0xff] %v3338
      %3347 = vst [vmem:[%s359 + $0x38] sm:$0xff] %v3339
      %p3348 = scmp.lt.s32.totalorder %s21, 1
      %s3349 = scalar_select %p3348, %s21, 1
      %s3350 = smul.addr %s3349, 8
      %s3351 = smul.addr %s3350, 8
      %s3352 = scalar_lea.vmem %s10, %s3351
      // Predicated region
      $region61: #{basic_block_forward.1} parent=59 // pred_check
        %p3353 = pneg %p254
      $region62: #{basic_block_forward.1} parent=59 // pred_check_branch
        %3355 = sbr.rel (%p3353) target = $region64
      $region63: #{basic_block_forward.1} parent=59 // pred_region
        _
      $region64: #{basic_block_forward.1} parent=59 // pred_fallthru
        _
    $region60: #{basic_block_forward.1} parent=5 // pred_fallthru
      _
    %p3356 = scmp.le.s32.totalorder 2, %s16
    // Predicated region
    $region65: #{basic_block_forward.1} parent=5 // pred_check
      %p3357 = pneg %p3356
    $region66: #{basic_block_forward.1} parent=5 // pred_check_branch
      %3359 = sbr.rel (%p3357) target = $region68
    $region67: #{basic_block_forward.1} parent=5 // pred_region
      %s3360 = ssub.s32 %s16, 2
      // Predicated region
      $region69: #{basic_block_forward.1} parent=67 // pred_check
        %p3361 = pneg %p260
      $region70: #{basic_block_forward.1} parent=67 // pred_check_branch
        %3363 = sbr.rel (%p3361) target = $region72
      $region71: #{basic_block_forward.1} parent=67 // pred_region
        %p3364 = scmp.lt.s32.totalorder %s22, 1
        %s3365 = scalar_select %p3364, %s22, 1
        %s3366 = smul.addr %s3365, 8
        %s3367 = smul.addr %s3366, 8
        %s3368 = scalar_lea.vmem %s10, %s3367
      $region72: #{basic_block_forward.1} parent=67 // pred_fallthru
        _
    $region68: #{basic_block_forward.1} parent=5 // pred_fallthru
      _
  $region6: #{basic_block_forward.1} parent=0 // loop_footer
    %s20 = sadd.s32 1, %s16
  $region7: #{basic_block_forward.1} parent=0 // loop_footer_branch
    %15 = sbr.rel target = $region3
  $region8: #{basic_block_forward.1} parent=0 // loop_exit
    _

</llo_original>
